<compile_context>
chip_gen: v7x
topology: tpu7x:2x2x1
jax: 0.10.0
libtpu: 0.0.40
codegen_flags: <defaults>
</compile_context>

<pallas_src>
import functools

import jax
import jax.numpy as jnp
from jax.experimental import pallas as pl
from jax.experimental.pallas import tpu as pltpu


# ----------------------------------------------------------------------------
# Kernel helpers
# ----------------------------------------------------------------------------
def _layernorm(v, g, b, eps=1e-6):
    # f32 vector math (v5e has no bf16 VPU/EUP; f32 is also numerically safer)
    mu = jnp.mean(v, axis=-1, keepdims=True)
    var = jnp.mean(jnp.square(v - mu), axis=-1, keepdims=True)
    return (v - mu) * jax.lax.rsqrt(var + eps) * g + b


# ----------------------------------------------------------------------------
# Fused forward kernel: grid = (B, depth)
# ----------------------------------------------------------------------------
def _vit_forward_kernel(patches_ref, pe_w_ref, posb_ref,
                        g1_ref, b1_ref, wq_ref, wk_ref, wv_ref,
                        bq_ref, bk_ref, bv_ref, wp_ref, bp_ref,
                        g2_ref, b2_ref, w1_ref, bb1_ref, w2_ref, bb2_ref,
                        gf_ref, bf_ref, hw_ref, hb_ref,
                        o_ref, x_sc, *, num_heads):
    """One encoder layer per depth step for one batch element.

    depth is the innermost ("arbitrary") grid axis.  The (T, E) token state
    lives in the VMEM scratch `x_sc` across depth; the patch-embed prologue
    runs only at d == 0, the head epilogue only at d == depth - 1.  Layer-d
    weights arrive via depth-indexed BlockSpecs (pipelined prefetch).
    """
    d = pl.program_id(1)
    depth = pl.num_programs(1)

    # --- d == 0: patch embed + cls token + pos embed (pos_drop = identity) ---
    @pl.when(d == 0)
    def _():
        # patches row 0 is all-zeros; posb row 0 = cls_token + pos_embed[0]
        # (exact f32), rows 1.. = pos_embed[1:] + conv bias.
        x_sc[...] = (jnp.dot(patches_ref[...], pe_w_ref[...],
                             preferred_element_type=jnp.float32)
                     + posb_ref[...])

    x = x_sc[...]                                            # (T, E) f32
    T, E = x.shape
    hd = E // num_heads
    scale = hd ** -0.5

    # --- Multi-head self-attention ---
    h = _layernorm(x, g1_ref[...], b1_ref[...]).astype(jnp.bfloat16)
    proj = jnp.zeros((T, E), jnp.float32)
    for i in range(num_heads):                               # unrolled heads
        # per-head weight slabs: no lane slicing of a fused qkv output needed
        q = (jnp.dot(h, wq_ref[i], preferred_element_type=jnp.float32)
             + bq_ref[i]) * scale
        k = jnp.dot(h, wk_ref[i], preferred_element_type=jnp.float32) + bk_ref[i]
        v = jnp.dot(h, wv_ref[i], preferred_element_type=jnp.float32) + bv_ref[i]

        # scores: q @ k^T via dot_general (contract last dims; no transpose op)
        s = jax.lax.dot_general(q.astype(jnp.bfloat16), k.astype(jnp.bfloat16),
                                (((1,), (1,)), ((), ())),
                                preferred_element_type=jnp.float32)
        s = s - jnp.max(s, axis=-1, keepdims=True)
        p = jnp.exp(s)
        p = p * pl.reciprocal(jnp.sum(p, axis=-1, keepdims=True), approx=True)
        ho = jnp.dot(p.astype(jnp.bfloat16), v.astype(jnp.bfloat16),
                     preferred_element_type=jnp.float32)     # (T, hd)

        # fold the head-concat into the output projection (accumulate)
        proj = proj + jnp.dot(ho.astype(jnp.bfloat16), wp_ref[i],
                              preferred_element_type=jnp.float32)
    x = x + proj + bp_ref[...]

    # --- MLP ---
    h2 = _layernorm(x, g2_ref[...], b2_ref[...]).astype(jnp.bfloat16)
    m = jnp.dot(h2, w1_ref[...], preferred_element_type=jnp.float32) + bb1_ref[...]
    # exact (erf) GELU in f32, matching torch.nn.GELU default
    m = 0.5 * m * (1.0 + jax.lax.erf(m * 0.7071067811865476))
    m = jnp.dot(m.astype(jnp.bfloat16), w2_ref[...],
                preferred_element_type=jnp.float32) + bb2_ref[...]
    x = x + m
    x_sc[...] = x

    # --- d == depth-1: final LN on cls row + classification head ---
    @pl.when(d == depth - 1)
    def _():
        cls = _layernorm(x[0:1, :], gf_ref[...], bf_ref[...])
        o_ref[...] = (jnp.dot(cls.astype(jnp.bfloat16), hw_ref[...],
                              preferred_element_type=jnp.float32)
                      + hb_ref[...])


# ----------------------------------------------------------------------------
# Parameter init (deterministic, synthetic) — per-layer weights stacked on depth
# ----------------------------------------------------------------------------
def init_params(key, *, in_chans, patch, embed_dim, depth, num_heads, mlp_ratio,
                n_classes, num_patches):
    patch_dim = in_chans * patch ** 3
    hidden = int(embed_dim * mlp_ratio)
    hd = embed_dim // num_heads
    ks = list(jax.random.split(key, 10))

    def tn(k, shape, std=0.02):
        return jax.random.truncated_normal(k, -2.0, 2.0, shape, jnp.float32) * std

    wq = tn(ks[4], (depth, embed_dim, embed_dim))
    wk = tn(ks[5], (depth, embed_dim, embed_dim))
    wv = tn(ks[6], (depth, embed_dim, embed_dim))
    wp = tn(ks[7], (depth, embed_dim, embed_dim))
    w1 = tn(ks[8], (depth, embed_dim, hidden))
    w2 = tn(ks[9], (depth, hidden, embed_dim))

    def split_head_cols(w):
        # (depth, E, E) -> (depth, H, E, hd): per-head column blocks of W
        return w.reshape(depth, embed_dim, num_heads, hd).transpose(0, 2, 1, 3)

    return {
        "patch": patch,
        "num_heads": num_heads,
        "pe_w": tn(ks[0], (patch_dim, embed_dim)).astype(jnp.bfloat16),
        "pe_b": jnp.zeros((1, embed_dim), jnp.float32),
        "cls_token": tn(ks[1], (1, 1, embed_dim)),
        "pos_embed": tn(ks[2], (1, num_patches + 1, embed_dim)),
        "norm_g": jnp.ones((1, embed_dim), jnp.float32),
        "norm_b": jnp.zeros((1, embed_dim), jnp.float32),
        "head_w": tn(ks[3], (embed_dim, n_classes)).astype(jnp.bfloat16),
        "head_b": jnp.zeros((1, n_classes), jnp.float32),
        # stacked transformer-block weights (leading depth axis)
        "g1": jnp.ones((depth, 1, embed_dim), jnp.float32),
        "b1": jnp.zeros((depth, 1, embed_dim), jnp.float32),
        "wq3": split_head_cols(wq).astype(jnp.bfloat16),
        "wk3": split_head_cols(wk).astype(jnp.bfloat16),
        "wv3": split_head_cols(wv).astype(jnp.bfloat16),
        "bq3": jnp.zeros((depth, num_heads, 1, hd), jnp.float32),
        "bk3": jnp.zeros((depth, num_heads, 1, hd), jnp.float32),
        "bv3": jnp.zeros((depth, num_heads, 1, hd), jnp.float32),
        "wp3": wp.reshape(depth, num_heads, hd, embed_dim).astype(jnp.bfloat16),
        "bp": jnp.zeros((depth, 1, embed_dim), jnp.float32),
        "g2": jnp.ones((depth, 1, embed_dim), jnp.float32),
        "b2": jnp.zeros((depth, 1, embed_dim), jnp.float32),
        "w1": w1.astype(jnp.bfloat16),
        "bb1": jnp.zeros((depth, 1, hidden), jnp.float32),
        "w2": w2.astype(jnp.bfloat16),
        "bb2": jnp.zeros((depth, 1, embed_dim), jnp.float32),
    }


# ----------------------------------------------------------------------------
# Full forward: patch extraction in XLA, everything else in ONE pallas_call
# ----------------------------------------------------------------------------
def feature3d_vit2d_forward(x, params):
    B, C, D, H, W = x.shape
    p = params["patch"]
    dp, hp, wpn = D // p, H // p, W // p
    N = dp * hp * wpn
    T = N + 1
    P = params["pe_w"].shape[0]
    E = params["pe_w"].shape[1]
    depth = params["g1"].shape[0]
    num_heads = params["num_heads"]
    n_classes = params["head_w"].shape[1]

    # Conv3d(kernel=stride=p) patch extraction as reshape + transpose.
    xp = x.reshape(B, C, dp, p, hp, p, wpn, p)
    xp = xp.transpose(0, 2, 4, 6, 1, 3, 5, 7).reshape(B, N, C * p ** 3)
    xp = xp.astype(jnp.bfloat16)
    # Row 0 is all-zeros: the cls-token/pos row is supplied exactly (f32) by
    # `posb`, so the cls+pos prologue folds into the d==0 patch-embed matmul.
    patches_full = jnp.concatenate(
        [jnp.zeros((B, 1, P), jnp.bfloat16), xp], axis=1)           # (B, T, P)

    posb = jnp.concatenate(
        [params["cls_token"][0] + params["pos_embed"][0, 0:1],
         params["pos_embed"][0, 1:] + params["pe_b"]], axis=0)      # (T, E) f32

    weights = [params[k] for k in ("g1", "b1", "wq3", "wk3", "wv3",
                                   "bq3", "bk3", "bv3", "wp3", "bp",
                                   "g2", "b2", "w1", "bb1", "w2", "bb2")]

    def dspec(a):  # depth-indexed stacked weight
        nd = a.ndim
        return pl.BlockSpec((None,) + a.shape[1:],
                            lambda b, d, _nd=nd: (d,) + (0,) * (_nd - 1))

    def cspec(a):  # constant (grid-invariant) weight, resident across the grid
        nd = a.ndim
        return pl.BlockSpec(a.shape, lambda b, d, _nd=nd: (0,) * _nd)

    kernel = functools.partial(_vit_forward_kernel, num_heads=num_heads)
    logits = pl.pallas_call(
        kernel,
        grid=(B, depth),
        in_specs=[pl.BlockSpec((None, T, P), lambda b, d: (b, 0, 0)),
                  cspec(params["pe_w"]),
                  cspec(posb)]
                 + [dspec(w) for w in weights]
                 + [cspec(params["norm_g"]), cspec(params["norm_b"]),
                    cspec(params["head_w"]), cspec(params["head_b"])],
        out_specs=pl.BlockSpec((None, 1, n_classes), lambda b, d: (b, 0, 0)),
        out_shape=jax.ShapeDtypeStruct((B, 1, n_classes), jnp.float32),
        scratch_shapes=[pltpu.VMEM((T, E), jnp.float32)],
        compiler_params=pltpu.CompilerParams(
            dimension_semantics=("parallel", "arbitrary")),
    )(patches_full, params["pe_w"], posb, *weights,
      params["norm_g"], params["norm_b"], params["head_w"], params["head_b"])

    return logits.reshape(B, n_classes)


# ----------------------------------------------------------------------------
if __name__ == "__main__":
    # Small shapes consistent with the module's forward (miniature DeiT backbone).
    B, C, D, H, W = 2, 1, 16, 16, 16
    patch = 8
    embed_dim = 32
    depth = 2
    num_heads = 4
    mlp_ratio = 4.0
    n_classes = 10
    num_patches = (D // patch) * (H // patch) * (W // patch)   # 8

    key = jax.random.PRNGKey(0)
    k_x, k_p = jax.random.split(key)
    x = jax.random.normal(k_x, (B, C, D, H, W), jnp.float32)
    params = init_params(k_p, in_chans=C, patch=patch, embed_dim=embed_dim,
                         depth=depth, num_heads=num_heads, mlp_ratio=mlp_ratio,
                         n_classes=n_classes, num_patches=num_patches)

    logits = feature3d_vit2d_forward(x, params)
    logits = jax.block_until_ready(logits)
    assert logits.shape == (B, n_classes)
    assert bool(jnp.all(jnp.isfinite(logits)))
    print("KERNEL_OK")
</pallas_src>

<mosaic_0001>
module attributes {stable_mosaic.version = 11 : i64} {
  func.func @_vit_forward_kernel(%arg0: i32, %arg1: i32, %arg2: memref<1x9x512xbf16, #tpu.memory_space<vmem>>, %arg3: memref<512x32xbf16, #tpu.memory_space<vmem>>, %arg4: memref<9x32xf32, #tpu.memory_space<vmem>>, %arg5: memref<1x1x32xf32, #tpu.memory_space<vmem>>, %arg6: memref<1x1x32xf32, #tpu.memory_space<vmem>>, %arg7: memref<1x4x32x8xbf16, #tpu.memory_space<vmem>>, %arg8: memref<1x4x32x8xbf16, #tpu.memory_space<vmem>>, %arg9: memref<1x4x32x8xbf16, #tpu.memory_space<vmem>>, %arg10: memref<1x4x1x8xf32, #tpu.memory_space<vmem>>, %arg11: memref<1x4x1x8xf32, #tpu.memory_space<vmem>>, %arg12: memref<1x4x1x8xf32, #tpu.memory_space<vmem>>, %arg13: memref<1x4x8x32xbf16, #tpu.memory_space<vmem>>, %arg14: memref<1x1x32xf32, #tpu.memory_space<vmem>>, %arg15: memref<1x1x32xf32, #tpu.memory_space<vmem>>, %arg16: memref<1x1x32xf32, #tpu.memory_space<vmem>>, %arg17: memref<1x32x128xbf16, #tpu.memory_space<vmem>>, %arg18: memref<1x1x128xf32, #tpu.memory_space<vmem>>, %arg19: memref<1x128x32xbf16, #tpu.memory_space<vmem>>, %arg20: memref<1x1x32xf32, #tpu.memory_space<vmem>>, %arg21: memref<1x32xf32, #tpu.memory_space<vmem>>, %arg22: memref<1x32xf32, #tpu.memory_space<vmem>>, %arg23: memref<32x10xbf16, #tpu.memory_space<vmem>>, %arg24: memref<1x10xf32, #tpu.memory_space<vmem>>, %arg25: memref<1x1x10xf32, #tpu.memory_space<vmem>>, %arg26: memref<9x32xf32, #tpu.memory_space<vmem>>) attributes {dimension_semantics = [#tpu.dimension_semantics<parallel>, #tpu.dimension_semantics<arbitrary>], iteration_bounds = array<i64: 2, 2>, scalar_prefetch = 0 : i64, scratch_operands = 1 : i64, tpu.core_type = #tpu.core_type<tc>, window_params = [{transform_indices = @transform_0, window_bounds = array<i64: 1, 9, 512>}, {pipeline_mode = #tpu.pipeline_mode<synchronous>, transform_indices = @transform_1, window_bounds = array<i64: 512, 32>}, {pipeline_mode = #tpu.pipeline_mode<synchronous>, transform_indices = @transform_2, window_bounds = array<i64: 9, 32>}, {transform_indices = @transform_3, window_bounds = array<i64: 1, 1, 32>}, {transform_indices = @transform_4, window_bounds = array<i64: 1, 1, 32>}, {transform_indices = @transform_5, window_bounds = array<i64: 1, 4, 32, 8>}, {transform_indices = @transform_6, window_bounds = array<i64: 1, 4, 32, 8>}, {transform_indices = @transform_7, window_bounds = array<i64: 1, 4, 32, 8>}, {transform_indices = @transform_8, window_bounds = array<i64: 1, 4, 1, 8>}, {transform_indices = @transform_9, window_bounds = array<i64: 1, 4, 1, 8>}, {transform_indices = @transform_10, window_bounds = array<i64: 1, 4, 1, 8>}, {transform_indices = @transform_11, window_bounds = array<i64: 1, 4, 8, 32>}, {transform_indices = @transform_12, window_bounds = array<i64: 1, 1, 32>}, {transform_indices = @transform_13, window_bounds = array<i64: 1, 1, 32>}, {transform_indices = @transform_14, window_bounds = array<i64: 1, 1, 32>}, {transform_indices = @transform_15, window_bounds = array<i64: 1, 32, 128>}, {transform_indices = @transform_16, window_bounds = array<i64: 1, 1, 128>}, {transform_indices = @transform_17, window_bounds = array<i64: 1, 128, 32>}, {transform_indices = @transform_18, window_bounds = array<i64: 1, 1, 32>}, {pipeline_mode = #tpu.pipeline_mode<synchronous>, transform_indices = @transform_19, window_bounds = array<i64: 1, 32>}, {pipeline_mode = #tpu.pipeline_mode<synchronous>, transform_indices = @transform_20, window_bounds = array<i64: 1, 32>}, {pipeline_mode = #tpu.pipeline_mode<synchronous>, transform_indices = @transform_21, window_bounds = array<i64: 32, 10>}, {pipeline_mode = #tpu.pipeline_mode<synchronous>, transform_indices = @transform_22, window_bounds = array<i64: 1, 10>}, {transform_indices = @transform_23, window_bounds = array<i64: 1, 1, 10>}]} {
    %c0_i32 = arith.constant 0 : i32
    %0 = arith.cmpi eq, %arg1, %c0_i32 : i32
    %1 = arith.extui %0 : i1 to i32
    %c0_i32_0 = arith.constant 0 : i32
    %2 = arith.cmpi ne, %1, %c0_i32_0 : i32
    scf.if %2 {
      %c0_192 = arith.constant 0 : index
      %c0_193 = arith.constant 0 : index
      %c0_194 = arith.constant 0 : index
      %268 = vector.load %arg2[%c0_192, %c0_193, %c0_194] : memref<1x9x512xbf16, #tpu.memory_space<vmem>>, vector<1x9x512xbf16>
      %269 = vector.shape_cast %268 : vector<1x9x512xbf16> to vector<9x512xbf16>
      %c0_195 = arith.constant 0 : index
      %c0_196 = arith.constant 0 : index
      %270 = vector.load %arg3[%c0_195, %c0_196] : memref<512x32xbf16, #tpu.memory_space<vmem>>, vector<512x32xbf16>
      %cst_197 = arith.constant dense<0.000000e+00> : vector<9x32xf32>
      %271 = tpu.matmul %269, %270, %cst_197 {dimension_numbers = #tpu.dot_dimension_numbers<[1], [0], [0], [1], [0, 0, 1, 1], [], []>} : vector<9x512xbf16>, vector<512x32xbf16>, vector<9x32xf32> -> vector<9x32xf32>
      %c0_198 = arith.constant 0 : index
      %c0_199 = arith.constant 0 : index
      %272 = vector.load %arg4[%c0_198, %c0_199] : memref<9x32xf32, #tpu.memory_space<vmem>>, vector<9x32xf32>
      %273 = arith.addf %271, %272 : vector<9x32xf32>
      %c0_200 = arith.constant 0 : index
      %c0_201 = arith.constant 0 : index
      %274 = vector.load %arg26[%c0_200, %c0_201] : memref<9x32xf32, #tpu.memory_space<vmem>>, vector<9x32xf32>
      tpu.vector_store %arg26[%c0_200, %c0_201], %273 {strides = array<i32>} : memref<9x32xf32, #tpu.memory_space<vmem>>, vector<9x32xf32>,
    } else {
    }
    %c0 = arith.constant 0 : index
    %c0_1 = arith.constant 0 : index
    %3 = vector.load %arg26[%c0, %c0_1] : memref<9x32xf32, #tpu.memory_space<vmem>>, vector<9x32xf32>
    %c0_2 = arith.constant 0 : index
    %c0_3 = arith.constant 0 : index
    %c0_4 = arith.constant 0 : index
    %4 = vector.load %arg5[%c0_2, %c0_3, %c0_4] : memref<1x1x32xf32, #tpu.memory_space<vmem>>, vector<1x1x32xf32>
    %5 = vector.shape_cast %4 : vector<1x1x32xf32> to vector<1x32xf32>
    %c0_5 = arith.constant 0 : index
    %c0_6 = arith.constant 0 : index
    %c0_7 = arith.constant 0 : index
    %6 = vector.load %arg6[%c0_5, %c0_6, %c0_7] : memref<1x1x32xf32, #tpu.memory_space<vmem>>, vector<1x1x32xf32>
    %7 = vector.shape_cast %6 : vector<1x1x32xf32> to vector<1x32xf32>
    %cst = arith.constant dense<0.000000e+00> : vector<9xf32>
    %8 = vector.multi_reduction <add>, %3, %cst [1] : vector<9x32xf32> to vector<9xf32>
    %9 = vector.shape_cast %8 : vector<9xf32> to vector<9x1xf32>
    %cst_8 = arith.constant 3.200000e+01 : f32
    %10 = vector.broadcast %cst_8 : f32 to vector<9x1xf32>
    %11 = arith.divf %9, %10 : vector<9x1xf32>
    %12 = vector.broadcast %11 : vector<9x1xf32> to vector<9x32xf32>
    %13 = arith.subf %3, %12 : vector<9x32xf32>
    %14 = arith.mulf %13, %13 : vector<9x32xf32>
    %cst_9 = arith.constant dense<0.000000e+00> : vector<9xf32>
    %15 = vector.multi_reduction <add>, %14, %cst_9 [1] : vector<9x32xf32> to vector<9xf32>
    %16 = vector.shape_cast %15 : vector<9xf32> to vector<9x1xf32>
    %cst_10 = arith.constant 3.200000e+01 : f32
    %17 = vector.broadcast %cst_10 : f32 to vector<9x1xf32>
    %18 = arith.divf %16, %17 : vector<9x1xf32>
    %19 = vector.broadcast %11 : vector<9x1xf32> to vector<9x32xf32>
    %20 = arith.subf %3, %19 : vector<9x32xf32>
    %cst_11 = arith.constant 9.99999997E-7 : f32
    %21 = vector.broadcast %cst_11 : f32 to vector<9x1xf32>
    %22 = arith.addf %18, %21 : vector<9x1xf32>
    %23 = math.rsqrt %22 : vector<9x1xf32>
    %24 = vector.broadcast %23 : vector<9x1xf32> to vector<9x32xf32>
    %25 = arith.mulf %20, %24 : vector<9x32xf32>
    %26 = vector.broadcast %5 : vector<1x32xf32> to vector<9x32xf32>
    %27 = arith.mulf %25, %26 : vector<9x32xf32>
    %28 = vector.broadcast %7 : vector<1x32xf32> to vector<9x32xf32>
    %29 = arith.addf %27, %28 : vector<9x32xf32>
    %30 = arith.truncf %29 : vector<9x32xf32> to vector<9x32xbf16>
    %cst_12 = arith.constant 0.000000e+00 : f32
    %31 = vector.broadcast %cst_12 : f32 to vector<9x32xf32>
    %c0_13 = arith.constant 0 : index
    %c0_14 = arith.constant 0 : index
    %c0_15 = arith.constant 0 : index
    %c0_16 = arith.constant 0 : index
    %32 = vector.load %arg7[%c0_13, %c0_14, %c0_15, %c0_16] : memref<1x4x32x8xbf16, #tpu.memory_space<vmem>>, vector<1x1x32x8xbf16>
    %33 = vector.shape_cast %32 : vector<1x1x32x8xbf16> to vector<32x8xbf16>
    %cst_17 = arith.constant dense<0.000000e+00> : vector<9x8xf32>
    %34 = tpu.matmul %30, %33, %cst_17 {dimension_numbers = #tpu.dot_dimension_numbers<[1], [0], [0], [1], [0, 0, 1, 1], [], []>} : vector<9x32xbf16>, vector<32x8xbf16>, vector<9x8xf32> -> vector<9x8xf32>
    %c0_18 = arith.constant 0 : index
    %c0_19 = arith.constant 0 : index
    %c0_20 = arith.constant 0 : index
    %c0_21 = arith.constant 0 : index
    %35 = vector.load %arg10[%c0_18, %c0_19, %c0_20, %c0_21] : memref<1x4x1x8xf32, #tpu.memory_space<vmem>>, vector<1x1x1x8xf32>
    %36 = vector.shape_cast %35 : vector<1x1x1x8xf32> to vector<1x8xf32>
    %37 = vector.broadcast %36 : vector<1x8xf32> to vector<9x8xf32>
    %38 = arith.addf %34, %37 : vector<9x8xf32>
    %cst_22 = arith.constant 0.353553385 : f32
    %39 = vector.broadcast %cst_22 : f32 to vector<9x8xf32>
    %40 = arith.mulf %38, %39 : vector<9x8xf32>
    %c0_23 = arith.constant 0 : index
    %c0_24 = arith.constant 0 : index
    %c0_25 = arith.constant 0 : index
    %c0_26 = arith.constant 0 : index
    %41 = vector.load %arg8[%c0_23, %c0_24, %c0_25, %c0_26] : memref<1x4x32x8xbf16, #tpu.memory_space<vmem>>, vector<1x1x32x8xbf16>
    %42 = vector.shape_cast %41 : vector<1x1x32x8xbf16> to vector<32x8xbf16>
    %cst_27 = arith.constant dense<0.000000e+00> : vector<9x8xf32>
    %43 = tpu.matmul %30, %42, %cst_27 {dimension_numbers = #tpu.dot_dimension_numbers<[1], [0], [0], [1], [0, 0, 1, 1], [], []>} : vector<9x32xbf16>, vector<32x8xbf16>, vector<9x8xf32> -> vector<9x8xf32>
    %c0_28 = arith.constant 0 : index
    %c0_29 = arith.constant 0 : index
    %c0_30 = arith.constant 0 : index
    %c0_31 = arith.constant 0 : index
    %44 = vector.load %arg11[%c0_28, %c0_29, %c0_30, %c0_31] : memref<1x4x1x8xf32, #tpu.memory_space<vmem>>, vector<1x1x1x8xf32>
    %45 = vector.shape_cast %44 : vector<1x1x1x8xf32> to vector<1x8xf32>
    %46 = vector.broadcast %45 : vector<1x8xf32> to vector<9x8xf32>
    %47 = arith.addf %43, %46 : vector<9x8xf32>
    %c0_32 = arith.constant 0 : index
    %c0_33 = arith.constant 0 : index
    %c0_34 = arith.constant 0 : index
    %c0_35 = arith.constant 0 : index
    %48 = vector.load %arg9[%c0_32, %c0_33, %c0_34, %c0_35] : memref<1x4x32x8xbf16, #tpu.memory_space<vmem>>, vector<1x1x32x8xbf16>
    %49 = vector.shape_cast %48 : vector<1x1x32x8xbf16> to vector<32x8xbf16>
    %cst_36 = arith.constant dense<0.000000e+00> : vector<9x8xf32>
    %50 = tpu.matmul %30, %49, %cst_36 {dimension_numbers = #tpu.dot_dimension_numbers<[1], [0], [0], [1], [0, 0, 1, 1], [], []>} : vector<9x32xbf16>, vector<32x8xbf16>, vector<9x8xf32> -> vector<9x8xf32>
    %c0_37 = arith.constant 0 : index
    %c0_38 = arith.constant 0 : index
    %c0_39 = arith.constant 0 : index
    %c0_40 = arith.constant 0 : index
    %51 = vector.load %arg12[%c0_37, %c0_38, %c0_39, %c0_40] : memref<1x4x1x8xf32, #tpu.memory_space<vmem>>, vector<1x1x1x8xf32>
    %52 = vector.shape_cast %51 : vector<1x1x1x8xf32> to vector<1x8xf32>
    %53 = vector.broadcast %52 : vector<1x8xf32> to vector<9x8xf32>
    %54 = arith.addf %50, %53 : vector<9x8xf32>
    %55 = arith.truncf %40 : vector<9x8xf32> to vector<9x8xbf16>
    %56 = arith.truncf %47 : vector<9x8xf32> to vector<9x8xbf16>
    %cst_41 = arith.constant dense<0.000000e+00> : vector<9x9xf32>
    %57 = tpu.matmul %55, %56, %cst_41 {dimension_numbers = #tpu.dot_dimension_numbers<[1], [1], [0], [0], [0, 0, 1, 0], [], []>} : vector<9x8xbf16>, vector<9x8xbf16>, vector<9x9xf32> -> vector<9x9xf32>
    %cst_42 = arith.constant dense<0xFF800000> : vector<9xf32>
    %58 = vector.multi_reduction <maximumf>, %57, %cst_42 [1] : vector<9x9xf32> to vector<9xf32>
    %59 = vector.shape_cast %58 : vector<9xf32> to vector<9x1xf32>
    %60 = vector.broadcast %59 : vector<9x1xf32> to vector<9x9xf32>
    %61 = arith.subf %57, %60 : vector<9x9xf32>
    %62 = math.exp %61 : vector<9x9xf32>
    %cst_43 = arith.constant dense<0.000000e+00> : vector<9xf32>
    %63 = vector.multi_reduction <add>, %62, %cst_43 [1] : vector<9x9xf32> to vector<9xf32>
    %64 = vector.shape_cast %63 : vector<9xf32> to vector<9x1xf32>
    %65 = tpu.reciprocal %64 {approx = true} : vector<9x1xf32> -> vector<9x1xf32>
    %66 = vector.broadcast %65 : vector<9x1xf32> to vector<9x9xf32>
    %67 = arith.mulf %62, %66 : vector<9x9xf32>
    %68 = arith.truncf %67 : vector<9x9xf32> to vector<9x9xbf16>
    %69 = arith.truncf %54 : vector<9x8xf32> to vector<9x8xbf16>
    %cst_44 = arith.constant dense<0.000000e+00> : vector<9x8xf32>
    %70 = tpu.matmul %68, %69, %cst_44 {dimension_numbers = #tpu.dot_dimension_numbers<[1], [0], [0], [1], [0, 0, 1, 1], [], []>} : vector<9x9xbf16>, vector<9x8xbf16>, vector<9x8xf32> -> vector<9x8xf32>
    %71 = arith.truncf %70 : vector<9x8xf32> to vector<9x8xbf16>
    %c0_45 = arith.constant 0 : index
    %c0_46 = arith.constant 0 : index
    %c0_47 = arith.constant 0 : index
    %c0_48 = arith.constant 0 : index
    %72 = vector.load %arg13[%c0_45, %c0_46, %c0_47, %c0_48] : memref<1x4x8x32xbf16, #tpu.memory_space<vmem>>, vector<1x1x8x32xbf16>
    %73 = vector.shape_cast %72 : vector<1x1x8x32xbf16> to vector<8x32xbf16>
    %cst_49 = arith.constant dense<0.000000e+00> : vector<9x32xf32>
    %74 = tpu.matmul %71, %73, %cst_49 {dimension_numbers = #tpu.dot_dimension_numbers<[1], [0], [0], [1], [0, 0, 1, 1], [], []>} : vector<9x8xbf16>, vector<8x32xbf16>, vector<9x32xf32> -> vector<9x32xf32>
    %75 = arith.addf %31, %74 : vector<9x32xf32>
    %c0_50 = arith.constant 0 : index
    %c1 = arith.constant 1 : index
    %c0_51 = arith.constant 0 : index
    %c0_52 = arith.constant 0 : index
    %76 = vector.load %arg7[%c0_50, %c1, %c0_51, %c0_52] : memref<1x4x32x8xbf16, #tpu.memory_space<vmem>>, vector<1x1x32x8xbf16>
    %77 = vector.shape_cast %76 : vector<1x1x32x8xbf16> to vector<32x8xbf16>
    %cst_53 = arith.constant dense<0.000000e+00> : vector<9x8xf32>
    %78 = tpu.matmul %30, %77, %cst_53 {dimension_numbers = #tpu.dot_dimension_numbers<[1], [0], [0], [1], [0, 0, 1, 1], [], []>} : vector<9x32xbf16>, vector<32x8xbf16>, vector<9x8xf32> -> vector<9x8xf32>
    %c0_54 = arith.constant 0 : index
    %c1_55 = arith.constant 1 : index
    %c0_56 = arith.constant 0 : index
    %c0_57 = arith.constant 0 : index
    %79 = vector.load %arg10[%c0_54, %c1_55, %c0_56, %c0_57] : memref<1x4x1x8xf32, #tpu.memory_space<vmem>>, vector<1x1x1x8xf32>
    %80 = vector.shape_cast %79 : vector<1x1x1x8xf32> to vector<1x8xf32>
    %81 = vector.broadcast %80 : vector<1x8xf32> to vector<9x8xf32>
    %82 = arith.addf %78, %81 : vector<9x8xf32>
    %cst_58 = arith.constant 0.353553385 : f32
    %83 = vector.broadcast %cst_58 : f32 to vector<9x8xf32>
    %84 = arith.mulf %82, %83 : vector<9x8xf32>
    %c0_59 = arith.constant 0 : index
    %c1_60 = arith.constant 1 : index
    %c0_61 = arith.constant 0 : index
    %c0_62 = arith.constant 0 : index
    %85 = vector.load %arg8[%c0_59, %c1_60, %c0_61, %c0_62] : memref<1x4x32x8xbf16, #tpu.memory_space<vmem>>, vector<1x1x32x8xbf16>
    %86 = vector.shape_cast %85 : vector<1x1x32x8xbf16> to vector<32x8xbf16>
    %cst_63 = arith.constant dense<0.000000e+00> : vector<9x8xf32>
    %87 = tpu.matmul %30, %86, %cst_63 {dimension_numbers = #tpu.dot_dimension_numbers<[1], [0], [0], [1], [0, 0, 1, 1], [], []>} : vector<9x32xbf16>, vector<32x8xbf16>, vector<9x8xf32> -> vector<9x8xf32>
    %c0_64 = arith.constant 0 : index
    %c1_65 = arith.constant 1 : index
    %c0_66 = arith.constant 0 : index
    %c0_67 = arith.constant 0 : index
    %88 = vector.load %arg11[%c0_64, %c1_65, %c0_66, %c0_67] : memref<1x4x1x8xf32, #tpu.memory_space<vmem>>, vector<1x1x1x8xf32>
    %89 = vector.shape_cast %88 : vector<1x1x1x8xf32> to vector<1x8xf32>
    %90 = vector.broadcast %89 : vector<1x8xf32> to vector<9x8xf32>
    %91 = arith.addf %87, %90 : vector<9x8xf32>
    %c0_68 = arith.constant 0 : index
    %c1_69 = arith.constant 1 : index
    %c0_70 = arith.constant 0 : index
    %c0_71 = arith.constant 0 : index
    %92 = vector.load %arg9[%c0_68, %c1_69, %c0_70, %c0_71] : memref<1x4x32x8xbf16, #tpu.memory_space<vmem>>, vector<1x1x32x8xbf16>
    %93 = vector.shape_cast %92 : vector<1x1x32x8xbf16> to vector<32x8xbf16>
    %cst_72 = arith.constant dense<0.000000e+00> : vector<9x8xf32>
    %94 = tpu.matmul %30, %93, %cst_72 {dimension_numbers = #tpu.dot_dimension_numbers<[1], [0], [0], [1], [0, 0, 1, 1], [], []>} : vector<9x32xbf16>, vector<32x8xbf16>, vector<9x8xf32> -> vector<9x8xf32>
    %c0_73 = arith.constant 0 : index
    %c1_74 = arith.constant 1 : index
    %c0_75 = arith.constant 0 : index
    %c0_76 = arith.constant 0 : index
    %95 = vector.load %arg12[%c0_73, %c1_74, %c0_75, %c0_76] : memref<1x4x1x8xf32, #tpu.memory_space<vmem>>, vector<1x1x1x8xf32>
    %96 = vector.shape_cast %95 : vector<1x1x1x8xf32> to vector<1x8xf32>
    %97 = vector.broadcast %96 : vector<1x8xf32> to vector<9x8xf32>
    %98 = arith.addf %94, %97 : vector<9x8xf32>
    %99 = arith.truncf %84 : vector<9x8xf32> to vector<9x8xbf16>
    %100 = arith.truncf %91 : vector<9x8xf32> to vector<9x8xbf16>
    %cst_77 = arith.constant dense<0.000000e+00> : vector<9x9xf32>
    %101 = tpu.matmul %99, %100, %cst_77 {dimension_numbers = #tpu.dot_dimension_numbers<[1], [1], [0], [0], [0, 0, 1, 0], [], []>} : vector<9x8xbf16>, vector<9x8xbf16>, vector<9x9xf32> -> vector<9x9xf32>
    %cst_78 = arith.constant dense<0xFF800000> : vector<9xf32>
    %102 = vector.multi_reduction <maximumf>, %101, %cst_78 [1] : vector<9x9xf32> to vector<9xf32>
    %103 = vector.shape_cast %102 : vector<9xf32> to vector<9x1xf32>
    %104 = vector.broadcast %103 : vector<9x1xf32> to vector<9x9xf32>
    %105 = arith.subf %101, %104 : vector<9x9xf32>
    %106 = math.exp %105 : vector<9x9xf32>
    %cst_79 = arith.constant dense<0.000000e+00> : vector<9xf32>
    %107 = vector.multi_reduction <add>, %106, %cst_79 [1] : vector<9x9xf32> to vector<9xf32>
    %108 = vector.shape_cast %107 : vector<9xf32> to vector<9x1xf32>
    %109 = tpu.reciprocal %108 {approx = true} : vector<9x1xf32> -> vector<9x1xf32>
    %110 = vector.broadcast %109 : vector<9x1xf32> to vector<9x9xf32>
    %111 = arith.mulf %106, %110 : vector<9x9xf32>
    %112 = arith.truncf %111 : vector<9x9xf32> to vector<9x9xbf16>
    %113 = arith.truncf %98 : vector<9x8xf32> to vector<9x8xbf16>
    %cst_80 = arith.constant dense<0.000000e+00> : vector<9x8xf32>
    %114 = tpu.matmul %112, %113, %cst_80 {dimension_numbers = #tpu.dot_dimension_numbers<[1], [0], [0], [1], [0, 0, 1, 1], [], []>} : vector<9x9xbf16>, vector<9x8xbf16>, vector<9x8xf32> -> vector<9x8xf32>
    %115 = arith.truncf %114 : vector<9x8xf32> to vector<9x8xbf16>
    %c0_81 = arith.constant 0 : index
    %c1_82 = arith.constant 1 : index
    %c0_83 = arith.constant 0 : index
    %c0_84 = arith.constant 0 : index
    %116 = vector.load %arg13[%c0_81, %c1_82, %c0_83, %c0_84] : memref<1x4x8x32xbf16, #tpu.memory_space<vmem>>, vector<1x1x8x32xbf16>
    %117 = vector.shape_cast %116 : vector<1x1x8x32xbf16> to vector<8x32xbf16>
    %cst_85 = arith.constant dense<0.000000e+00> : vector<9x32xf32>
    %118 = tpu.matmul %115, %117, %cst_85 {dimension_numbers = #tpu.dot_dimension_numbers<[1], [0], [0], [1], [0, 0, 1, 1], [], []>} : vector<9x8xbf16>, vector<8x32xbf16>, vector<9x32xf32> -> vector<9x32xf32>
    %119 = arith.addf %75, %118 : vector<9x32xf32>
    %c0_86 = arith.constant 0 : index
    %c2 = arith.constant 2 : index
    %c0_87 = arith.constant 0 : index
    %c0_88 = arith.constant 0 : index
    %120 = vector.load %arg7[%c0_86, %c2, %c0_87, %c0_88] : memref<1x4x32x8xbf16, #tpu.memory_space<vmem>>, vector<1x1x32x8xbf16>
    %121 = vector.shape_cast %120 : vector<1x1x32x8xbf16> to vector<32x8xbf16>
    %cst_89 = arith.constant dense<0.000000e+00> : vector<9x8xf32>
    %122 = tpu.matmul %30, %121, %cst_89 {dimension_numbers = #tpu.dot_dimension_numbers<[1], [0], [0], [1], [0, 0, 1, 1], [], []>} : vector<9x32xbf16>, vector<32x8xbf16>, vector<9x8xf32> -> vector<9x8xf32>
    %c0_90 = arith.constant 0 : index
    %c2_91 = arith.constant 2 : index
    %c0_92 = arith.constant 0 : index
    %c0_93 = arith.constant 0 : index
    %123 = vector.load %arg10[%c0_90, %c2_91, %c0_92, %c0_93] : memref<1x4x1x8xf32, #tpu.memory_space<vmem>>, vector<1x1x1x8xf32>
    %124 = vector.shape_cast %123 : vector<1x1x1x8xf32> to vector<1x8xf32>
    %125 = vector.broadcast %124 : vector<1x8xf32> to vector<9x8xf32>
    %126 = arith.addf %122, %125 : vector<9x8xf32>
    %cst_94 = arith.constant 0.353553385 : f32
    %127 = vector.broadcast %cst_94 : f32 to vector<9x8xf32>
    %128 = arith.mulf %126, %127 : vector<9x8xf32>
    %c0_95 = arith.constant 0 : index
    %c2_96 = arith.constant 2 : index
    %c0_97 = arith.constant 0 : index
    %c0_98 = arith.constant 0 : index
    %129 = vector.load %arg8[%c0_95, %c2_96, %c0_97, %c0_98] : memref<1x4x32x8xbf16, #tpu.memory_space<vmem>>, vector<1x1x32x8xbf16>
    %130 = vector.shape_cast %129 : vector<1x1x32x8xbf16> to vector<32x8xbf16>
    %cst_99 = arith.constant dense<0.000000e+00> : vector<9x8xf32>
    %131 = tpu.matmul %30, %130, %cst_99 {dimension_numbers = #tpu.dot_dimension_numbers<[1], [0], [0], [1], [0, 0, 1, 1], [], []>} : vector<9x32xbf16>, vector<32x8xbf16>, vector<9x8xf32> -> vector<9x8xf32>
    %c0_100 = arith.constant 0 : index
    %c2_101 = arith.constant 2 : index
    %c0_102 = arith.constant 0 : index
    %c0_103 = arith.constant 0 : index
    %132 = vector.load %arg11[%c0_100, %c2_101, %c0_102, %c0_103] : memref<1x4x1x8xf32, #tpu.memory_space<vmem>>, vector<1x1x1x8xf32>
    %133 = vector.shape_cast %132 : vector<1x1x1x8xf32> to vector<1x8xf32>
    %134 = vector.broadcast %133 : vector<1x8xf32> to vector<9x8xf32>
    %135 = arith.addf %131, %134 : vector<9x8xf32>
    %c0_104 = arith.constant 0 : index
    %c2_105 = arith.constant 2 : index
    %c0_106 = arith.constant 0 : index
    %c0_107 = arith.constant 0 : index
    %136 = vector.load %arg9[%c0_104, %c2_105, %c0_106, %c0_107] : memref<1x4x32x8xbf16, #tpu.memory_space<vmem>>, vector<1x1x32x8xbf16>
    %137 = vector.shape_cast %136 : vector<1x1x32x8xbf16> to vector<32x8xbf16>
    %cst_108 = arith.constant dense<0.000000e+00> : vector<9x8xf32>
    %138 = tpu.matmul %30, %137, %cst_108 {dimension_numbers = #tpu.dot_dimension_numbers<[1], [0], [0], [1], [0, 0, 1, 1], [], []>} : vector<9x32xbf16>, vector<32x8xbf16>, vector<9x8xf32> -> vector<9x8xf32>
    %c0_109 = arith.constant 0 : index
    %c2_110 = arith.constant 2 : index
    %c0_111 = arith.constant 0 : index
    %c0_112 = arith.constant 0 : index
    %139 = vector.load %arg12[%c0_109, %c2_110, %c0_111, %c0_112] : memref<1x4x1x8xf32, #tpu.memory_space<vmem>>, vector<1x1x1x8xf32>
    %140 = vector.shape_cast %139 : vector<1x1x1x8xf32> to vector<1x8xf32>
    %141 = vector.broadcast %140 : vector<1x8xf32> to vector<9x8xf32>
    %142 = arith.addf %138, %141 : vector<9x8xf32>
    %143 = arith.truncf %128 : vector<9x8xf32> to vector<9x8xbf16>
    %144 = arith.truncf %135 : vector<9x8xf32> to vector<9x8xbf16>
    %cst_113 = arith.constant dense<0.000000e+00> : vector<9x9xf32>
    %145 = tpu.matmul %143, %144, %cst_113 {dimension_numbers = #tpu.dot_dimension_numbers<[1], [1], [0], [0], [0, 0, 1, 0], [], []>} : vector<9x8xbf16>, vector<9x8xbf16>, vector<9x9xf32> -> vector<9x9xf32>
    %cst_114 = arith.constant dense<0xFF800000> : vector<9xf32>
    %146 = vector.multi_reduction <maximumf>, %145, %cst_114 [1] : vector<9x9xf32> to vector<9xf32>
    %147 = vector.shape_cast %146 : vector<9xf32> to vector<9x1xf32>
    %148 = vector.broadcast %147 : vector<9x1xf32> to vector<9x9xf32>
    %149 = arith.subf %145, %148 : vector<9x9xf32>
    %150 = math.exp %149 : vector<9x9xf32>
    %cst_115 = arith.constant dense<0.000000e+00> : vector<9xf32>
    %151 = vector.multi_reduction <add>, %150, %cst_115 [1] : vector<9x9xf32> to vector<9xf32>
    %152 = vector.shape_cast %151 : vector<9xf32> to vector<9x1xf32>
    %153 = tpu.reciprocal %152 {approx = true} : vector<9x1xf32> -> vector<9x1xf32>
    %154 = vector.broadcast %153 : vector<9x1xf32> to vector<9x9xf32>
    %155 = arith.mulf %150, %154 : vector<9x9xf32>
    %156 = arith.truncf %155 : vector<9x9xf32> to vector<9x9xbf16>
    %157 = arith.truncf %142 : vector<9x8xf32> to vector<9x8xbf16>
    %cst_116 = arith.constant dense<0.000000e+00> : vector<9x8xf32>
    %158 = tpu.matmul %156, %157, %cst_116 {dimension_numbers = #tpu.dot_dimension_numbers<[1], [0], [0], [1], [0, 0, 1, 1], [], []>} : vector<9x9xbf16>, vector<9x8xbf16>, vector<9x8xf32> -> vector<9x8xf32>
    %159 = arith.truncf %158 : vector<9x8xf32> to vector<9x8xbf16>
    %c0_117 = arith.constant 0 : index
    %c2_118 = arith.constant 2 : index
    %c0_119 = arith.constant 0 : index
    %c0_120 = arith.constant 0 : index
    %160 = vector.load %arg13[%c0_117, %c2_118, %c0_119, %c0_120] : memref<1x4x8x32xbf16, #tpu.memory_space<vmem>>, vector<1x1x8x32xbf16>
    %161 = vector.shape_cast %160 : vector<1x1x8x32xbf16> to vector<8x32xbf16>
    %cst_121 = arith.constant dense<0.000000e+00> : vector<9x32xf32>
    %162 = tpu.matmul %159, %161, %cst_121 {dimension_numbers = #tpu.dot_dimension_numbers<[1], [0], [0], [1], [0, 0, 1, 1], [], []>} : vector<9x8xbf16>, vector<8x32xbf16>, vector<9x32xf32> -> vector<9x32xf32>
    %163 = arith.addf %119, %162 : vector<9x32xf32>
    %c0_122 = arith.constant 0 : index
    %c3 = arith.constant 3 : index
    %c0_123 = arith.constant 0 : index
    %c0_124 = arith.constant 0 : index
    %164 = vector.load %arg7[%c0_122, %c3, %c0_123, %c0_124] : memref<1x4x32x8xbf16, #tpu.memory_space<vmem>>, vector<1x1x32x8xbf16>
    %165 = vector.shape_cast %164 : vector<1x1x32x8xbf16> to vector<32x8xbf16>
    %cst_125 = arith.constant dense<0.000000e+00> : vector<9x8xf32>
    %166 = tpu.matmul %30, %165, %cst_125 {dimension_numbers = #tpu.dot_dimension_numbers<[1], [0], [0], [1], [0, 0, 1, 1], [], []>} : vector<9x32xbf16>, vector<32x8xbf16>, vector<9x8xf32> -> vector<9x8xf32>
    %c0_126 = arith.constant 0 : index
    %c3_127 = arith.constant 3 : index
    %c0_128 = arith.constant 0 : index
    %c0_129 = arith.constant 0 : index
    %167 = vector.load %arg10[%c0_126, %c3_127, %c0_128, %c0_129] : memref<1x4x1x8xf32, #tpu.memory_space<vmem>>, vector<1x1x1x8xf32>
    %168 = vector.shape_cast %167 : vector<1x1x1x8xf32> to vector<1x8xf32>
    %169 = vector.broadcast %168 : vector<1x8xf32> to vector<9x8xf32>
    %170 = arith.addf %166, %169 : vector<9x8xf32>
    %cst_130 = arith.constant 0.353553385 : f32
    %171 = vector.broadcast %cst_130 : f32 to vector<9x8xf32>
    %172 = arith.mulf %170, %171 : vector<9x8xf32>
    %c0_131 = arith.constant 0 : index
    %c3_132 = arith.constant 3 : index
    %c0_133 = arith.constant 0 : index
    %c0_134 = arith.constant 0 : index
    %173 = vector.load %arg8[%c0_131, %c3_132, %c0_133, %c0_134] : memref<1x4x32x8xbf16, #tpu.memory_space<vmem>>, vector<1x1x32x8xbf16>
    %174 = vector.shape_cast %173 : vector<1x1x32x8xbf16> to vector<32x8xbf16>
    %cst_135 = arith.constant dense<0.000000e+00> : vector<9x8xf32>
    %175 = tpu.matmul %30, %174, %cst_135 {dimension_numbers = #tpu.dot_dimension_numbers<[1], [0], [0], [1], [0, 0, 1, 1], [], []>} : vector<9x32xbf16>, vector<32x8xbf16>, vector<9x8xf32> -> vector<9x8xf32>
    %c0_136 = arith.constant 0 : index
    %c3_137 = arith.constant 3 : index
    %c0_138 = arith.constant 0 : index
    %c0_139 = arith.constant 0 : index
    %176 = vector.load %arg11[%c0_136, %c3_137, %c0_138, %c0_139] : memref<1x4x1x8xf32, #tpu.memory_space<vmem>>, vector<1x1x1x8xf32>
    %177 = vector.shape_cast %176 : vector<1x1x1x8xf32> to vector<1x8xf32>
    %178 = vector.broadcast %177 : vector<1x8xf32> to vector<9x8xf32>
    %179 = arith.addf %175, %178 : vector<9x8xf32>
    %c0_140 = arith.constant 0 : index
    %c3_141 = arith.constant 3 : index
    %c0_142 = arith.constant 0 : index
    %c0_143 = arith.constant 0 : index
    %180 = vector.load %arg9[%c0_140, %c3_141, %c0_142, %c0_143] : memref<1x4x32x8xbf16, #tpu.memory_space<vmem>>, vector<1x1x32x8xbf16>
    %181 = vector.shape_cast %180 : vector<1x1x32x8xbf16> to vector<32x8xbf16>
    %cst_144 = arith.constant dense<0.000000e+00> : vector<9x8xf32>
    %182 = tpu.matmul %30, %181, %cst_144 {dimension_numbers = #tpu.dot_dimension_numbers<[1], [0], [0], [1], [0, 0, 1, 1], [], []>} : vector<9x32xbf16>, vector<32x8xbf16>, vector<9x8xf32> -> vector<9x8xf32>
    %c0_145 = arith.constant 0 : index
    %c3_146 = arith.constant 3 : index
    %c0_147 = arith.constant 0 : index
    %c0_148 = arith.constant 0 : index
    %183 = vector.load %arg12[%c0_145, %c3_146, %c0_147, %c0_148] : memref<1x4x1x8xf32, #tpu.memory_space<vmem>>, vector<1x1x1x8xf32>
    %184 = vector.shape_cast %183 : vector<1x1x1x8xf32> to vector<1x8xf32>
    %185 = vector.broadcast %184 : vector<1x8xf32> to vector<9x8xf32>
    %186 = arith.addf %182, %185 : vector<9x8xf32>
    %187 = arith.truncf %172 : vector<9x8xf32> to vector<9x8xbf16>
    %188 = arith.truncf %179 : vector<9x8xf32> to vector<9x8xbf16>
    %cst_149 = arith.constant dense<0.000000e+00> : vector<9x9xf32>
    %189 = tpu.matmul %187, %188, %cst_149 {dimension_numbers = #tpu.dot_dimension_numbers<[1], [1], [0], [0], [0, 0, 1, 0], [], []>} : vector<9x8xbf16>, vector<9x8xbf16>, vector<9x9xf32> -> vector<9x9xf32>
    %cst_150 = arith.constant dense<0xFF800000> : vector<9xf32>
    %190 = vector.multi_reduction <maximumf>, %189, %cst_150 [1] : vector<9x9xf32> to vector<9xf32>
    %191 = vector.shape_cast %190 : vector<9xf32> to vector<9x1xf32>
    %192 = vector.broadcast %191 : vector<9x1xf32> to vector<9x9xf32>
    %193 = arith.subf %189, %192 : vector<9x9xf32>
    %194 = math.exp %193 : vector<9x9xf32>
    %cst_151 = arith.constant dense<0.000000e+00> : vector<9xf32>
    %195 = vector.multi_reduction <add>, %194, %cst_151 [1] : vector<9x9xf32> to vector<9xf32>
    %196 = vector.shape_cast %195 : vector<9xf32> to vector<9x1xf32>
    %197 = tpu.reciprocal %196 {approx = true} : vector<9x1xf32> -> vector<9x1xf32>
    %198 = vector.broadcast %197 : vector<9x1xf32> to vector<9x9xf32>
    %199 = arith.mulf %194, %198 : vector<9x9xf32>
    %200 = arith.truncf %199 : vector<9x9xf32> to vector<9x9xbf16>
    %201 = arith.truncf %186 : vector<9x8xf32> to vector<9x8xbf16>
    %cst_152 = arith.constant dense<0.000000e+00> : vector<9x8xf32>
    %202 = tpu.matmul %200, %201, %cst_152 {dimension_numbers = #tpu.dot_dimension_numbers<[1], [0], [0], [1], [0, 0, 1, 1], [], []>} : vector<9x9xbf16>, vector<9x8xbf16>, vector<9x8xf32> -> vector<9x8xf32>
    %203 = arith.truncf %202 : vector<9x8xf32> to vector<9x8xbf16>
    %c0_153 = arith.constant 0 : index
    %c3_154 = arith.constant 3 : index
    %c0_155 = arith.constant 0 : index
    %c0_156 = arith.constant 0 : index
    %204 = vector.load %arg13[%c0_153, %c3_154, %c0_155, %c0_156] : memref<1x4x8x32xbf16, #tpu.memory_space<vmem>>, vector<1x1x8x32xbf16>
    %205 = vector.shape_cast %204 : vector<1x1x8x32xbf16> to vector<8x32xbf16>
    %cst_157 = arith.constant dense<0.000000e+00> : vector<9x32xf32>
    %206 = tpu.matmul %203, %205, %cst_157 {dimension_numbers = #tpu.dot_dimension_numbers<[1], [0], [0], [1], [0, 0, 1, 1], [], []>} : vector<9x8xbf16>, vector<8x32xbf16>, vector<9x32xf32> -> vector<9x32xf32>
    %207 = arith.addf %163, %206 : vector<9x32xf32>
    %208 = arith.addf %3, %207 : vector<9x32xf32>
    %c0_158 = arith.constant 0 : index
    %c0_159 = arith.constant 0 : index
    %c0_160 = arith.constant 0 : index
    %209 = vector.load %arg14[%c0_158, %c0_159, %c0_160] : memref<1x1x32xf32, #tpu.memory_space<vmem>>, vector<1x1x32xf32>
    %210 = vector.shape_cast %209 : vector<1x1x32xf32> to vector<1x32xf32>
    %211 = vector.broadcast %210 : vector<1x32xf32> to vector<9x32xf32>
    %212 = arith.addf %208, %211 : vector<9x32xf32>
    %c0_161 = arith.constant 0 : index
    %c0_162 = arith.constant 0 : index
    %c0_163 = arith.constant 0 : index
    %213 = vector.load %arg15[%c0_161, %c0_162, %c0_163] : memref<1x1x32xf32, #tpu.memory_space<vmem>>, vector<1x1x32xf32>
    %214 = vector.shape_cast %213 : vector<1x1x32xf32> to vector<1x32xf32>
    %c0_164 = arith.constant 0 : index
    %c0_165 = arith.constant 0 : index
    %c0_166 = arith.constant 0 : index
    %215 = vector.load %arg16[%c0_164, %c0_165, %c0_166] : memref<1x1x32xf32, #tpu.memory_space<vmem>>, vector<1x1x32xf32>
    %216 = vector.shape_cast %215 : vector<1x1x32xf32> to vector<1x32xf32>
    %cst_167 = arith.constant dense<0.000000e+00> : vector<9xf32>
    %217 = vector.multi_reduction <add>, %212, %cst_167 [1] : vector<9x32xf32> to vector<9xf32>
    %218 = vector.shape_cast %217 : vector<9xf32> to vector<9x1xf32>
    %cst_168 = arith.constant 3.200000e+01 : f32
    %219 = vector.broadcast %cst_168 : f32 to vector<9x1xf32>
    %220 = arith.divf %218, %219 : vector<9x1xf32>
    %221 = vector.broadcast %220 : vector<9x1xf32> to vector<9x32xf32>
    %222 = arith.subf %212, %221 : vector<9x32xf32>
    %223 = arith.mulf %222, %222 : vector<9x32xf32>
    %cst_169 = arith.constant dense<0.000000e+00> : vector<9xf32>
    %224 = vector.multi_reduction <add>, %223, %cst_169 [1] : vector<9x32xf32> to vector<9xf32>
    %225 = vector.shape_cast %224 : vector<9xf32> to vector<9x1xf32>
    %cst_170 = arith.constant 3.200000e+01 : f32
    %226 = vector.broadcast %cst_170 : f32 to vector<9x1xf32>
    %227 = arith.divf %225, %226 : vector<9x1xf32>
    %228 = vector.broadcast %220 : vector<9x1xf32> to vector<9x32xf32>
    %229 = arith.subf %212, %228 : vector<9x32xf32>
    %cst_171 = arith.constant 9.99999997E-7 : f32
    %230 = vector.broadcast %cst_171 : f32 to vector<9x1xf32>
    %231 = arith.addf %227, %230 : vector<9x1xf32>
    %232 = math.rsqrt %231 : vector<9x1xf32>
    %233 = vector.broadcast %232 : vector<9x1xf32> to vector<9x32xf32>
    %234 = arith.mulf %229, %233 : vector<9x32xf32>
    %235 = vector.broadcast %214 : vector<1x32xf32> to vector<9x32xf32>
    %236 = arith.mulf %234, %235 : vector<9x32xf32>
    %237 = vector.broadcast %216 : vector<1x32xf32> to vector<9x32xf32>
    %238 = arith.addf %236, %237 : vector<9x32xf32>
    %239 = arith.truncf %238 : vector<9x32xf32> to vector<9x32xbf16>
    %c0_172 = arith.constant 0 : index
    %c0_173 = arith.constant 0 : index
    %c0_174 = arith.constant 0 : index
    %240 = vector.load %arg17[%c0_172, %c0_173, %c0_174] : memref<1x32x128xbf16, #tpu.memory_space<vmem>>, vector<1x32x128xbf16>
    %241 = vector.shape_cast %240 : vector<1x32x128xbf16> to vector<32x128xbf16>
    %cst_175 = arith.constant dense<0.000000e+00> : vector<9x128xf32>
    %242 = tpu.matmul %239, %241, %cst_175 {dimension_numbers = #tpu.dot_dimension_numbers<[1], [0], [0], [1], [0, 0, 1, 1], [], []>} : vector<9x32xbf16>, vector<32x128xbf16>, vector<9x128xf32> -> vector<9x128xf32>
    %c0_176 = arith.constant 0 : index
    %c0_177 = arith.constant 0 : index
    %c0_178 = arith.constant 0 : index
    %243 = vector.load %arg18[%c0_176, %c0_177, %c0_178] : memref<1x1x128xf32, #tpu.memory_space<vmem>>, vector<1x1x128xf32>
    %244 = vector.shape_cast %243 : vector<1x1x128xf32> to vector<1x128xf32>
    %245 = vector.broadcast %244 : vector<1x128xf32> to vector<9x128xf32>
    %246 = arith.addf %242, %245 : vector<9x128xf32>
    %cst_179 = arith.constant 5.000000e-01 : f32
    %247 = vector.broadcast %cst_179 : f32 to vector<9x128xf32>
    %248 = arith.mulf %247, %246 : vector<9x128xf32>
    %cst_180 = arith.constant 0.707106769 : f32
    %249 = vector.broadcast %cst_180 : f32 to vector<9x128xf32>
    %250 = arith.mulf %246, %249 : vector<9x128xf32>
    %251 = math.erf %250 : vector<9x128xf32>
    %cst_181 = arith.constant 1.000000e+00 : f32
    %252 = vector.broadcast %cst_181 : f32 to vector<9x128xf32>
    %253 = arith.addf %252, %251 : vector<9x128xf32>
    %254 = arith.mulf %248, %253 : vector<9x128xf32>
    %255 = arith.truncf %254 : vector<9x128xf32> to vector<9x128xbf16>
    %c0_182 = arith.constant 0 : index
    %c0_183 = arith.constant 0 : index
    %c0_184 = arith.constant 0 : index
    %256 = vector.load %arg19[%c0_182, %c0_183, %c0_184] : memref<1x128x32xbf16, #tpu.memory_space<vmem>>, vector<1x128x32xbf16>
    %257 = vector.shape_cast %256 : vector<1x128x32xbf16> to vector<128x32xbf16>
    %cst_185 = arith.constant dense<0.000000e+00> : vector<9x32xf32>
    %258 = tpu.matmul %255, %257, %cst_185 {dimension_numbers = #tpu.dot_dimension_numbers<[1], [0], [0], [1], [0, 0, 1, 1], [], []>} : vector<9x128xbf16>, vector<128x32xbf16>, vector<9x32xf32> -> vector<9x32xf32>
    %c0_186 = arith.constant 0 : index
    %c0_187 = arith.constant 0 : index
    %c0_188 = arith.constant 0 : index
    %259 = vector.load %arg20[%c0_186, %c0_187, %c0_188] : memref<1x1x32xf32, #tpu.memory_space<vmem>>, vector<1x1x32xf32>
    %260 = vector.shape_cast %259 : vector<1x1x32xf32> to vector<1x32xf32>
    %261 = vector.broadcast %260 : vector<1x32xf32> to vector<9x32xf32>
    %262 = arith.addf %258, %261 : vector<9x32xf32>
    %263 = arith.addf %212, %262 : vector<9x32xf32>
    %c0_189 = arith.constant 0 : index
    %c0_190 = arith.constant 0 : index
    %264 = vector.load %arg26[%c0_189, %c0_190] : memref<9x32xf32, #tpu.memory_space<vmem>>, vector<9x32xf32>
    tpu.vector_store %arg26[%c0_189, %c0_190], %263 {strides = array<i32>} : memref<9x32xf32, #tpu.memory_space<vmem>>, vector<9x32xf32>,
    %c1_i32 = arith.constant 1 : i32
    %265 = arith.cmpi eq, %arg1, %c1_i32 : i32
    %266 = arith.extui %265 : i1 to i32
    %c0_i32_191 = arith.constant 0 : i32
    %267 = arith.cmpi ne, %266, %c0_i32_191 : i32
    scf.if %267 {
      %268 = vector.extract_strided_slice %263 {offsets = [0, 0], sizes = [1, 32], strides = [1, 1]} : vector<9x32xf32> to vector<1x32xf32>
      %c0_192 = arith.constant 0 : index
      %c0_193 = arith.constant 0 : index
      %269 = vector.load %arg21[%c0_192, %c0_193] : memref<1x32xf32, #tpu.memory_space<vmem>>, vector<1x32xf32>
      %c0_194 = arith.constant 0 : index
      %c0_195 = arith.constant 0 : index
      %270 = vector.load %arg22[%c0_194, %c0_195] : memref<1x32xf32, #tpu.memory_space<vmem>>, vector<1x32xf32>
      %cst_196 = arith.constant dense<0.000000e+00> : vector<1xf32>
      %271 = vector.multi_reduction <add>, %268, %cst_196 [1] : vector<1x32xf32> to vector<1xf32>
      %272 = vector.shape_cast %271 : vector<1xf32> to vector<1x1xf32>
      %cst_197 = arith.constant 3.200000e+01 : f32
      %273 = vector.broadcast %cst_197 : f32 to vector<1x1xf32>
      %274 = arith.divf %272, %273 : vector<1x1xf32>
      %275 = vector.broadcast %274 : vector<1x1xf32> to vector<1x32xf32>
      %276 = arith.subf %268, %275 : vector<1x32xf32>
      %277 = arith.mulf %276, %276 : vector<1x32xf32>
      %cst_198 = arith.constant dense<0.000000e+00> : vector<1xf32>
      %278 = vector.multi_reduction <add>, %277, %cst_198 [1] : vector<1x32xf32> to vector<1xf32>
      %279 = vector.shape_cast %278 : vector<1xf32> to vector<1x1xf32>
      %cst_199 = arith.constant 3.200000e+01 : f32
      %280 = vector.broadcast %cst_199 : f32 to vector<1x1xf32>
      %281 = arith.divf %279, %280 : vector<1x1xf32>
      %282 = vector.broadcast %274 : vector<1x1xf32> to vector<1x32xf32>
      %283 = arith.subf %268, %282 : vector<1x32xf32>
      %cst_200 = arith.constant 9.99999997E-7 : f32
      %284 = vector.broadcast %cst_200 : f32 to vector<1x1xf32>
      %285 = arith.addf %281, %284 : vector<1x1xf32>
      %286 = math.rsqrt %285 : vector<1x1xf32>
      %287 = vector.broadcast %286 : vector<1x1xf32> to vector<1x32xf32>
      %288 = arith.mulf %283, %287 : vector<1x32xf32>
      %289 = arith.mulf %288, %269 : vector<1x32xf32>
      %290 = arith.addf %289, %270 : vector<1x32xf32>
      %291 = arith.truncf %290 : vector<1x32xf32> to vector<1x32xbf16>
      %c0_201 = arith.constant 0 : index
      %c0_202 = arith.constant 0 : index
      %292 = vector.load %arg23[%c0_201, %c0_202] : memref<32x10xbf16, #tpu.memory_space<vmem>>, vector<32x10xbf16>
      %cst_203 = arith.constant dense<0.000000e+00> : vector<1x10xf32>
      %293 = tpu.matmul %291, %292, %cst_203 {dimension_numbers = #tpu.dot_dimension_numbers<[1], [0], [0], [1], [0, 0, 1, 1], [], []>} : vector<1x32xbf16>, vector<32x10xbf16>, vector<1x10xf32> -> vector<1x10xf32>
      %c0_204 = arith.constant 0 : index
      %c0_205 = arith.constant 0 : index
      %294 = vector.load %arg24[%c0_204, %c0_205] : memref<1x10xf32, #tpu.memory_space<vmem>>, vector<1x10xf32>
      %295 = arith.addf %293, %294 : vector<1x10xf32>
      %c0_206 = arith.constant 0 : index
      %c0_207 = arith.constant 0 : index
      %c0_208 = arith.constant 0 : index
      %296 = vector.load %arg25[%c0_206, %c0_207, %c0_208] : memref<1x1x10xf32, #tpu.memory_space<vmem>>, vector<1x1x10xf32>
      %297 = vector.shape_cast %296 : vector<1x1x10xf32> to vector<1x10xf32>
      %298 = vector.shape_cast %295 : vector<1x10xf32> to vector<1x1x10xf32>
      tpu.vector_store %arg25[%c0_206, %c0_207, %c0_208], %298 {strides = array<i32>} : memref<1x1x10xf32, #tpu.memory_space<vmem>>, vector<1x1x10xf32>,
    } else {
    }
    return
  }
  func.func @transform_0(%arg0: i32, %arg1: i32) -> (i32, i32, i32) {
    %c0_i32 = arith.constant 0 : i32
    %c0_i32_0 = arith.constant 0 : i32
    %c0_i32_1 = arith.constant 0 : i32
    return %arg0, %c0_i32, %c0_i32_0 : i32, i32, i32
  }
  func.func @transform_1(%arg0: i32, %arg1: i32) -> (i32, i32) {
    %c0_i32 = arith.constant 0 : i32
    %c0_i32_0 = arith.constant 0 : i32
    %c0_i32_1 = arith.constant 0 : i32
    return %c0_i32, %c0_i32_0 : i32, i32
  }
  func.func @transform_2(%arg0: i32, %arg1: i32) -> (i32, i32) {
    %c0_i32 = arith.constant 0 : i32
    %c0_i32_0 = arith.constant 0 : i32
    %c0_i32_1 = arith.constant 0 : i32
    return %c0_i32, %c0_i32_0 : i32, i32
  }
  func.func @transform_3(%arg0: i32, %arg1: i32) -> (i32, i32, i32) {
    %c0_i32 = arith.constant 0 : i32
    %c0_i32_0 = arith.constant 0 : i32
    %c0_i32_1 = arith.constant 0 : i32
    return %arg1, %c0_i32, %c0_i32_0 : i32, i32, i32
  }
  func.func @transform_4(%arg0: i32, %arg1: i32) -> (i32, i32, i32) {
    %c0_i32 = arith.constant 0 : i32
    %c0_i32_0 = arith.constant 0 : i32
    %c0_i32_1 = arith.constant 0 : i32
    return %arg1, %c0_i32, %c0_i32_0 : i32, i32, i32
  }
  func.func @transform_5(%arg0: i32, %arg1: i32) -> (i32, i32, i32, i32) {
    %c0_i32 = arith.constant 0 : i32
    %c0_i32_0 = arith.constant 0 : i32
    %c0_i32_1 = arith.constant 0 : i32
    %c0_i32_2 = arith.constant 0 : i32
    return %arg1, %c0_i32, %c0_i32_0, %c0_i32_1 : i32, i32, i32, i32
  }
  func.func @transform_6(%arg0: i32, %arg1: i32) -> (i32, i32, i32, i32) {
    %c0_i32 = arith.constant 0 : i32
    %c0_i32_0 = arith.constant 0 : i32
    %c0_i32_1 = arith.constant 0 : i32
    %c0_i32_2 = arith.constant 0 : i32
    return %arg1, %c0_i32, %c0_i32_0, %c0_i32_1 : i32, i32, i32, i32
  }
  func.func @transform_7(%arg0: i32, %arg1: i32) -> (i32, i32, i32, i32) {
    %c0_i32 = arith.constant 0 : i32
    %c0_i32_0 = arith.constant 0 : i32
    %c0_i32_1 = arith.constant 0 : i32
    %c0_i32_2 = arith.constant 0 : i32
    return %arg1, %c0_i32, %c0_i32_0, %c0_i32_1 : i32, i32, i32, i32
  }
  func.func @transform_8(%arg0: i32, %arg1: i32) -> (i32, i32, i32, i32) {
    %c0_i32 = arith.constant 0 : i32
    %c0_i32_0 = arith.constant 0 : i32
    %c0_i32_1 = arith.constant 0 : i32
    %c0_i32_2 = arith.constant 0 : i32
    return %arg1, %c0_i32, %c0_i32_0, %c0_i32_1 : i32, i32, i32, i32
  }
  func.func @transform_9(%arg0: i32, %arg1: i32) -> (i32, i32, i32, i32) {
    %c0_i32 = arith.constant 0 : i32
    %c0_i32_0 = arith.constant 0 : i32
    %c0_i32_1 = arith.constant 0 : i32
    %c0_i32_2 = arith.constant 0 : i32
    return %arg1, %c0_i32, %c0_i32_0, %c0_i32_1 : i32, i32, i32, i32
  }
  func.func @transform_10(%arg0: i32, %arg1: i32) -> (i32, i32, i32, i32) {
    %c0_i32 = arith.constant 0 : i32
    %c0_i32_0 = arith.constant 0 : i32
    %c0_i32_1 = arith.constant 0 : i32
    %c0_i32_2 = arith.constant 0 : i32
    return %arg1, %c0_i32, %c0_i32_0, %c0_i32_1 : i32, i32, i32, i32
  }
  func.func @transform_11(%arg0: i32, %arg1: i32) -> (i32, i32, i32, i32) {
    %c0_i32 = arith.constant 0 : i32
    %c0_i32_0 = arith.constant 0 : i32
    %c0_i32_1 = arith.constant 0 : i32
    %c0_i32_2 = arith.constant 0 : i32
    return %arg1, %c0_i32, %c0_i32_0, %c0_i32_1 : i32, i32, i32, i32
  }
  func.func @transform_12(%arg0: i32, %arg1: i32) -> (i32, i32, i32) {
    %c0_i32 = arith.constant 0 : i32
    %c0_i32_0 = arith.constant 0 : i32
    %c0_i32_1 = arith.constant 0 : i32
    return %arg1, %c0_i32, %c0_i32_0 : i32, i32, i32
  }
  func.func @transform_13(%arg0: i32, %arg1: i32) -> (i32, i32, i32) {
    %c0_i32 = arith.constant 0 : i32
    %c0_i32_0 = arith.constant 0 : i32
    %c0_i32_1 = arith.constant 0 : i32
    return %arg1, %c0_i32, %c0_i32_0 : i32, i32, i32
  }
  func.func @transform_14(%arg0: i32, %arg1: i32) -> (i32, i32, i32) {
    %c0_i32 = arith.constant 0 : i32
    %c0_i32_0 = arith.constant 0 : i32
    %c0_i32_1 = arith.constant 0 : i32
    return %arg1, %c0_i32, %c0_i32_0 : i32, i32, i32
  }
  func.func @transform_15(%arg0: i32, %arg1: i32) -> (i32, i32, i32) {
    %c0_i32 = arith.constant 0 : i32
    %c0_i32_0 = arith.constant 0 : i32
    %c0_i32_1 = arith.constant 0 : i32
    return %arg1, %c0_i32, %c0_i32_0 : i32, i32, i32
  }
  func.func @transform_16(%arg0: i32, %arg1: i32) -> (i32, i32, i32) {
    %c0_i32 = arith.constant 0 : i32
    %c0_i32_0 = arith.constant 0 : i32
    %c0_i32_1 = arith.constant 0 : i32
    return %arg1, %c0_i32, %c0_i32_0 : i32, i32, i32
  }
  func.func @transform_17(%arg0: i32, %arg1: i32) -> (i32, i32, i32) {
    %c0_i32 = arith.constant 0 : i32
    %c0_i32_0 = arith.constant 0 : i32
    %c0_i32_1 = arith.constant 0 : i32
    return %arg1, %c0_i32, %c0_i32_0 : i32, i32, i32
  }
  func.func @transform_18(%arg0: i32, %arg1: i32) -> (i32, i32, i32) {
    %c0_i32 = arith.constant 0 : i32
    %c0_i32_0 = arith.constant 0 : i32
    %c0_i32_1 = arith.constant 0 : i32
    return %arg1, %c0_i32, %c0_i32_0 : i32, i32, i32
  }
  func.func @transform_19(%arg0: i32, %arg1: i32) -> (i32, i32) {
    %c0_i32 = arith.constant 0 : i32
    %c0_i32_0 = arith.constant 0 : i32
    %c0_i32_1 = arith.constant 0 : i32
    return %c0_i32, %c0_i32_0 : i32, i32
  }
  func.func @transform_20(%arg0: i32, %arg1: i32) -> (i32, i32) {
    %c0_i32 = arith.constant 0 : i32
    %c0_i32_0 = arith.constant 0 : i32
    %c0_i32_1 = arith.constant 0 : i32
    return %c0_i32, %c0_i32_0 : i32, i32
  }
  func.func @transform_21(%arg0: i32, %arg1: i32) -> (i32, i32) {
    %c0_i32 = arith.constant 0 : i32
    %c0_i32_0 = arith.constant 0 : i32
    %c0_i32_1 = arith.constant 0 : i32
    return %c0_i32, %c0_i32_0 : i32, i32
  }
  func.func @transform_22(%arg0: i32, %arg1: i32) -> (i32, i32) {
    %c0_i32 = arith.constant 0 : i32
    %c0_i32_0 = arith.constant 0 : i32
    %c0_i32_1 = arith.constant 0 : i32
    return %c0_i32, %c0_i32_0 : i32, i32
  }
  func.func @transform_23(%arg0: i32, %arg1: i32) -> (i32, i32, i32) {
    %c0_i32 = arith.constant 0 : i32
    %c0_i32_0 = arith.constant 0 : i32
    %c0_i32_1 = arith.constant 0 : i32
    return %arg0, %c0_i32, %c0_i32_0 : i32, i32, i32
  }
}

</mosaic_0001>

<llo_original>
// kernel: tpu_custom_call.1
$region0: #{tpu_custom_call.1}
  #allocation0 [shape = 'u32[]', space=smem, size = 0x4, offset = 0x4, fixed_abs, tag = 'smem constant byte address 0x4 - core index']
  #allocation1 [shape = 'u32[144,128]{1,0:T(1,128)}', space=vmem, size = 0x12000, scoped, tag = 'internal scratch']
  #allocation2 [shape = 'f32[9,32]{1,0:T(8,128)}', space=vmem, size = 0x2000, scoped, tag = 'scratch operand']
  %s0 = inlined_call_operand.vmem [shape: bf16[2,9,512], index: 0, kind: input, shape index: {}]
  %s1 = inlined_call_operand.vmem [shape: bf16[512,32], index: 1, kind: input, shape index: {}]
  %s2 = inlined_call_operand.vmem [shape: f32[9,32], index: 2, kind: input, shape index: {}]
  %s3 = inlined_call_operand.vmem [shape: f32[2,1,32], index: 3, kind: input, shape index: {}]
  %s4 = inlined_call_operand.vmem [shape: f32[2,1,32], index: 4, kind: input, shape index: {}]
  %s5 = inlined_call_operand.vmem [shape: bf16[2,4,32,8], index: 5, kind: input, shape index: {}]
  %s6 = inlined_call_operand.vmem [shape: bf16[2,4,32,8], index: 6, kind: input, shape index: {}]
  %s7 = inlined_call_operand.vmem [shape: bf16[2,4,32,8], index: 7, kind: input, shape index: {}]
  %s8 = inlined_call_operand.vmem [shape: f32[2,4,1,8], index: 8, kind: input, shape index: {}]
  %s9 = inlined_call_operand.vmem [shape: f32[2,4,1,8], index: 9, kind: input, shape index: {}]
  %s10 = inlined_call_operand.vmem [shape: f32[2,4,1,8], index: 10, kind: input, shape index: {}]
  %s11 = inlined_call_operand.vmem [shape: bf16[2,4,8,32], index: 11, kind: input, shape index: {}]
  %s12 = inlined_call_operand.vmem [shape: f32[2,1,32], index: 12, kind: input, shape index: {}]
  %s13 = inlined_call_operand.vmem [shape: f32[2,1,32], index: 13, kind: input, shape index: {}]
  %s14 = inlined_call_operand.vmem [shape: f32[2,1,32], index: 14, kind: input, shape index: {}]
  %s15 = inlined_call_operand.vmem [shape: bf16[2,32,128], index: 15, kind: input, shape index: {}]
  %s16 = inlined_call_operand.vmem [shape: f32[2,1,128], index: 16, kind: input, shape index: {}]
  %s17 = inlined_call_operand.vmem [shape: bf16[2,128,32], index: 17, kind: input, shape index: {}]
  %s18 = inlined_call_operand.vmem [shape: f32[2,1,32], index: 18, kind: input, shape index: {}]
  %s19 = inlined_call_operand.vmem [shape: f32[1,32], index: 19, kind: input, shape index: {}]
  %s20 = inlined_call_operand.vmem [shape: f32[1,32], index: 20, kind: input, shape index: {}]
  %s21 = inlined_call_operand.vmem [shape: bf16[32,10], index: 21, kind: input, shape index: {}]
  %s22 = inlined_call_operand.vmem [shape: f32[1,10], index: 22, kind: input, shape index: {}]
  %s23 = inlined_call_operand.hbm [shape: f32[2,1,10], index: 23, kind: output, shape index: {}]
  %s24 = sld [smem:[#allocation0]]
  $region133: #{tpu_custom_call.1} parent=0
    _
  %s26 = ssub.s32 1, %s24
  %s27 = scalar_select 0, %s26, %s24
  $region1: #{tpu_custom_call.1} parent=0
    #allocation3 [shape = 'u8[1024]{0}', space=vmem, size = 0x400, scoped, tag = 'output window, operand 0']
    #allocation4 [shape = 's32[2]{0}', space=sflag, size = 0x8, scoped, tag = 'scoped memory for tpu_custom_call.1']
    %28 = vsyncpa [#allocation4], 0
    %s29 = scalar_lea.sflag [#allocation4], 1
    %30 = vsyncpa %s29, 0
    loop: start=0, step=1, limit=6
    $region2: #{tpu_custom_call.1} parent=1 // loop_pre_header
      _
    $region3: #{tpu_custom_call.1} parent=1 // loop_header
      %s32 = sphi 0, %s36
      %p33 = scmp.ge.s32.totalorder %s32, 6
      %s39 = sphi 0, %s51
      %s40 = sphi 0, %s47
      %s41 = sphi 0, %s39
      %s42 = sphi 0, %s40
      %s43 = sphi 0, %s41
      %s44 = sphi 0, %s42
      %s54 = sphi 0, %s56
      %s57 = sphi 0, %s54
      %s58 = sphi 0, %s57
      %s74 = sphi 0, %s58
      %s78 = sphi 0, %s78
      %s80 = sphi 0, %s78
      %s81 = sphi 0, %s80
      %s95 = sphi 0, %s81
      %s99 = sphi 0, %s99
      %s101 = sphi 0, %s99
      %s102 = sphi 0, %s101
      %s116 = sphi 0, %s102
      %s122 = sphi 0, %s124
      %s125 = sphi 0, %s122
      %s126 = sphi 0, %s125
      %s142 = sphi 0, %s126
      %s148 = sphi 0, %s150
      %s151 = sphi 0, %s148
      %s152 = sphi 0, %s151
      %s168 = sphi 0, %s152
      %s174 = sphi 0, %s176
      %s177 = sphi 0, %s174
      %s178 = sphi 0, %s177
      %s194 = sphi 0, %s178
      %s200 = sphi 0, %s202
      %s203 = sphi 0, %s200
      %s204 = sphi 0, %s203
      %s220 = sphi 0, %s204
      %s226 = sphi 0, %s228
      %s229 = sphi 0, %s226
      %s230 = sphi 0, %s229
      %s246 = sphi 0, %s230
      %s252 = sphi 0, %s254
      %s255 = sphi 0, %s252
      %s256 = sphi 0, %s255
      %s272 = sphi 0, %s256
      %s278 = sphi 0, %s280
      %s281 = sphi 0, %s278
      %s282 = sphi 0, %s281
      %s298 = sphi 0, %s282
      %s304 = sphi 0, %s306
      %s307 = sphi 0, %s304
      %s308 = sphi 0, %s307
      %s324 = sphi 0, %s308
      %s330 = sphi 0, %s332
      %s333 = sphi 0, %s330
      %s334 = sphi 0, %s333
      %s350 = sphi 0, %s334
      %s356 = sphi 0, %s358
      %s359 = sphi 0, %s356
      %s360 = sphi 0, %s359
      %s376 = sphi 0, %s360
      %s382 = sphi 0, %s384
      %s385 = sphi 0, %s382
      %s386 = sphi 0, %s385
      %s402 = sphi 0, %s386
      %s408 = sphi 0, %s410
      %s411 = sphi 0, %s408
      %s412 = sphi 0, %s411
      %s428 = sphi 0, %s412
      %s434 = sphi 0, %s436
      %s437 = sphi 0, %s434
      %s438 = sphi 0, %s437
      %s454 = sphi 0, %s438
      %s460 = sphi 0, %s462
      %s463 = sphi 0, %s460
      %s464 = sphi 0, %s463
      %s480 = sphi 0, %s464
      %s486 = sphi 0, %s488
      %s489 = sphi 0, %s486
      %s490 = sphi 0, %s489
      %s506 = sphi 0, %s490
      %s512 = sphi 0, %s514
      %s515 = sphi 0, %s512
      %s516 = sphi 0, %s515
      %s532 = sphi 0, %s516
      %s536 = sphi 0, %s536
      %s538 = sphi 0, %s536
      %s539 = sphi 0, %s538
      %s553 = sphi 0, %s539
      %s557 = sphi 0, %s557
      %s559 = sphi 0, %s557
      %s560 = sphi 0, %s559
      %s574 = sphi 0, %s560
      %s578 = sphi 0, %s578
      %s580 = sphi 0, %s578
      %s581 = sphi 0, %s580
      %s595 = sphi 0, %s581
      %s599 = sphi 0, %s599
      %s601 = sphi 0, %s599
      %s602 = sphi 0, %s601
      %s616 = sphi 0, %s602
      %s622 = sphi 0, %s624
      %s625 = sphi 0, %s622
      %s626 = sphi 0, %s625
      %s642 = sphi 0, %s626
    $region4: #{tpu_custom_call.1} parent=1 // loop_header_branch
      %35 = sbr.rel (%p33) target = $region8
    $region5: #{tpu_custom_call.1} parent=1 // loop_body
      %s37 = ssub.s32 %s32, 1
      %s38 = ssub.s32 %s32, 2
      %s45 = sadd.s32 1, %s40
      %p46 = scmp.ge.s32.totalorder %s45, 2
      %s47 = scalar_select %p46, 0, %s45
      %s48 = sadd.s32 1, %s39
      %s49 = scalar_select %p46, %s48, %s39
      %p50 = scmp.ge.s32.totalorder %s49, 2
      %s51 = scalar_select %p50, 0, %s49
      %s52 = ssub.s32 %s39, %s51
      %p53 = scmp.eq.s32.totalorder %s52, 0
      %s55 = sadd.s32 %s54, 1
      %s56 = scalar_select %p53, %s54, %s55
      %p59 = pneg %p53
      %p60 = scmp.eq.s32.totalorder %s32, 3
      %p61 = por %p59, %p60
      %p62 = scmp.ne.s32.totalorder %s54, %s57
      %p63 = scmp.eq.s32.totalorder %s32, 0
      %p64 = por %p62, %p63
      %p65 = scmp.ne.s32.totalorder %s54, %s57
      %p66 = scmp.eq.s32.totalorder %s37, 3
      %p67 = por %p65, %p66
      %p68 = scmp.ne.s32.totalorder %s57, %s58
      %p69 = scmp.eq.s32.totalorder %s37, 0
      %p70 = por %p68, %p69
      %p71 = scmp.ne.s32.totalorder %s57, %s58
      %p72 = scmp.eq.s32.totalorder %s38, 3
      %p73 = por %p71, %p72
      %p75 = scmp.ne.s32.totalorder %s58, %s74
      %p76 = scmp.eq.s32.totalorder %s38, 0
      %p77 = por %p75, %p76
      %s79 = sadd.s32 %s78, 1
      %p82 = scmp.eq.s32.totalorder %s32, 3
      %p83 = scmp.ne.s32.totalorder %s78, %s80
      %p84 = scmp.eq.s32.totalorder %s32, 0
      %p85 = por %p83, %p84
      %p86 = scmp.ne.s32.totalorder %s78, %s80
      %p87 = scmp.eq.s32.totalorder %s37, 3
      %p88 = por %p86, %p87
      %p89 = scmp.ne.s32.totalorder %s80, %s81
      %p90 = scmp.eq.s32.totalorder %s37, 0
      %p91 = por %p89, %p90
      %p92 = scmp.ne.s32.totalorder %s80, %s81
      %p93 = scmp.eq.s32.totalorder %s38, 3
      %p94 = por %p92, %p93
      %p96 = scmp.ne.s32.totalorder %s81, %s95
      %p97 = scmp.eq.s32.totalorder %s38, 0
      %p98 = por %p96, %p97
      %s100 = sadd.s32 %s99, 1
      %p103 = scmp.eq.s32.totalorder %s32, 3
      %p104 = scmp.ne.s32.totalorder %s99, %s101
      %p105 = scmp.eq.s32.totalorder %s32, 0
      %p106 = por %p104, %p105
      %p107 = scmp.ne.s32.totalorder %s99, %s101
      %p108 = scmp.eq.s32.totalorder %s37, 3
      %p109 = por %p107, %p108
      %p110 = scmp.ne.s32.totalorder %s101, %s102
      %p111 = scmp.eq.s32.totalorder %s37, 0
      %p112 = por %p110, %p111
      %p113 = scmp.ne.s32.totalorder %s101, %s102
      %p114 = scmp.eq.s32.totalorder %s38, 3
      %p115 = por %p113, %p114
      %p117 = scmp.ne.s32.totalorder %s102, %s116
      %p118 = scmp.eq.s32.totalorder %s38, 0
      %p119 = por %p117, %p118
      %s120 = ssub.s32 %s40, %s47
      %p121 = scmp.eq.s32.totalorder %s120, 0
      %s123 = sadd.s32 %s122, 1
      %s124 = scalar_select %p121, %s122, %s123
      %p127 = pneg %p121
      %p128 = scmp.eq.s32.totalorder %s32, 3
      %p129 = por %p127, %p128
      %p130 = scmp.ne.s32.totalorder %s122, %s125
      %p131 = scmp.eq.s32.totalorder %s32, 0
      %p132 = por %p130, %p131
      %p133 = scmp.ne.s32.totalorder %s122, %s125
      %p134 = scmp.eq.s32.totalorder %s37, 3
      %p135 = por %p133, %p134
      %p136 = scmp.ne.s32.totalorder %s125, %s126
      %p137 = scmp.eq.s32.totalorder %s37, 0
      %p138 = por %p136, %p137
      %p139 = scmp.ne.s32.totalorder %s125, %s126
      %p140 = scmp.eq.s32.totalorder %s38, 3
      %p141 = por %p139, %p140
      %p143 = scmp.ne.s32.totalorder %s126, %s142
      %p144 = scmp.eq.s32.totalorder %s38, 0
      %p145 = por %p143, %p144
      %s146 = ssub.s32 %s40, %s47
      %p147 = scmp.eq.s32.totalorder %s146, 0
      %s149 = sadd.s32 %s148, 1
      %s150 = scalar_select %p147, %s148, %s149
      %p153 = pneg %p147
      %p154 = scmp.eq.s32.totalorder %s32, 3
      %p155 = por %p153, %p154
      %p156 = scmp.ne.s32.totalorder %s148, %s151
      %p157 = scmp.eq.s32.totalorder %s32, 0
      %p158 = por %p156, %p157
      %p159 = scmp.ne.s32.totalorder %s148, %s151
      %p160 = scmp.eq.s32.totalorder %s37, 3
      %p161 = por %p159, %p160
      %p162 = scmp.ne.s32.totalorder %s151, %s152
      %p163 = scmp.eq.s32.totalorder %s37, 0
      %p164 = por %p162, %p163
      %p165 = scmp.ne.s32.totalorder %s151, %s152
      %p166 = scmp.eq.s32.totalorder %s38, 3
      %p167 = por %p165, %p166
      %p169 = scmp.ne.s32.totalorder %s152, %s168
      %p170 = scmp.eq.s32.totalorder %s38, 0
      %p171 = por %p169, %p170
      %s172 = ssub.s32 %s40, %s47
      %p173 = scmp.eq.s32.totalorder %s172, 0
      %s175 = sadd.s32 %s174, 1
      %s176 = scalar_select %p173, %s174, %s175
      %p179 = pneg %p173
      %p180 = scmp.eq.s32.totalorder %s32, 3
      %p181 = por %p179, %p180
      %p182 = scmp.ne.s32.totalorder %s174, %s177
      %p183 = scmp.eq.s32.totalorder %s32, 0
      %p184 = por %p182, %p183
      %p185 = scmp.ne.s32.totalorder %s174, %s177
      %p186 = scmp.eq.s32.totalorder %s37, 3
      %p187 = por %p185, %p186
      %p188 = scmp.ne.s32.totalorder %s177, %s178
      %p189 = scmp.eq.s32.totalorder %s37, 0
      %p190 = por %p188, %p189
      %p191 = scmp.ne.s32.totalorder %s177, %s178
      %p192 = scmp.eq.s32.totalorder %s38, 3
      %p193 = por %p191, %p192
      %p195 = scmp.ne.s32.totalorder %s178, %s194
      %p196 = scmp.eq.s32.totalorder %s38, 0
      %p197 = por %p195, %p196
      %s198 = ssub.s32 %s40, %s47
      %p199 = scmp.eq.s32.totalorder %s198, 0
      %s201 = sadd.s32 %s200, 1
      %s202 = scalar_select %p199, %s200, %s201
      %p205 = pneg %p199
      %p206 = scmp.eq.s32.totalorder %s32, 3
      %p207 = por %p205, %p206
      %p208 = scmp.ne.s32.totalorder %s200, %s203
      %p209 = scmp.eq.s32.totalorder %s32, 0
      %p210 = por %p208, %p209
      %p211 = scmp.ne.s32.totalorder %s200, %s203
      %p212 = scmp.eq.s32.totalorder %s37, 3
      %p213 = por %p211, %p212
      %p214 = scmp.ne.s32.totalorder %s203, %s204
      %p215 = scmp.eq.s32.totalorder %s37, 0
      %p216 = por %p214, %p215
      %p217 = scmp.ne.s32.totalorder %s203, %s204
      %p218 = scmp.eq.s32.totalorder %s38, 3
      %p219 = por %p217, %p218
      %p221 = scmp.ne.s32.totalorder %s204, %s220
      %p222 = scmp.eq.s32.totalorder %s38, 0
      %p223 = por %p221, %p222
      %s224 = ssub.s32 %s40, %s47
      %p225 = scmp.eq.s32.totalorder %s224, 0
      %s227 = sadd.s32 %s226, 1
      %s228 = scalar_select %p225, %s226, %s227
      %p231 = pneg %p225
      %p232 = scmp.eq.s32.totalorder %s32, 3
      %p233 = por %p231, %p232
      %p234 = scmp.ne.s32.totalorder %s226, %s229
      %p235 = scmp.eq.s32.totalorder %s32, 0
      %p236 = por %p234, %p235
      %p237 = scmp.ne.s32.totalorder %s226, %s229
      %p238 = scmp.eq.s32.totalorder %s37, 3
      %p239 = por %p237, %p238
      %p240 = scmp.ne.s32.totalorder %s229, %s230
      %p241 = scmp.eq.s32.totalorder %s37, 0
      %p242 = por %p240, %p241
      %p243 = scmp.ne.s32.totalorder %s229, %s230
      %p244 = scmp.eq.s32.totalorder %s38, 3
      %p245 = por %p243, %p244
      %p247 = scmp.ne.s32.totalorder %s230, %s246
      %p248 = scmp.eq.s32.totalorder %s38, 0
      %p249 = por %p247, %p248
      %s250 = ssub.s32 %s40, %s47
      %p251 = scmp.eq.s32.totalorder %s250, 0
      %s253 = sadd.s32 %s252, 1
      %s254 = scalar_select %p251, %s252, %s253
      %p257 = pneg %p251
      %p258 = scmp.eq.s32.totalorder %s32, 3
      %p259 = por %p257, %p258
      %p260 = scmp.ne.s32.totalorder %s252, %s255
      %p261 = scmp.eq.s32.totalorder %s32, 0
      %p262 = por %p260, %p261
      %p263 = scmp.ne.s32.totalorder %s252, %s255
      %p264 = scmp.eq.s32.totalorder %s37, 3
      %p265 = por %p263, %p264
      %p266 = scmp.ne.s32.totalorder %s255, %s256
      %p267 = scmp.eq.s32.totalorder %s37, 0
      %p268 = por %p266, %p267
      %p269 = scmp.ne.s32.totalorder %s255, %s256
      %p270 = scmp.eq.s32.totalorder %s38, 3
      %p271 = por %p269, %p270
      %p273 = scmp.ne.s32.totalorder %s256, %s272
      %p274 = scmp.eq.s32.totalorder %s38, 0
      %p275 = por %p273, %p274
      %s276 = ssub.s32 %s40, %s47
      %p277 = scmp.eq.s32.totalorder %s276, 0
      %s279 = sadd.s32 %s278, 1
      %s280 = scalar_select %p277, %s278, %s279
      %p283 = pneg %p277
      %p284 = scmp.eq.s32.totalorder %s32, 3
      %p285 = por %p283, %p284
      %p286 = scmp.ne.s32.totalorder %s278, %s281
      %p287 = scmp.eq.s32.totalorder %s32, 0
      %p288 = por %p286, %p287
      %p289 = scmp.ne.s32.totalorder %s278, %s281
      %p290 = scmp.eq.s32.totalorder %s37, 3
      %p291 = por %p289, %p290
      %p292 = scmp.ne.s32.totalorder %s281, %s282
      %p293 = scmp.eq.s32.totalorder %s37, 0
      %p294 = por %p292, %p293
      %p295 = scmp.ne.s32.totalorder %s281, %s282
      %p296 = scmp.eq.s32.totalorder %s38, 3
      %p297 = por %p295, %p296
      %p299 = scmp.ne.s32.totalorder %s282, %s298
      %p300 = scmp.eq.s32.totalorder %s38, 0
      %p301 = por %p299, %p300
      %s302 = ssub.s32 %s40, %s47
      %p303 = scmp.eq.s32.totalorder %s302, 0
      %s305 = sadd.s32 %s304, 1
      %s306 = scalar_select %p303, %s304, %s305
      %p309 = pneg %p303
      %p310 = scmp.eq.s32.totalorder %s32, 3
      %p311 = por %p309, %p310
      %p312 = scmp.ne.s32.totalorder %s304, %s307
      %p313 = scmp.eq.s32.totalorder %s32, 0
      %p314 = por %p312, %p313
      %p315 = scmp.ne.s32.totalorder %s304, %s307
      %p316 = scmp.eq.s32.totalorder %s37, 3
      %p317 = por %p315, %p316
      %p318 = scmp.ne.s32.totalorder %s307, %s308
      %p319 = scmp.eq.s32.totalorder %s37, 0
      %p320 = por %p318, %p319
      %p321 = scmp.ne.s32.totalorder %s307, %s308
      %p322 = scmp.eq.s32.totalorder %s38, 3
      %p323 = por %p321, %p322
      %p325 = scmp.ne.s32.totalorder %s308, %s324
      %p326 = scmp.eq.s32.totalorder %s38, 0
      %p327 = por %p325, %p326
      %s328 = ssub.s32 %s40, %s47
      %p329 = scmp.eq.s32.totalorder %s328, 0
      %s331 = sadd.s32 %s330, 1
      %s332 = scalar_select %p329, %s330, %s331
      %p335 = pneg %p329
      %p336 = scmp.eq.s32.totalorder %s32, 3
      %p337 = por %p335, %p336
      %p338 = scmp.ne.s32.totalorder %s330, %s333
      %p339 = scmp.eq.s32.totalorder %s32, 0
      %p340 = por %p338, %p339
      %p341 = scmp.ne.s32.totalorder %s330, %s333
      %p342 = scmp.eq.s32.totalorder %s37, 3
      %p343 = por %p341, %p342
      %p344 = scmp.ne.s32.totalorder %s333, %s334
      %p345 = scmp.eq.s32.totalorder %s37, 0
      %p346 = por %p344, %p345
      %p347 = scmp.ne.s32.totalorder %s333, %s334
      %p348 = scmp.eq.s32.totalorder %s38, 3
      %p349 = por %p347, %p348
      %p351 = scmp.ne.s32.totalorder %s334, %s350
      %p352 = scmp.eq.s32.totalorder %s38, 0
      %p353 = por %p351, %p352
      %s354 = ssub.s32 %s40, %s47
      %p355 = scmp.eq.s32.totalorder %s354, 0
      %s357 = sadd.s32 %s356, 1
      %s358 = scalar_select %p355, %s356, %s357
      %p361 = pneg %p355
      %p362 = scmp.eq.s32.totalorder %s32, 3
      %p363 = por %p361, %p362
      %p364 = scmp.ne.s32.totalorder %s356, %s359
      %p365 = scmp.eq.s32.totalorder %s32, 0
      %p366 = por %p364, %p365
      %p367 = scmp.ne.s32.totalorder %s356, %s359
      %p368 = scmp.eq.s32.totalorder %s37, 3
      %p369 = por %p367, %p368
      %p370 = scmp.ne.s32.totalorder %s359, %s360
      %p371 = scmp.eq.s32.totalorder %s37, 0
      %p372 = por %p370, %p371
      %p373 = scmp.ne.s32.totalorder %s359, %s360
      %p374 = scmp.eq.s32.totalorder %s38, 3
      %p375 = por %p373, %p374
      %p377 = scmp.ne.s32.totalorder %s360, %s376
      %p378 = scmp.eq.s32.totalorder %s38, 0
      %p379 = por %p377, %p378
      %s380 = ssub.s32 %s40, %s47
      %p381 = scmp.eq.s32.totalorder %s380, 0
      %s383 = sadd.s32 %s382, 1
      %s384 = scalar_select %p381, %s382, %s383
      %p387 = pneg %p381
      %p388 = scmp.eq.s32.totalorder %s32, 3
      %p389 = por %p387, %p388
      %p390 = scmp.ne.s32.totalorder %s382, %s385
      %p391 = scmp.eq.s32.totalorder %s32, 0
      %p392 = por %p390, %p391
      %p393 = scmp.ne.s32.totalorder %s382, %s385
      %p394 = scmp.eq.s32.totalorder %s37, 3
      %p395 = por %p393, %p394
      %p396 = scmp.ne.s32.totalorder %s385, %s386
      %p397 = scmp.eq.s32.totalorder %s37, 0
      %p398 = por %p396, %p397
      %p399 = scmp.ne.s32.totalorder %s385, %s386
      %p400 = scmp.eq.s32.totalorder %s38, 3
      %p401 = por %p399, %p400
      %p403 = scmp.ne.s32.totalorder %s386, %s402
      %p404 = scmp.eq.s32.totalorder %s38, 0
      %p405 = por %p403, %p404
      %s406 = ssub.s32 %s40, %s47
      %p407 = scmp.eq.s32.totalorder %s406, 0
      %s409 = sadd.s32 %s408, 1
      %s410 = scalar_select %p407, %s408, %s409
      %p413 = pneg %p407
      %p414 = scmp.eq.s32.totalorder %s32, 3
      %p415 = por %p413, %p414
      %p416 = scmp.ne.s32.totalorder %s408, %s411
      %p417 = scmp.eq.s32.totalorder %s32, 0
      %p418 = por %p416, %p417
      %p419 = scmp.ne.s32.totalorder %s408, %s411
      %p420 = scmp.eq.s32.totalorder %s37, 3
      %p421 = por %p419, %p420
      %p422 = scmp.ne.s32.totalorder %s411, %s412
      %p423 = scmp.eq.s32.totalorder %s37, 0
      %p424 = por %p422, %p423
      %p425 = scmp.ne.s32.totalorder %s411, %s412
      %p426 = scmp.eq.s32.totalorder %s38, 3
      %p427 = por %p425, %p426
      %p429 = scmp.ne.s32.totalorder %s412, %s428
      %p430 = scmp.eq.s32.totalorder %s38, 0
      %p431 = por %p429, %p430
      %s432 = ssub.s32 %s40, %s47
      %p433 = scmp.eq.s32.totalorder %s432, 0
      %s435 = sadd.s32 %s434, 1
      %s436 = scalar_select %p433, %s434, %s435
      %p439 = pneg %p433
      %p440 = scmp.eq.s32.totalorder %s32, 3
      %p441 = por %p439, %p440
      %p442 = scmp.ne.s32.totalorder %s434, %s437
      %p443 = scmp.eq.s32.totalorder %s32, 0
      %p444 = por %p442, %p443
      %p445 = scmp.ne.s32.totalorder %s434, %s437
      %p446 = scmp.eq.s32.totalorder %s37, 3
      %p447 = por %p445, %p446
      %p448 = scmp.ne.s32.totalorder %s437, %s438
      %p449 = scmp.eq.s32.totalorder %s37, 0
      %p450 = por %p448, %p449
      %p451 = scmp.ne.s32.totalorder %s437, %s438
      %p452 = scmp.eq.s32.totalorder %s38, 3
      %p453 = por %p451, %p452
      %p455 = scmp.ne.s32.totalorder %s438, %s454
      %p456 = scmp.eq.s32.totalorder %s38, 0
      %p457 = por %p455, %p456
      %s458 = ssub.s32 %s40, %s47
      %p459 = scmp.eq.s32.totalorder %s458, 0
      %s461 = sadd.s32 %s460, 1
      %s462 = scalar_select %p459, %s460, %s461
      %p465 = pneg %p459
      %p466 = scmp.eq.s32.totalorder %s32, 3
      %p467 = por %p465, %p466
      %p468 = scmp.ne.s32.totalorder %s460, %s463
      %p469 = scmp.eq.s32.totalorder %s32, 0
      %p470 = por %p468, %p469
      %p471 = scmp.ne.s32.totalorder %s460, %s463
      %p472 = scmp.eq.s32.totalorder %s37, 3
      %p473 = por %p471, %p472
      %p474 = scmp.ne.s32.totalorder %s463, %s464
      %p475 = scmp.eq.s32.totalorder %s37, 0
      %p476 = por %p474, %p475
      %p477 = scmp.ne.s32.totalorder %s463, %s464
      %p478 = scmp.eq.s32.totalorder %s38, 3
      %p479 = por %p477, %p478
      %p481 = scmp.ne.s32.totalorder %s464, %s480
      %p482 = scmp.eq.s32.totalorder %s38, 0
      %p483 = por %p481, %p482
      %s484 = ssub.s32 %s40, %s47
      %p485 = scmp.eq.s32.totalorder %s484, 0
      %s487 = sadd.s32 %s486, 1
      %s488 = scalar_select %p485, %s486, %s487
      %p491 = pneg %p485
      %p492 = scmp.eq.s32.totalorder %s32, 3
      %p493 = por %p491, %p492
      %p494 = scmp.ne.s32.totalorder %s486, %s489
      %p495 = scmp.eq.s32.totalorder %s32, 0
      %p496 = por %p494, %p495
      %p497 = scmp.ne.s32.totalorder %s486, %s489
      %p498 = scmp.eq.s32.totalorder %s37, 3
      %p499 = por %p497, %p498
      %p500 = scmp.ne.s32.totalorder %s489, %s490
      %p501 = scmp.eq.s32.totalorder %s37, 0
      %p502 = por %p500, %p501
      %p503 = scmp.ne.s32.totalorder %s489, %s490
      %p504 = scmp.eq.s32.totalorder %s38, 3
      %p505 = por %p503, %p504
      %p507 = scmp.ne.s32.totalorder %s490, %s506
      %p508 = scmp.eq.s32.totalorder %s38, 0
      %p509 = por %p507, %p508
      %s510 = ssub.s32 %s40, %s47
      %p511 = scmp.eq.s32.totalorder %s510, 0
      %s513 = sadd.s32 %s512, 1
      %s514 = scalar_select %p511, %s512, %s513
      %p517 = pneg %p511
      %p518 = scmp.eq.s32.totalorder %s32, 3
      %p519 = por %p517, %p518
      %p520 = scmp.ne.s32.totalorder %s512, %s515
      %p521 = scmp.eq.s32.totalorder %s32, 0
      %p522 = por %p520, %p521
      %p523 = scmp.ne.s32.totalorder %s512, %s515
      %p524 = scmp.eq.s32.totalorder %s37, 3
      %p525 = por %p523, %p524
      %p526 = scmp.ne.s32.totalorder %s515, %s516
      %p527 = scmp.eq.s32.totalorder %s37, 0
      %p528 = por %p526, %p527
      %p529 = scmp.ne.s32.totalorder %s515, %s516
      %p530 = scmp.eq.s32.totalorder %s38, 3
      %p531 = por %p529, %p530
      %p533 = scmp.ne.s32.totalorder %s516, %s532
      %p534 = scmp.eq.s32.totalorder %s38, 0
      %p535 = por %p533, %p534
      %s537 = sadd.s32 %s536, 1
      %p540 = scmp.eq.s32.totalorder %s32, 3
      %p541 = scmp.ne.s32.totalorder %s536, %s538
      %p542 = scmp.eq.s32.totalorder %s32, 0
      %p543 = por %p541, %p542
      %p544 = scmp.ne.s32.totalorder %s536, %s538
      %p545 = scmp.eq.s32.totalorder %s37, 3
      %p546 = por %p544, %p545
      %p547 = scmp.ne.s32.totalorder %s538, %s539
      %p548 = scmp.eq.s32.totalorder %s37, 0
      %p549 = por %p547, %p548
      %p550 = scmp.ne.s32.totalorder %s538, %s539
      %p551 = scmp.eq.s32.totalorder %s38, 3
      %p552 = por %p550, %p551
      %p554 = scmp.ne.s32.totalorder %s539, %s553
      %p555 = scmp.eq.s32.totalorder %s38, 0
      %p556 = por %p554, %p555
      %s558 = sadd.s32 %s557, 1
      %p561 = scmp.eq.s32.totalorder %s32, 3
      %p562 = scmp.ne.s32.totalorder %s557, %s559
      %p563 = scmp.eq.s32.totalorder %s32, 0
      %p564 = por %p562, %p563
      %p565 = scmp.ne.s32.totalorder %s557, %s559
      %p566 = scmp.eq.s32.totalorder %s37, 3
      %p567 = por %p565, %p566
      %p568 = scmp.ne.s32.totalorder %s559, %s560
      %p569 = scmp.eq.s32.totalorder %s37, 0
      %p570 = por %p568, %p569
      %p571 = scmp.ne.s32.totalorder %s559, %s560
      %p572 = scmp.eq.s32.totalorder %s38, 3
      %p573 = por %p571, %p572
      %p575 = scmp.ne.s32.totalorder %s560, %s574
      %p576 = scmp.eq.s32.totalorder %s38, 0
      %p577 = por %p575, %p576
      %s579 = sadd.s32 %s578, 1
      %p582 = scmp.eq.s32.totalorder %s32, 3
      %p583 = scmp.ne.s32.totalorder %s578, %s580
      %p584 = scmp.eq.s32.totalorder %s32, 0
      %p585 = por %p583, %p584
      %p586 = scmp.ne.s32.totalorder %s578, %s580
      %p587 = scmp.eq.s32.totalorder %s37, 3
      %p588 = por %p586, %p587
      %p589 = scmp.ne.s32.totalorder %s580, %s581
      %p590 = scmp.eq.s32.totalorder %s37, 0
      %p591 = por %p589, %p590
      %p592 = scmp.ne.s32.totalorder %s580, %s581
      %p593 = scmp.eq.s32.totalorder %s38, 3
      %p594 = por %p592, %p593
      %p596 = scmp.ne.s32.totalorder %s581, %s595
      %p597 = scmp.eq.s32.totalorder %s38, 0
      %p598 = por %p596, %p597
      %s600 = sadd.s32 %s599, 1
      %p603 = scmp.eq.s32.totalorder %s32, 3
      %p604 = scmp.ne.s32.totalorder %s599, %s601
      %p605 = scmp.eq.s32.totalorder %s32, 0
      %p606 = por %p604, %p605
      %p607 = scmp.ne.s32.totalorder %s599, %s601
      %p608 = scmp.eq.s32.totalorder %s37, 3
      %p609 = por %p607, %p608
      %p610 = scmp.ne.s32.totalorder %s601, %s602
      %p611 = scmp.eq.s32.totalorder %s37, 0
      %p612 = por %p610, %p611
      %p613 = scmp.ne.s32.totalorder %s601, %s602
      %p614 = scmp.eq.s32.totalorder %s38, 3
      %p615 = por %p613, %p614
      %p617 = scmp.ne.s32.totalorder %s602, %s616
      %p618 = scmp.eq.s32.totalorder %s38, 0
      %p619 = por %p617, %p618
      %s620 = ssub.s32 %s39, %s51
      %p621 = scmp.eq.s32.totalorder %s620, 0
      %s623 = sadd.s32 %s622, 1
      %s624 = scalar_select %p621, %s622, %s623
      %p627 = pneg %p621
      %p628 = scmp.eq.s32.totalorder %s32, 3
      %p629 = por %p627, %p628
      %p630 = scmp.ne.s32.totalorder %s622, %s625
      %p631 = scmp.eq.s32.totalorder %s32, 0
      %p632 = por %p630, %p631
      %p633 = scmp.ne.s32.totalorder %s622, %s625
      %p634 = scmp.eq.s32.totalorder %s37, 3
      %p635 = por %p633, %p634
      %p636 = scmp.ne.s32.totalorder %s625, %s626
      %p637 = scmp.eq.s32.totalorder %s37, 0
      %p638 = por %p636, %p637
      %p639 = scmp.ne.s32.totalorder %s625, %s626
      %p640 = scmp.eq.s32.totalorder %s38, 3
      %p641 = por %p639, %p640
      %p643 = scmp.ne.s32.totalorder %s626, %s642
      %p644 = scmp.eq.s32.totalorder %s38, 0
      %p645 = por %p643, %p644
      %p646 = scmp.le.s32.totalorder 1, %s32
      %p647 = scmp.lt.s32.totalorder %s32, 5
      %p648 = pnand %p646, %p647
      %p649 = pneg %p648
      // Predicated region
      $region9: #{tpu_custom_call.1} parent=5 // pred_check
        _
      $region10: #{tpu_custom_call.1} parent=5 // pred_check_branch
        %651 = sbr.rel (%p648) target = $region12
      $region11: #{tpu_custom_call.1} parent=5 // pred_region
        %s652 = ssub.s32 %s32, 1
        // Predicated region
        $region13: #{tpu_custom_call.1} parent=11 // pred_check
          %p653 = pneg %p91
        $region14: #{tpu_custom_call.1} parent=11 // pred_check_branch
          %655 = sbr.rel (%p653) target = $region16
        $region15: #{tpu_custom_call.1} parent=11 // pred_region
          _
        $region16: #{tpu_custom_call.1} parent=11 // pred_fallthru
          _
        // Predicated region
        $region17: #{tpu_custom_call.1} parent=11 // pred_check
          %p656 = pneg %p112
        $region18: #{tpu_custom_call.1} parent=11 // pred_check_branch
          %658 = sbr.rel (%p656) target = $region20
        $region19: #{tpu_custom_call.1} parent=11 // pred_region
          _
        $region20: #{tpu_custom_call.1} parent=11 // pred_fallthru
          _
        // Predicated region
        $region21: #{tpu_custom_call.1} parent=11 // pred_check
          %p659 = pneg %p549
        $region22: #{tpu_custom_call.1} parent=11 // pred_check_branch
          %661 = sbr.rel (%p659) target = $region24
        $region23: #{tpu_custom_call.1} parent=11 // pred_region
          _
        $region24: #{tpu_custom_call.1} parent=11 // pred_fallthru
          _
        // Predicated region
        $region25: #{tpu_custom_call.1} parent=11 // pred_check
          %p662 = pneg %p570
        $region26: #{tpu_custom_call.1} parent=11 // pred_check_branch
          %664 = sbr.rel (%p662) target = $region28
        $region27: #{tpu_custom_call.1} parent=11 // pred_region
          _
        $region28: #{tpu_custom_call.1} parent=11 // pred_fallthru
          _
        // Predicated region
        $region29: #{tpu_custom_call.1} parent=11 // pred_check
          %p665 = pneg %p591
        $region30: #{tpu_custom_call.1} parent=11 // pred_check_branch
          %667 = sbr.rel (%p665) target = $region32
        $region31: #{tpu_custom_call.1} parent=11 // pred_region
          _
        $region32: #{tpu_custom_call.1} parent=11 // pred_fallthru
          _
        // Predicated region
        $region33: #{tpu_custom_call.1} parent=11 // pred_check
          %p668 = pneg %p612
        $region34: #{tpu_custom_call.1} parent=11 // pred_check_branch
          %670 = sbr.rel (%p668) target = $region36
        $region35: #{tpu_custom_call.1} parent=11 // pred_region
          _
        $region36: #{tpu_custom_call.1} parent=11 // pred_fallthru
          _
      $region12: #{tpu_custom_call.1} parent=5 // pred_fallthru
        _
      %p671 = scmp.lt.s32.totalorder %s32, 4
      // Predicated region
      $region37: #{tpu_custom_call.1} parent=5 // pred_check
        %p672 = pneg %p671
      $region38: #{tpu_custom_call.1} parent=5 // pred_check_branch
        %674 = sbr.rel (%p672) target = $region40
      $region39: #{tpu_custom_call.1} parent=5 // pred_region
        // Predicated region
        $region41: #{tpu_custom_call.1} parent=39 // pred_check
          %p675 = pneg %p64
        $region42: #{tpu_custom_call.1} parent=39 // pred_check_branch
          %677 = sbr.rel (%p675) target = $region44
        $region43: #{tpu_custom_call.1} parent=39 // pred_region
          %p678 = scmp.lt.s32.totalorder %s39, 1
          %s679 = scalar_select %p678, %s39, 1
          %s680 = smul.addr %s679, 8
          %s681 = smul.addr %s680, 4
          %s682 = scalar_lea.vmem %s0, %s681
        $region44: #{tpu_custom_call.1} parent=39 // pred_fallthru
          _
        // Predicated region
        $region45: #{tpu_custom_call.1} parent=39 // pred_check
          %p683 = pneg %p132
        $region46: #{tpu_custom_call.1} parent=39 // pred_check_branch
          %685 = sbr.rel (%p683) target = $region48
        $region47: #{tpu_custom_call.1} parent=39 // pred_region
          %p686 = scmp.lt.s32.totalorder %s40, 1
          %s687 = scalar_select %p686, %s40, 1
          %s688 = scalar_lea.vmem %s3, %s687
        $region48: #{tpu_custom_call.1} parent=39 // pred_fallthru
          _
        // Predicated region
        $region49: #{tpu_custom_call.1} parent=39 // pred_check
          %p689 = pneg %p158
        $region50: #{tpu_custom_call.1} parent=39 // pred_check_branch
          %691 = sbr.rel (%p689) target = $region52
        $region51: #{tpu_custom_call.1} parent=39 // pred_region
          %p692 = scmp.lt.s32.totalorder %s40, 1
          %s693 = scalar_select %p692, %s40, 1
          %s694 = scalar_lea.vmem %s4, %s693
        $region52: #{tpu_custom_call.1} parent=39 // pred_fallthru
          _
        // Predicated region
        $region53: #{tpu_custom_call.1} parent=39 // pred_check
          %p695 = pneg %p184
        $region54: #{tpu_custom_call.1} parent=39 // pred_check_branch
          %697 = sbr.rel (%p695) target = $region56
        $region55: #{tpu_custom_call.1} parent=39 // pred_region
          %p698 = scmp.lt.s32.totalorder %s40, 1
          %s699 = scalar_select %p698, %s40, 1
          %s700 = smul.addr %s699, 16
          %s701 = smul.addr %s700, 4
          %s702 = scalar_lea.vmem %s5, %s701
        $region56: #{tpu_custom_call.1} parent=39 // pred_fallthru
          _
        // Predicated region
        $region57: #{tpu_custom_call.1} parent=39 // pred_check
          %p703 = pneg %p210
        $region58: #{tpu_custom_call.1} parent=39 // pred_check_branch
          %705 = sbr.rel (%p703) target = $region60
        $region59: #{tpu_custom_call.1} parent=39 // pred_region
          %p706 = scmp.lt.s32.totalorder %s40, 1
          %s707 = scalar_select %p706, %s40, 1
          %s708 = smul.addr %s707, 16
          %s709 = smul.addr %s708, 4
          %s710 = scalar_lea.vmem %s6, %s709
        $region60: #{tpu_custom_call.1} parent=39 // pred_fallthru
          _
        // Predicated region
        $region61: #{tpu_custom_call.1} parent=39 // pred_check
          %p711 = pneg %p236
        $region62: #{tpu_custom_call.1} parent=39 // pred_check_branch
          %713 = sbr.rel (%p711) target = $region64
        $region63: #{tpu_custom_call.1} parent=39 // pred_region
          %p714 = scmp.lt.s32.totalorder %s40, 1
          %s715 = scalar_select %p714, %s40, 1
          %s716 = smul.addr %s715, 16
          %s717 = smul.addr %s716, 4
          %s718 = scalar_lea.vmem %s7, %s717
        $region64: #{tpu_custom_call.1} parent=39 // pred_fallthru
          _
        // Predicated region
        $region65: #{tpu_custom_call.1} parent=39 // pred_check
          %p719 = pneg %p262
        $region66: #{tpu_custom_call.1} parent=39 // pred_check_branch
          %721 = sbr.rel (%p719) target = $region68
        $region67: #{tpu_custom_call.1} parent=39 // pred_region
          %p722 = scmp.lt.s32.totalorder %s40, 1
          %s723 = scalar_select %p722, %s40, 1
          %s724 = smul.addr %s723, 4
          %s725 = scalar_lea.vmem %s8, %s724
        $region68: #{tpu_custom_call.1} parent=39 // pred_fallthru
          _
        // Predicated region
        $region69: #{tpu_custom_call.1} parent=39 // pred_check
          %p726 = pneg %p288
        $region70: #{tpu_custom_call.1} parent=39 // pred_check_branch
          %728 = sbr.rel (%p726) target = $region72
        $region71: #{tpu_custom_call.1} parent=39 // pred_region
          %p729 = scmp.lt.s32.totalorder %s40, 1
          %s730 = scalar_select %p729, %s40, 1
          %s731 = smul.addr %s730, 4
          %s732 = scalar_lea.vmem %s9, %s731
        $region72: #{tpu_custom_call.1} parent=39 // pred_fallthru
          _
        // Predicated region
        $region73: #{tpu_custom_call.1} parent=39 // pred_check
          %p733 = pneg %p314
        $region74: #{tpu_custom_call.1} parent=39 // pred_check_branch
          %735 = sbr.rel (%p733) target = $region76
        $region75: #{tpu_custom_call.1} parent=39 // pred_region
          %p736 = scmp.lt.s32.totalorder %s40, 1
          %s737 = scalar_select %p736, %s40, 1
          %s738 = smul.addr %s737, 4
          %s739 = scalar_lea.vmem %s10, %s738
        $region76: #{tpu_custom_call.1} parent=39 // pred_fallthru
          _
        // Predicated region
        $region77: #{tpu_custom_call.1} parent=39 // pred_check
          %p740 = pneg %p340
        $region78: #{tpu_custom_call.1} parent=39 // pred_check_branch
          %742 = sbr.rel (%p740) target = $region80
        $region79: #{tpu_custom_call.1} parent=39 // pred_region
          %p743 = scmp.lt.s32.totalorder %s40, 1
          %s744 = scalar_select %p743, %s40, 1
          %s745 = smul.addr %s744, 4
          %s746 = smul.addr %s745, 4
          %s747 = scalar_lea.vmem %s11, %s746
        $region80: #{tpu_custom_call.1} parent=39 // pred_fallthru
          _
        // Predicated region
        $region81: #{tpu_custom_call.1} parent=39 // pred_check
          %p748 = pneg %p366
        $region82: #{tpu_custom_call.1} parent=39 // pred_check_branch
          %750 = sbr.rel (%p748) target = $region84
        $region83: #{tpu_custom_call.1} parent=39 // pred_region
          %p751 = scmp.lt.s32.totalorder %s40, 1
          %s752 = scalar_select %p751, %s40, 1
          %s753 = scalar_lea.vmem %s12, %s752
        $region84: #{tpu_custom_call.1} parent=39 // pred_fallthru
          _
        // Predicated region
        $region85: #{tpu_custom_call.1} parent=39 // pred_check
          %p754 = pneg %p392
        $region86: #{tpu_custom_call.1} parent=39 // pred_check_branch
          %756 = sbr.rel (%p754) target = $region88
        $region87: #{tpu_custom_call.1} parent=39 // pred_region
          %p757 = scmp.lt.s32.totalorder %s40, 1
          %s758 = scalar_select %p757, %s40, 1
          %s759 = scalar_lea.vmem %s13, %s758
        $region88: #{tpu_custom_call.1} parent=39 // pred_fallthru
          _
        // Predicated region
        $region89: #{tpu_custom_call.1} parent=39 // pred_check
          %p760 = pneg %p418
        $region90: #{tpu_custom_call.1} parent=39 // pred_check_branch
          %762 = sbr.rel (%p760) target = $region92
        $region91: #{tpu_custom_call.1} parent=39 // pred_region
          %p763 = scmp.lt.s32.totalorder %s40, 1
          %s764 = scalar_select %p763, %s40, 1
          %s765 = scalar_lea.vmem %s14, %s764
        $region92: #{tpu_custom_call.1} parent=39 // pred_fallthru
          _
        // Predicated region
        $region93: #{tpu_custom_call.1} parent=39 // pred_check
          %p766 = pneg %p444
        $region94: #{tpu_custom_call.1} parent=39 // pred_check_branch
          %768 = sbr.rel (%p766) target = $region96
        $region95: #{tpu_custom_call.1} parent=39 // pred_region
          %p769 = scmp.lt.s32.totalorder %s40, 1
          %s770 = scalar_select %p769, %s40, 1
          %s771 = smul.addr %s770, 4
          %s772 = smul.addr %s771, 4
          %s773 = scalar_lea.vmem %s15, %s772
        $region96: #{tpu_custom_call.1} parent=39 // pred_fallthru
          _
        // Predicated region
        $region97: #{tpu_custom_call.1} parent=39 // pred_check
          %p774 = pneg %p470
        $region98: #{tpu_custom_call.1} parent=39 // pred_check_branch
          %776 = sbr.rel (%p774) target = $region100
        $region99: #{tpu_custom_call.1} parent=39 // pred_region
          %p777 = scmp.lt.s32.totalorder %s40, 1
          %s778 = scalar_select %p777, %s40, 1
          %s779 = scalar_lea.vmem %s16, %s778
        $region100: #{tpu_custom_call.1} parent=39 // pred_fallthru
          _
        // Predicated region
        $region101: #{tpu_custom_call.1} parent=39 // pred_check
          %p780 = pneg %p496
        $region102: #{tpu_custom_call.1} parent=39 // pred_check_branch
          %782 = sbr.rel (%p780) target = $region104
        $region103: #{tpu_custom_call.1} parent=39 // pred_region
          %p783 = scmp.lt.s32.totalorder %s40, 1
          %s784 = scalar_select %p783, %s40, 1
          %s785 = smul.addr %s784, 16
          %s786 = smul.addr %s785, 4
          %s787 = scalar_lea.vmem %s17, %s786
        $region104: #{tpu_custom_call.1} parent=39 // pred_fallthru
          _
        // Predicated region
        $region105: #{tpu_custom_call.1} parent=39 // pred_check
          %p788 = pneg %p522
        $region106: #{tpu_custom_call.1} parent=39 // pred_check_branch
          %790 = sbr.rel (%p788) target = $region108
        $region107: #{tpu_custom_call.1} parent=39 // pred_region
          %p791 = scmp.lt.s32.totalorder %s40, 1
          %s792 = scalar_select %p791, %s40, 1
          %s793 = scalar_lea.vmem %s18, %s792
        $region108: #{tpu_custom_call.1} parent=39 // pred_fallthru
          _
      $region40: #{tpu_custom_call.1} parent=5 // pred_fallthru
        _
      %p794 = scmp.le.s32.totalorder 1, %s32
      %p795 = scmp.lt.s32.totalorder %s32, 5
      %p796 = pnand %p794, %p795
      %p797 = pneg %p796
      // Predicated region
      $region109: #{tpu_custom_call.1} parent=5 // pred_check
        _
      $region110: #{tpu_custom_call.1} parent=5 // pred_check_branch
        %799 = sbr.rel (%p796) target = $region112
      $region111: #{tpu_custom_call.1} parent=5 // pred_region
        %s800 = ssub.s32 %s32, 1
        %p801 = scmp.lt.s32.totalorder %s41, 1
        %s802 = scalar_select %p801, %s41, 1
        %s803 = smul.addr %s802, 8
        %s804 = smul.addr %s803, 4
        %s805 = scalar_lea.vmem %s0, %s804
        %p806 = pneg %p70
        %p807 = pneg %p67
        %p808 = pneg %p91
        %p809 = pneg %p88
        %p810 = pneg %p112
        %p811 = pneg %p109
        %p812 = scmp.lt.s32.totalorder %s42, 1
        %s813 = scalar_select %p812, %s42, 1
        %s814 = scalar_lea.vmem %s3, %s813
        %p815 = pneg %p138
        %p816 = pneg %p135
        %p817 = scmp.lt.s32.totalorder %s42, 1
        %s818 = scalar_select %p817, %s42, 1
        %s819 = scalar_lea.vmem %s4, %s818
        %p820 = pneg %p164
        %p821 = pneg %p161
        %p822 = scmp.lt.s32.totalorder %s42, 1
        %s823 = scalar_select %p822, %s42, 1
        %s824 = smul.addr %s823, 16
        %s825 = smul.addr %s824, 4
        %s826 = scalar_lea.vmem %s5, %s825
        %p827 = pneg %p190
        %p828 = pneg %p187
        %p829 = scmp.lt.s32.totalorder %s42, 1
        %s830 = scalar_select %p829, %s42, 1
        %s831 = smul.addr %s830, 16
        %s832 = smul.addr %s831, 4
        %s833 = scalar_lea.vmem %s6, %s832
        %p834 = pneg %p216
        %p835 = pneg %p213
        %p836 = scmp.lt.s32.totalorder %s42, 1
        %s837 = scalar_select %p836, %s42, 1
        %s838 = smul.addr %s837, 16
        %s839 = smul.addr %s838, 4
        %s840 = scalar_lea.vmem %s7, %s839
        %p841 = pneg %p242
        %p842 = pneg %p239
        %p843 = scmp.lt.s32.totalorder %s42, 1
        %s844 = scalar_select %p843, %s42, 1
        %s845 = smul.addr %s844, 4
        %s846 = scalar_lea.vmem %s8, %s845
        %p847 = pneg %p268
        %p848 = pneg %p265
        %p849 = scmp.lt.s32.totalorder %s42, 1
        %s850 = scalar_select %p849, %s42, 1
        %s851 = smul.addr %s850, 4
        %s852 = scalar_lea.vmem %s9, %s851
        %p853 = pneg %p294
        %p854 = pneg %p291
        %p855 = scmp.lt.s32.totalorder %s42, 1
        %s856 = scalar_select %p855, %s42, 1
        %s857 = smul.addr %s856, 4
        %s858 = scalar_lea.vmem %s10, %s857
        %p859 = pneg %p320
        %p860 = pneg %p317
        %p861 = scmp.lt.s32.totalorder %s42, 1
        %s862 = scalar_select %p861, %s42, 1
        %s863 = smul.addr %s862, 4
        %s864 = smul.addr %s863, 4
        %s865 = scalar_lea.vmem %s11, %s864
        %p866 = pneg %p346
        %p867 = pneg %p343
        %p868 = scmp.lt.s32.totalorder %s42, 1
        %s869 = scalar_select %p868, %s42, 1
        %s870 = scalar_lea.vmem %s12, %s869
        %p871 = pneg %p372
        %p872 = pneg %p369
        %p873 = scmp.lt.s32.totalorder %s42, 1
        %s874 = scalar_select %p873, %s42, 1
        %s875 = scalar_lea.vmem %s13, %s874
        %p876 = pneg %p398
        %p877 = pneg %p395
        %p878 = scmp.lt.s32.totalorder %s42, 1
        %s879 = scalar_select %p878, %s42, 1
        %s880 = scalar_lea.vmem %s14, %s879
        %p881 = pneg %p424
        %p882 = pneg %p421
        %p883 = scmp.lt.s32.totalorder %s42, 1
        %s884 = scalar_select %p883, %s42, 1
        %s885 = smul.addr %s884, 4
        %s886 = smul.addr %s885, 4
        %s887 = scalar_lea.vmem %s15, %s886
        %p888 = pneg %p450
        %p889 = pneg %p447
        %p890 = scmp.lt.s32.totalorder %s42, 1
        %s891 = scalar_select %p890, %s42, 1
        %s892 = scalar_lea.vmem %s16, %s891
        %p893 = pneg %p476
        %p894 = pneg %p473
        %p895 = scmp.lt.s32.totalorder %s42, 1
        %s896 = scalar_select %p895, %s42, 1
        %s897 = smul.addr %s896, 16
        %s898 = smul.addr %s897, 4
        %s899 = scalar_lea.vmem %s17, %s898
        %p900 = pneg %p502
        %p901 = pneg %p499
        %p902 = scmp.lt.s32.totalorder %s42, 1
        %s903 = scalar_select %p902, %s42, 1
        %s904 = scalar_lea.vmem %s18, %s903
        %p905 = pneg %p528
        %p906 = pneg %p525
        %p907 = pneg %p549
        %p908 = pneg %p546
        %p909 = pneg %p570
        %p910 = pneg %p567
        %p911 = pneg %p591
        %p912 = pneg %p588
        %p913 = pneg %p612
        %p914 = pneg %p609
        %p915 = pneg %p638
        %p916 = pneg %p635
        %s917 = sand.u32 %s625, 1
        %s918 = scalar_lea.sflag [#allocation4], %s917
        %s919 = sand.u32 %s625, 1
        %s920 = scalar_lea.vmem [#allocation3], %s919
        %p921 = scmp.lt.s32.totalorder %s41, 1
        %s922 = scalar_select %p921, %s41, 1
        %s923 = smul.addr %s922, 8
        %s924 = smul.addr %s923, 4
        %s925 = scalar_lea.vmem %s0, %s924
        %p926 = scmp.lt.s32.totalorder %s42, 1
        %s927 = scalar_select %p926, %s42, 1
        %s928 = scalar_lea.vmem %s3, %s927
        %p929 = scmp.lt.s32.totalorder %s42, 1
        %s930 = scalar_select %p929, %s42, 1
        %s931 = scalar_lea.vmem %s4, %s930
        %p932 = scmp.lt.s32.totalorder %s42, 1
        %s933 = scalar_select %p932, %s42, 1
        %s934 = smul.addr %s933, 16
        %s935 = smul.addr %s934, 4
        %s936 = scalar_lea.vmem %s5, %s935
        %p937 = scmp.lt.s32.totalorder %s42, 1
        %s938 = scalar_select %p937, %s42, 1
        %s939 = smul.addr %s938, 16
        %s940 = smul.addr %s939, 4
        %s941 = scalar_lea.vmem %s6, %s940
        %p942 = scmp.lt.s32.totalorder %s42, 1
        %s943 = scalar_select %p942, %s42, 1
        %s944 = smul.addr %s943, 16
        %s945 = smul.addr %s944, 4
        %s946 = scalar_lea.vmem %s7, %s945
        %p947 = scmp.lt.s32.totalorder %s42, 1
        %s948 = scalar_select %p947, %s42, 1
        %s949 = smul.addr %s948, 4
        %s950 = scalar_lea.vmem %s8, %s949
        %p951 = scmp.lt.s32.totalorder %s42, 1
        %s952 = scalar_select %p951, %s42, 1
        %s953 = smul.addr %s952, 4
        %s954 = scalar_lea.vmem %s9, %s953
        %p955 = scmp.lt.s32.totalorder %s42, 1
        %s956 = scalar_select %p955, %s42, 1
        %s957 = smul.addr %s956, 4
        %s958 = scalar_lea.vmem %s10, %s957
        %p959 = scmp.lt.s32.totalorder %s42, 1
        %s960 = scalar_select %p959, %s42, 1
        %s961 = smul.addr %s960, 4
        %s962 = smul.addr %s961, 4
        %s963 = scalar_lea.vmem %s11, %s962
        %p964 = scmp.lt.s32.totalorder %s42, 1
        %s965 = scalar_select %p964, %s42, 1
        %s966 = scalar_lea.vmem %s12, %s965
        %p967 = scmp.lt.s32.totalorder %s42, 1
        %s968 = scalar_select %p967, %s42, 1
        %s969 = scalar_lea.vmem %s13, %s968
        %p970 = scmp.lt.s32.totalorder %s42, 1
        %s971 = scalar_select %p970, %s42, 1
        %s972 = scalar_lea.vmem %s14, %s971
        %p973 = scmp.lt.s32.totalorder %s42, 1
        %s974 = scalar_select %p973, %s42, 1
        %s975 = smul.addr %s974, 4
        %s976 = smul.addr %s975, 4
        %s977 = scalar_lea.vmem %s15, %s976
        %p978 = scmp.lt.s32.totalorder %s42, 1
        %s979 = scalar_select %p978, %s42, 1
        %s980 = scalar_lea.vmem %s16, %s979
        %p981 = scmp.lt.s32.totalorder %s42, 1
        %s982 = scalar_select %p981, %s42, 1
        %s983 = smul.addr %s982, 16
        %s984 = smul.addr %s983, 4
        %s985 = scalar_lea.vmem %s17, %s984
        %p986 = scmp.lt.s32.totalorder %s42, 1
        %s987 = scalar_select %p986, %s42, 1
        %s988 = scalar_lea.vmem %s18, %s987
        %p990 = scmp.eq.s32.totalorder %s42, 0
        // Predicated region
        $region113: #{tpu_custom_call.1} parent=111 // pred_check
          %p991 = pneg %p990
        $region114: #{tpu_custom_call.1} parent=111 // pred_check_branch
          %993 = sbr.rel (%p991) target = $region116
        $region115: #{tpu_custom_call.1} parent=111 // pred_region
          %v994 = vld [vmem:[%s925] sm:$0xff]
          %v995 = vld [vmem:[%s925 + $0x8] sm:$0xff]
          %v996 = vld [vmem:[%s925 + $0x10] sm:$0x11]
          %v997 = vld [vmem:[%s925 + $0x18] sm:$0x11]
          %v998 = vld [vmem:[%s1] sm:$0xf]
          %v999 = vld [vmem:[%s1 + $0x4] sm:$0xf]
          %v1000 = vld [vmem:[%s1 + $0x8] sm:$0xf]
          %v1001 = vld [vmem:[%s1 + $0xc] sm:$0xf]
          %v1002 = vld [vmem:[%s1 + $0x10] sm:$0xf]
          %v1003 = vld [vmem:[%s1 + $0x14] sm:$0xf]
          %v1004 = vld [vmem:[%s1 + $0x18] sm:$0xf]
          %v1005 = vld [vmem:[%s1 + $0x1c] sm:$0xf]
          %v1006 = vld [vmem:[%s1 + $0x20] sm:$0xf]
          %v1007 = vld [vmem:[%s1 + $0x24] sm:$0xf]
          %v1008 = vld [vmem:[%s1 + $0x28] sm:$0xf]
          %v1009 = vld [vmem:[%s1 + $0x2c] sm:$0xf]
          %v1010 = vld [vmem:[%s1 + $0x30] sm:$0xf]
          %v1011 = vld [vmem:[%s1 + $0x34] sm:$0xf]
          %v1012 = vld [vmem:[%s1 + $0x38] sm:$0xf]
          %v1013 = vld [vmem:[%s1 + $0x3c] sm:$0xf]
          %v1014 = vld [vmem:[%s1 + $0x40] sm:$0xf]
          %v1015 = vld [vmem:[%s1 + $0x44] sm:$0xf]
          %v1016 = vld [vmem:[%s1 + $0x48] sm:$0xf]
          %v1017 = vld [vmem:[%s1 + $0x4c] sm:$0xf]
          %v1018 = vld [vmem:[%s1 + $0x50] sm:$0xf]
          %v1019 = vld [vmem:[%s1 + $0x54] sm:$0xf]
          %v1020 = vld [vmem:[%s1 + $0x58] sm:$0xf]
          %v1021 = vld [vmem:[%s1 + $0x5c] sm:$0xf]
          %v1022 = vld [vmem:[%s1 + $0x60] sm:$0xf]
          %v1023 = vld [vmem:[%s1 + $0x64] sm:$0xf]
          %v1024 = vld [vmem:[%s1 + $0x68] sm:$0xf]
          %v1025 = vld [vmem:[%s1 + $0x6c] sm:$0xf]
          %v1026 = vld [vmem:[%s1 + $0x70] sm:$0xf]
          %v1027 = vld [vmem:[%s1 + $0x74] sm:$0xf]
          %v1028 = vld [vmem:[%s1 + $0x78] sm:$0xf]
          %v1029 = vld [vmem:[%s1 + $0x7c] sm:$0xf]
          %v1030 = vld [vmem:[%s1 + $0x80] sm:$0xf]
          %v1031 = vld [vmem:[%s1 + $0x84] sm:$0xf]
          %v1032 = vld [vmem:[%s1 + $0x88] sm:$0xf]
          %v1033 = vld [vmem:[%s1 + $0x8c] sm:$0xf]
          %v1034 = vld [vmem:[%s1 + $0x90] sm:$0xf]
          %v1035 = vld [vmem:[%s1 + $0x94] sm:$0xf]
          %v1036 = vld [vmem:[%s1 + $0x98] sm:$0xf]
          %v1037 = vld [vmem:[%s1 + $0x9c] sm:$0xf]
          %v1038 = vld [vmem:[%s1 + $0xa0] sm:$0xf]
          %v1039 = vld [vmem:[%s1 + $0xa4] sm:$0xf]
          %v1040 = vld [vmem:[%s1 + $0xa8] sm:$0xf]
          %v1041 = vld [vmem:[%s1 + $0xac] sm:$0xf]
          %v1042 = vld [vmem:[%s1 + $0xb0] sm:$0xf]
          %v1043 = vld [vmem:[%s1 + $0xb4] sm:$0xf]
          %v1044 = vld [vmem:[%s1 + $0xb8] sm:$0xf]
          %v1045 = vld [vmem:[%s1 + $0xbc] sm:$0xf]
          %v1046 = vld [vmem:[%s1 + $0xc0] sm:$0xf]
          %v1047 = vld [vmem:[%s1 + $0xc4] sm:$0xf]
          %v1048 = vld [vmem:[%s1 + $0xc8] sm:$0xf]
          %v1049 = vld [vmem:[%s1 + $0xcc] sm:$0xf]
          %v1050 = vld [vmem:[%s1 + $0xd0] sm:$0xf]
          %v1051 = vld [vmem:[%s1 + $0xd4] sm:$0xf]
          %v1052 = vld [vmem:[%s1 + $0xd8] sm:$0xf]
          %v1053 = vld [vmem:[%s1 + $0xdc] sm:$0xf]
          %v1054 = vld [vmem:[%s1 + $0xe0] sm:$0xf]
          %v1055 = vld [vmem:[%s1 + $0xe4] sm:$0xf]
          %v1056 = vld [vmem:[%s1 + $0xe8] sm:$0xf]
          %v1057 = vld [vmem:[%s1 + $0xec] sm:$0xf]
          %v1058 = vld [vmem:[%s1 + $0xf0] sm:$0xf]
          %v1059 = vld [vmem:[%s1 + $0xf4] sm:$0xf]
          %v1060 = vld [vmem:[%s1 + $0xf8] sm:$0xf]
          %v1061 = vld [vmem:[%s1 + $0xfc] sm:$0xf]
          %v1062 = vld [vmem:[%s2] sm:$0xff]
          %v1063 = vld [vmem:[%s2 + $0x8] sm:$0x1]
          %v1068 = vunpack.c.l.b16 %v994
          %v1069 = vunpack.c.h.b16 %v994
          %v1070 = vunpack.c.l.b16 %v995
          %v1071 = vunpack.c.h.b16 %v995
          %v1072 = vunpack.c.l.b16 %v996
          %v1073 = vunpack.c.h.b16 %v996
          %v1074 = vunpack.c.l.b16 %v997
          %v1075 = vunpack.c.h.b16 %v997
          %v1076 = vpack.c.b16 %v1072, %v1068
          %v1077 = vpack.c.b16 %v1073, %v1069
          %v1078 = vpack.c.b16 %v1074, %v1070
          %v1079 = vpack.c.b16 %v1075, %v1071
          %v1148 = vunpack.c.l.b16 %v998
          %v1149 = vunpack.c.l.b16 %v999
          %v1150 = vunpack.c.l.b16 %v1000
          %v1151 = vunpack.c.l.b16 %v1001
          %v1152 = vunpack.c.l.b16 %v1002
          %v1153 = vunpack.c.l.b16 %v1003
          %v1154 = vunpack.c.l.b16 %v1004
          %v1155 = vunpack.c.l.b16 %v1005
          %v1156 = vunpack.c.l.b16 %v1006
          %v1157 = vunpack.c.l.b16 %v1007
          %v1158 = vunpack.c.l.b16 %v1008
          %v1159 = vunpack.c.l.b16 %v1009
          %v1160 = vunpack.c.l.b16 %v1010
          %v1161 = vunpack.c.l.b16 %v1011
          %v1162 = vunpack.c.l.b16 %v1012
          %v1163 = vunpack.c.l.b16 %v1013
          %v1164 = vunpack.c.l.b16 %v1014
          %v1165 = vunpack.c.l.b16 %v1015
          %v1166 = vunpack.c.l.b16 %v1016
          %v1167 = vunpack.c.l.b16 %v1017
          %v1168 = vunpack.c.l.b16 %v1018
          %v1169 = vunpack.c.l.b16 %v1019
          %v1170 = vunpack.c.l.b16 %v1020
          %v1171 = vunpack.c.l.b16 %v1021
          %v1172 = vunpack.c.l.b16 %v1022
          %v1173 = vunpack.c.l.b16 %v1023
          %v1174 = vunpack.c.l.b16 %v1024
          %v1175 = vunpack.c.l.b16 %v1025
          %v1176 = vunpack.c.l.b16 %v1026
          %v1177 = vunpack.c.l.b16 %v1027
          %v1178 = vunpack.c.l.b16 %v1028
          %v1179 = vunpack.c.l.b16 %v1029
          %v1180 = vunpack.c.l.b16 %v1030
          %v1181 = vunpack.c.l.b16 %v1031
          %v1182 = vunpack.c.l.b16 %v1032
          %v1183 = vunpack.c.l.b16 %v1033
          %v1184 = vunpack.c.l.b16 %v1034
          %v1185 = vunpack.c.l.b16 %v1035
          %v1186 = vunpack.c.l.b16 %v1036
          %v1187 = vunpack.c.l.b16 %v1037
          %v1188 = vunpack.c.l.b16 %v1038
          %v1189 = vunpack.c.l.b16 %v1039
          %v1190 = vunpack.c.l.b16 %v1040
          %v1191 = vunpack.c.l.b16 %v1041
          %v1192 = vunpack.c.l.b16 %v1042
          %v1193 = vunpack.c.l.b16 %v1043
          %v1194 = vunpack.c.l.b16 %v1044
          %v1195 = vunpack.c.l.b16 %v1045
          %v1196 = vunpack.c.l.b16 %v1046
          %v1197 = vunpack.c.l.b16 %v1047
          %v1198 = vunpack.c.l.b16 %v1048
          %v1199 = vunpack.c.l.b16 %v1049
          %v1200 = vunpack.c.l.b16 %v1050
          %v1201 = vunpack.c.l.b16 %v1051
          %v1202 = vunpack.c.l.b16 %v1052
          %v1203 = vunpack.c.l.b16 %v1053
          %v1204 = vunpack.c.l.b16 %v1054
          %v1205 = vunpack.c.l.b16 %v1055
          %v1206 = vunpack.c.l.b16 %v1056
          %v1207 = vunpack.c.l.b16 %v1057
          %v1208 = vunpack.c.l.b16 %v1058
          %v1209 = vunpack.c.l.b16 %v1059
          %v1210 = vunpack.c.l.b16 %v1060
          %v1211 = vunpack.c.l.b16 %v1061
          %v1212 = vpack.c.b16 %v1149, %v1148
          %v1213 = vpack.c.b16 %v1151, %v1150
          %v1214 = vpack.c.b16 %v1153, %v1152
          %v1215 = vpack.c.b16 %v1155, %v1154
          %v1216 = vpack.c.b16 %v1157, %v1156
          %v1217 = vpack.c.b16 %v1159, %v1158
          %v1218 = vpack.c.b16 %v1161, %v1160
          %v1219 = vpack.c.b16 %v1163, %v1162
          %v1220 = vpack.c.b16 %v1165, %v1164
          %v1221 = vpack.c.b16 %v1167, %v1166
          %v1222 = vpack.c.b16 %v1169, %v1168
          %v1223 = vpack.c.b16 %v1171, %v1170
          %v1224 = vpack.c.b16 %v1173, %v1172
          %v1225 = vpack.c.b16 %v1175, %v1174
          %v1226 = vpack.c.b16 %v1177, %v1176
          %v1227 = vpack.c.b16 %v1179, %v1178
          %v1228 = vpack.c.b16 %v1181, %v1180
          %v1229 = vpack.c.b16 %v1183, %v1182
          %v1230 = vpack.c.b16 %v1185, %v1184
          %v1231 = vpack.c.b16 %v1187, %v1186
          %v1232 = vpack.c.b16 %v1189, %v1188
          %v1233 = vpack.c.b16 %v1191, %v1190
          %v1234 = vpack.c.b16 %v1193, %v1192
          %v1235 = vpack.c.b16 %v1195, %v1194
          %v1236 = vpack.c.b16 %v1197, %v1196
          %v1237 = vpack.c.b16 %v1199, %v1198
          %v1238 = vpack.c.b16 %v1201, %v1200
          %v1239 = vpack.c.b16 %v1203, %v1202
          %v1240 = vpack.c.b16 %v1205, %v1204
          %v1241 = vpack.c.b16 %v1207, %v1206
          %v1242 = vpack.c.b16 %v1209, %v1208
          %v1243 = vpack.c.b16 %v1211, %v1210
          %1276 = vmatprep.subr.bf16.mxu0 0
          %1277 = vmatpush1.bf16.msra.mxu0 %v1212
          %1278 = vmatprep.subr.bf16.mxu0 0
          %1279 = vmatpush1.bf16.msra.mxu0 %v1213
          %1280 = vmatprep.subr.bf16.mxu0 0
          %1281 = vmatpush1.bf16.msra.mxu0 %v1214
          %1282 = vmatprep.subr.bf16.mxu0 0
          %1283 = vmatpush1.bf16.msra.mxu0 %v1215
          %1284 = vmatprep.subr.bf16.mxu0 0
          %1285 = vmatpush1.bf16.msra.mxu0 %v1216
          %1286 = vmatprep.subr.bf16.mxu0 0
          %1287 = vmatpush1.bf16.msra.mxu0 %v1217
          %1288 = vmatprep.subr.bf16.mxu0 0
          %1289 = vmatpush1.bf16.msra.mxu0 %v1218
          %1290 = vmatprep.subr.bf16.mxu0 0
          %1291 = vmatpush1.bf16.msra.mxu0 %v1219
          %1292 = vmatprep.subr.bf16.mxu0 0
          %1293 = vmatpush1.bf16.msra.mxu0 %v1220
          %1294 = vmatprep.subr.bf16.mxu0 0
          %1295 = vmatpush1.bf16.msra.mxu0 %v1221
          %1296 = vmatprep.subr.bf16.mxu0 0
          %1297 = vmatpush1.bf16.msra.mxu0 %v1222
          %1298 = vmatprep.subr.bf16.mxu0 0
          %1299 = vmatpush1.bf16.msra.mxu0 %v1223
          %1300 = vmatprep.subr.bf16.mxu0 0
          %1301 = vmatpush1.bf16.msra.mxu0 %v1224
          %1302 = vmatprep.subr.bf16.mxu0 0
          %1303 = vmatpush1.bf16.msra.mxu0 %v1225
          %1304 = vmatprep.subr.bf16.mxu0 0
          %1305 = vmatpush1.bf16.msra.mxu0 %v1226
          %1306 = vmatprep.subr.bf16.mxu0 0
          %1307 = vmatpush1.bf16.msra.mxu0 %v1227
          %1308 = vmatprep.mubr.bf16.mxu0 %v1077
          %1309 = vmatmul.mubr.bf16.gmra.mrb[0].mxu0 %v1076
          %v1310 = vpop.f32.mrb[0].mxu0
          %v1311 = vadd.f32 %v1062, %v1310
          %v1312 = vpop.f32.mrb[0].mxu0
          %v1313 = vpop.f32.mrb[0].mxu0
          %v1314 = vadd.f32 %v1063, %v1313
          %v1315 = vpop.f32.mrb[0].mxu0
          %1316 = vdwg.mxu0
          %1317 = vmatprep.subr.bf16.mxu0 0
          %1318 = vmatpush1.bf16.msra.mxu0 %v1228
          %1319 = vmatprep.subr.bf16.mxu0 0
          %1320 = vmatpush1.bf16.msra.mxu0 %v1229
          %1321 = vmatprep.subr.bf16.mxu0 0
          %1322 = vmatpush1.bf16.msra.mxu0 %v1230
          %1323 = vmatprep.subr.bf16.mxu0 0
          %1324 = vmatpush1.bf16.msra.mxu0 %v1231
          %1325 = vmatprep.subr.bf16.mxu0 0
          %1326 = vmatpush1.bf16.msra.mxu0 %v1232
          %1327 = vmatprep.subr.bf16.mxu0 0
          %1328 = vmatpush1.bf16.msra.mxu0 %v1233
          %1329 = vmatprep.subr.bf16.mxu0 0
          %1330 = vmatpush1.bf16.msra.mxu0 %v1234
          %1331 = vmatprep.subr.bf16.mxu0 0
          %1332 = vmatpush1.bf16.msra.mxu0 %v1235
          %1333 = vmatprep.subr.bf16.mxu0 0
          %1334 = vmatpush1.bf16.msra.mxu0 %v1236
          %1335 = vmatprep.subr.bf16.mxu0 0
          %1336 = vmatpush1.bf16.msra.mxu0 %v1237
          %1337 = vmatprep.subr.bf16.mxu0 0
          %1338 = vmatpush1.bf16.msra.mxu0 %v1238
          %1339 = vmatprep.subr.bf16.mxu0 0
          %1340 = vmatpush1.bf16.msra.mxu0 %v1239
          %1341 = vmatprep.subr.bf16.mxu0 0
          %1342 = vmatpush1.bf16.msra.mxu0 %v1240
          %1343 = vmatprep.subr.bf16.mxu0 0
          %1344 = vmatpush1.bf16.msra.mxu0 %v1241
          %1345 = vmatprep.subr.bf16.mxu0 0
          %1346 = vmatpush1.bf16.msra.mxu0 %v1242
          %1347 = vmatprep.subr.bf16.mxu0 0
          %1348 = vmatpush1.bf16.msra.mxu0 %v1243
          %1349 = vmatprep.mubr.bf16.mxu0 %v1079
          %1350 = vmatmul.mubr.bf16.gmra.mrb[0].mxu0 %v1078
          %v1351 = vpop.f32.mrb[0].mxu0
          %v1352 = vadd.f32 %v1311, %v1351
          %v1353 = vpop.f32.mrb[0].mxu0
          %v1354 = vpop.f32.mrb[0].mxu0
          %v1355 = vadd.f32 %v1314, %v1354
          %v1356 = vpop.f32.mrb[0].mxu0
          %1357 = vdwg.mxu0
          %vm1358 = vcmask 261120
          %1359 = vst.msk [vmem:[#allocation2] sm:$0xff] %vm1358, %v1352
          %vm1360 = vcmask 253952
          %1361 = vst.msk [vmem:[#allocation2 + $0x8] sm:$0x1] %vm1360, %v1355
        $region116: #{tpu_custom_call.1} parent=111 // pred_fallthru
          _
        %v1362 = vld [vmem:[#allocation2] sm:$0xff]
        %v1363 = vld [vmem:[#allocation2 + $0x8] sm:$0x1]
        %v1364 = vld [vmem:[%s928] sm:$0x1]
        %v1365 = vld [vmem:[%s931] sm:$0x1]
        %vm1366 = vcmask 261120
        %v1367 = vsel %vm1366, %v1362, 0.0
        %1368 = vadd.xlane.f32.xlu0 %v1367
        %v1369 = vpop.xlane.xlu0 %1368
        %vm1370 = vcmask 253952
        %v1371 = vsel %vm1370, %v1363, 0.0
        %1372 = vadd.xlane.f32.xlu0 %v1371
        %v1373 = vpop.xlane.xlu0 %1372
        %v1374 = vrcp.pop 32.0
        %v1375 = vmul.f32 %v1369, %v1374
        %v1376 = vmul.f32 %v1373, %v1374
        %v1377 = vsub.f32 %v1362, %v1375
        %v1378 = vsub.f32 %v1363, %v1376
        %v1379 = vmul.f32 %v1377, %v1377
        %v1380 = vmul.f32 %v1378, %v1378
        %v1381 = vsel %vm1366, %v1379, 0.0
        %1382 = vadd.xlane.f32.xlu0 %v1381
        %v1383 = vpop.xlane.xlu0 %1382
        %v1384 = vsel %vm1370, %v1380, 0.0
        %1385 = vadd.xlane.f32.xlu0 %v1384
        %v1386 = vpop.xlane.xlu0 %1385
        %v1387 = vmul.f32 %v1383, %v1374
        %v1388 = vmul.f32 %v1386, %v1374
        %v1389 = vadd.f32 %v1387, 1e-06
        %v1390 = vadd.f32 %v1388, 1e-06
        %v1391 = vrsqrt.pop %v1389
        %v1392 = vrsqrt.pop %v1390
        %v1393 = vmul.f32 %v1377, %v1391
        %v1394 = vmul.f32 %v1378, %v1392
        %v1396 = vlaneseq
        %v1397 = vshrl.u32 %v1396, 7
        %v1398 = vsub.s32 0, %v1397
        %v1399 = vrot.slane %v1364, %v1398
        %v1401 = vmul.f32 %v1393, %v1399
        %v1402 = vmul.f32 %v1394, %v1399
        %v1404 = vlaneseq
        %v1405 = vshrl.u32 %v1404, 7
        %v1406 = vsub.s32 0, %v1405
        %v1407 = vrot.slane %v1365, %v1406
        %v1409 = vadd.f32 %v1401, %v1407
        %v1410 = vadd.f32 %v1402, %v1407
        %v1411 = vpack.c.bf16 %v1410, %v1409
        %v1412 = vld [vmem:[%s936] sm:$0xf]
        %v1413 = vld [vmem:[%s936 + $0x4] sm:$0xf]
        %v1414 = vld [vmem:[%s936 + $0x8] sm:$0xf]
        %v1415 = vld [vmem:[%s936 + $0xc] sm:$0xf]
        %v1416 = vld [vmem:[%s950] sm:$0x1]
        %v1418 = vlaneseq
        %v1419 = vshrl.u32 %v1418, 7
        %v1420 = vsub.s32 0, %v1419
        %v1421 = vrot.slane %v1416, %v1420
        %v1427 = vunpack.c.l.b16 %v1412
        %v1428 = vunpack.c.l.b16 %v1413
        %v1429 = vunpack.c.l.b16 %v1414
        %v1430 = vunpack.c.l.b16 %v1415
        %v1431 = vpack.c.b16 %v1428, %v1427
        %v1432 = vpack.c.b16 %v1430, %v1429
        %v1436 = vsel %vm1366, %v1411, 0
        %1438 = vmatprep.subr.bf16.mxu0 0
        %1439 = vmatpush1.bf16.msra.mxu0 %v1431
        %1440 = vmatprep.subr.bf16.mxu0 0
        %1441 = vmatpush1.bf16.msra.mxu0 %v1432
        %1442 = vmatprep.subr.bf16.mxu0 0
        %1443 = vmatpush1.bf16.msra.mxu0 0
        %1444 = vmatprep.subr.bf16.mxu0 0
        %1445 = vmatpush1.bf16.msra.mxu0 0
        %1446 = vmatprep.subr.bf16.mxu0 0
        %1447 = vmatpush1.bf16.msra.mxu0 0
        %1448 = vmatprep.subr.bf16.mxu0 0
        %1449 = vmatpush1.bf16.msra.mxu0 0
        %1450 = vmatprep.subr.bf16.mxu0 0
        %1451 = vmatpush1.bf16.msra.mxu0 0
        %1452 = vmatprep.subr.bf16.mxu0 0
        %1453 = vmatpush1.bf16.msra.mxu0 0
        %1454 = vmatprep.subr.bf16.mxu0 0
        %1455 = vmatpush1.bf16.msra.mxu0 0
        %1456 = vmatprep.subr.bf16.mxu0 0
        %1457 = vmatpush1.bf16.msra.mxu0 0
        %1458 = vmatprep.subr.bf16.mxu0 0
        %1459 = vmatpush1.bf16.msra.mxu0 0
        %1460 = vmatprep.subr.bf16.mxu0 0
        %1461 = vmatpush1.bf16.msra.mxu0 0
        %1462 = vmatprep.subr.bf16.mxu0 0
        %1463 = vmatpush1.bf16.msra.mxu0 0
        %1464 = vmatprep.subr.bf16.mxu0 0
        %1465 = vmatpush1.bf16.msra.mxu0 0
        %1466 = vmatprep.subr.bf16.mxu0 0
        %1467 = vmatpush1.bf16.msra.mxu0 0
        %1468 = vmatprep.subr.bf16.mxu0 0
        %1469 = vmatpush1.bf16.msra.mxu0 0
        %1470 = vmatprep.mubr.bf16.mxu0 0
        %1471 = vmatmul.mubr.bf16.gmra.mrb[0].mxu0 %v1436
        %v1472 = vpop.f32.mrb[0].mxu0
        %v1473 = vadd.f32 %v1421, %v1472
        %v1474 = vpop.f32.mrb[0].mxu0
        %v1475 = vpop.f32.mrb[0].mxu0
        %v1476 = vadd.f32 %v1421, %v1475
        %v1477 = vpop.f32.mrb[0].mxu0
        %1478 = vdwg.mxu0
        %v1479 = vmul.f32 %v1473, 0.35355338
        %v1480 = vmul.f32 %v1476, 0.35355338
        %v1481 = vld [vmem:[%s941] sm:$0xf]
        %v1482 = vld [vmem:[%s941 + $0x4] sm:$0xf]
        %v1483 = vld [vmem:[%s941 + $0x8] sm:$0xf]
        %v1484 = vld [vmem:[%s941 + $0xc] sm:$0xf]
        %v1485 = vld [vmem:[%s954] sm:$0x1]
        %v1487 = vlaneseq
        %v1488 = vshrl.u32 %v1487, 7
        %v1489 = vsub.s32 0, %v1488
        %v1490 = vrot.slane %v1485, %v1489
        %v1496 = vunpack.c.l.b16 %v1481
        %v1497 = vunpack.c.l.b16 %v1482
        %v1498 = vunpack.c.l.b16 %v1483
        %v1499 = vunpack.c.l.b16 %v1484
        %v1500 = vpack.c.b16 %v1497, %v1496
        %v1501 = vpack.c.b16 %v1499, %v1498
        %1504 = vmatprep.subr.bf16.mxu0 0
        %1505 = vmatpush1.bf16.msra.mxu0 %v1500
        %1506 = vmatprep.subr.bf16.mxu0 0
        %1507 = vmatpush1.bf16.msra.mxu0 %v1501
        %1508 = vmatprep.subr.bf16.mxu0 0
        %1509 = vmatpush1.bf16.msra.mxu0 0
        %1510 = vmatprep.subr.bf16.mxu0 0
        %1511 = vmatpush1.bf16.msra.mxu0 0
        %1512 = vmatprep.subr.bf16.mxu0 0
        %1513 = vmatpush1.bf16.msra.mxu0 0
        %1514 = vmatprep.subr.bf16.mxu0 0
        %1515 = vmatpush1.bf16.msra.mxu0 0
        %1516 = vmatprep.subr.bf16.mxu0 0
        %1517 = vmatpush1.bf16.msra.mxu0 0
        %1518 = vmatprep.subr.bf16.mxu0 0
        %1519 = vmatpush1.bf16.msra.mxu0 0
        %1520 = vmatprep.subr.bf16.mxu0 0
        %1521 = vmatpush1.bf16.msra.mxu0 0
        %1522 = vmatprep.subr.bf16.mxu0 0
        %1523 = vmatpush1.bf16.msra.mxu0 0
        %1524 = vmatprep.subr.bf16.mxu0 0
        %1525 = vmatpush1.bf16.msra.mxu0 0
        %1526 = vmatprep.subr.bf16.mxu0 0
        %1527 = vmatpush1.bf16.msra.mxu0 0
        %1528 = vmatprep.subr.bf16.mxu0 0
        %1529 = vmatpush1.bf16.msra.mxu0 0
        %1530 = vmatprep.subr.bf16.mxu0 0
        %1531 = vmatpush1.bf16.msra.mxu0 0
        %1532 = vmatprep.subr.bf16.mxu0 0
        %1533 = vmatpush1.bf16.msra.mxu0 0
        %1534 = vmatprep.subr.bf16.mxu0 0
        %1535 = vmatpush1.bf16.msra.mxu0 0
        %1536 = vmatprep.mubr.bf16.mxu0 0
        %1537 = vmatmul.mubr.bf16.gmra.mrb[0].mxu0 %v1436
        %v1538 = vpop.f32.mrb[0].mxu0
        %v1539 = vadd.f32 %v1490, %v1538
        %v1540 = vpop.f32.mrb[0].mxu0
        %v1541 = vpop.f32.mrb[0].mxu0
        %v1542 = vadd.f32 %v1490, %v1541
        %v1543 = vpop.f32.mrb[0].mxu0
        %1544 = vdwg.mxu0
        %v1545 = vld [vmem:[%s946] sm:$0xf]
        %v1546 = vld [vmem:[%s946 + $0x4] sm:$0xf]
        %v1547 = vld [vmem:[%s946 + $0x8] sm:$0xf]
        %v1548 = vld [vmem:[%s946 + $0xc] sm:$0xf]
        %v1549 = vld [vmem:[%s958] sm:$0x1]
        %v1551 = vlaneseq
        %v1552 = vshrl.u32 %v1551, 7
        %v1553 = vsub.s32 0, %v1552
        %v1554 = vrot.slane %v1549, %v1553
        %v1560 = vunpack.c.l.b16 %v1545
        %v1561 = vunpack.c.l.b16 %v1546
        %v1562 = vunpack.c.l.b16 %v1547
        %v1563 = vunpack.c.l.b16 %v1548
        %v1564 = vpack.c.b16 %v1561, %v1560
        %v1565 = vpack.c.b16 %v1563, %v1562
        %1568 = vmatprep.subr.bf16.mxu0 0
        %1569 = vmatpush1.bf16.msra.mxu0 %v1564
        %1570 = vmatprep.subr.bf16.mxu0 0
        %1571 = vmatpush1.bf16.msra.mxu0 %v1565
        %1572 = vmatprep.subr.bf16.mxu0 0
        %1573 = vmatpush1.bf16.msra.mxu0 0
        %1574 = vmatprep.subr.bf16.mxu0 0
        %1575 = vmatpush1.bf16.msra.mxu0 0
        %1576 = vmatprep.subr.bf16.mxu0 0
        %1577 = vmatpush1.bf16.msra.mxu0 0
        %1578 = vmatprep.subr.bf16.mxu0 0
        %1579 = vmatpush1.bf16.msra.mxu0 0
        %1580 = vmatprep.subr.bf16.mxu0 0
        %1581 = vmatpush1.bf16.msra.mxu0 0
        %1582 = vmatprep.subr.bf16.mxu0 0
        %1583 = vmatpush1.bf16.msra.mxu0 0
        %1584 = vmatprep.subr.bf16.mxu0 0
        %1585 = vmatpush1.bf16.msra.mxu0 0
        %1586 = vmatprep.subr.bf16.mxu0 0
        %1587 = vmatpush1.bf16.msra.mxu0 0
        %1588 = vmatprep.subr.bf16.mxu0 0
        %1589 = vmatpush1.bf16.msra.mxu0 0
        %1590 = vmatprep.subr.bf16.mxu0 0
        %1591 = vmatpush1.bf16.msra.mxu0 0
        %1592 = vmatprep.subr.bf16.mxu0 0
        %1593 = vmatpush1.bf16.msra.mxu0 0
        %1594 = vmatprep.subr.bf16.mxu0 0
        %1595 = vmatpush1.bf16.msra.mxu0 0
        %1596 = vmatprep.subr.bf16.mxu0 0
        %1597 = vmatpush1.bf16.msra.mxu0 0
        %1598 = vmatprep.subr.bf16.mxu0 0
        %1599 = vmatpush1.bf16.msra.mxu0 0
        %1600 = vmatprep.mubr.bf16.mxu0 0
        %1601 = vmatmul.mubr.bf16.gmra.mrb[0].mxu0 %v1436
        %v1602 = vpop.f32.mrb[0].mxu0
        %v1603 = vadd.f32 %v1554, %v1602
        %v1604 = vpop.f32.mrb[0].mxu0
        %v1605 = vpop.f32.mrb[0].mxu0
        %v1606 = vadd.f32 %v1554, %v1605
        %v1607 = vpop.f32.mrb[0].mxu0
        %1608 = vdwg.mxu0
        %v1609 = vpack.c.bf16 %v1480, %v1479
        %v1610 = vpack.c.bf16 %v1542, %v1539
        %vm1611 = vcmask 64512
        %v1613 = vsel %vm1611, %v1609, 0
        %v1616 = vsel %vm1611, %v1610, 0
        %1618 = vmatprep.subr.bf16.mxu0 0
        %1619 = vmatpush1.bf16.xpose.msra.mxu0 %v1616
        %1620 = vmatprep.subr.bf16.mxu0 0
        %1621 = vmatpush1.bf16.xpose.msra.mxu0 0
        %1622 = vmatprep.subr.bf16.mxu0 0
        %1623 = vmatpush1.bf16.xpose.msra.mxu0 0
        %1624 = vmatprep.subr.bf16.mxu0 0
        %1625 = vmatpush1.bf16.xpose.msra.mxu0 0
        %1626 = vmatprep.subr.bf16.mxu0 0
        %1627 = vmatpush1.bf16.xpose.msra.mxu0 0
        %1628 = vmatprep.subr.bf16.mxu0 0
        %1629 = vmatpush1.bf16.xpose.msra.mxu0 0
        %1630 = vmatprep.subr.bf16.mxu0 0
        %1631 = vmatpush1.bf16.xpose.msra.mxu0 0
        %1632 = vmatprep.subr.bf16.mxu0 0
        %1633 = vmatpush1.bf16.xpose.msra.mxu0 0
        %1634 = vmatprep.subr.bf16.mxu0 0
        %1635 = vmatpush1.bf16.xpose.msra.mxu0 0
        %1636 = vmatprep.subr.bf16.mxu0 0
        %1637 = vmatpush1.bf16.xpose.msra.mxu0 0
        %1638 = vmatprep.subr.bf16.mxu0 0
        %1639 = vmatpush1.bf16.xpose.msra.mxu0 0
        %1640 = vmatprep.subr.bf16.mxu0 0
        %1641 = vmatpush1.bf16.xpose.msra.mxu0 0
        %1642 = vmatprep.subr.bf16.mxu0 0
        %1643 = vmatpush1.bf16.xpose.msra.mxu0 0
        %1644 = vmatprep.subr.bf16.mxu0 0
        %1645 = vmatpush1.bf16.xpose.msra.mxu0 0
        %1646 = vmatprep.subr.bf16.mxu0 0
        %1647 = vmatpush1.bf16.xpose.msra.mxu0 0
        %1648 = vmatprep.subr.bf16.mxu0 0
        %1649 = vmatpush1.bf16.xpose.msra.mxu0 0
        %1650 = vmatprep.mubr.bf16.mxu0 0
        %1651 = vmatmul.mubr.bf16.gmra.mrb[0].mxu0 %v1613
        %v1652 = vpop.f32.mrb[0].mxu0
        %v1653 = vadd.f32 0.0, %v1652
        %v1654 = vpop.f32.mrb[0].mxu0
        %v1655 = vpop.f32.mrb[0].mxu0
        %v1656 = vadd.f32 0.0, %v1655
        %v1657 = vpop.f32.mrb[0].mxu0
        %1658 = vdwg.mxu0
        %vm1659 = vcmask 72704
        %v1660 = vsel %vm1659, %v1653, -inf
        %1661 = vmax.xlane.f32.xlu0 %v1660
        %v1662 = vpop.xlane.xlu0 %1661
        %vm1663 = vcmask 65536
        %v1664 = vsel %vm1663, %v1656, -inf
        %1665 = vmax.xlane.f32.xlu0 %v1664
        %v1666 = vpop.xlane.xlu0 %1665
        %v1667 = vsub.f32 %v1653, %v1662
        %v1668 = vsub.f32 %v1656, %v1666
        %v1669 = vmul.f32 %v1667, 1.442695
        %v1670 = vpow.pop %v1669
        %v1671 = vmul.f32 %v1668, 1.442695
        %v1672 = vpow.pop %v1671
        %v1673 = vsel %vm1659, %v1670, 0.0
        %1674 = vadd.xlane.f32.xlu0 %v1673
        %v1675 = vpop.xlane.xlu0 %1674
        %v1676 = vsel %vm1663, %v1672, 0.0
        %1677 = vadd.xlane.f32.xlu0 %v1676
        %v1678 = vpop.xlane.xlu0 %1677
        %v1679 = vrcp.pop %v1675
        %v1680 = vrcp.pop %v1678
        %v1681 = vmul.f32 %v1670, %v1679
        %v1682 = vmul.f32 %v1672, %v1680
        %v1683 = vpack.c.bf16 %v1682, %v1681
        %v1684 = vpack.c.bf16 %v1606, %v1603
        %v1686 = vsel %vm1659, %v1683, 0
        %vm1688 = vcmask 1043456
        %vm1689 = vcmask 1044480
        %v1690 = vsel %vm1688, 4294967295, 65535
        %v1691 = vsel %vm1689, %v1690, 0
        %v1693 = vand.u32 %v1684, %v1691
        %1695 = vmatprep.subr.bf16.mxu0 0
        %1696 = vmatpush1.bf16.msra.mxu0 %v1693
        %1697 = vmatprep.subr.bf16.mxu0 0
        %1698 = vmatpush1.bf16.msra.mxu0 0
        %1699 = vmatprep.subr.bf16.mxu0 0
        %1700 = vmatpush1.bf16.msra.mxu0 0
        %1701 = vmatprep.subr.bf16.mxu0 0
        %1702 = vmatpush1.bf16.msra.mxu0 0
        %1703 = vmatprep.subr.bf16.mxu0 0
        %1704 = vmatpush1.bf16.msra.mxu0 0
        %1705 = vmatprep.subr.bf16.mxu0 0
        %1706 = vmatpush1.bf16.msra.mxu0 0
        %1707 = vmatprep.subr.bf16.mxu0 0
        %1708 = vmatpush1.bf16.msra.mxu0 0
        %1709 = vmatprep.subr.bf16.mxu0 0
        %1710 = vmatpush1.bf16.msra.mxu0 0
        %1711 = vmatprep.subr.bf16.mxu0 0
        %1712 = vmatpush1.bf16.msra.mxu0 0
        %1713 = vmatprep.subr.bf16.mxu0 0
        %1714 = vmatpush1.bf16.msra.mxu0 0
        %1715 = vmatprep.subr.bf16.mxu0 0
        %1716 = vmatpush1.bf16.msra.mxu0 0
        %1717 = vmatprep.subr.bf16.mxu0 0
        %1718 = vmatpush1.bf16.msra.mxu0 0
        %1719 = vmatprep.subr.bf16.mxu0 0
        %1720 = vmatpush1.bf16.msra.mxu0 0
        %1721 = vmatprep.subr.bf16.mxu0 0
        %1722 = vmatpush1.bf16.msra.mxu0 0
        %1723 = vmatprep.subr.bf16.mxu0 0
        %1724 = vmatpush1.bf16.msra.mxu0 0
        %1725 = vmatprep.subr.bf16.mxu0 0
        %1726 = vmatpush1.bf16.msra.mxu0 0
        %1727 = vmatprep.mubr.bf16.mxu0 0
        %1728 = vmatmul.mubr.bf16.gmra.mrb[0].mxu0 %v1686
        %v1729 = vpop.f32.mrb[0].mxu0
        %v1730 = vadd.f32 0.0, %v1729
        %v1731 = vpop.f32.mrb[0].mxu0
        %v1732 = vpop.f32.mrb[0].mxu0
        %v1733 = vadd.f32 0.0, %v1732
        %v1734 = vpop.f32.mrb[0].mxu0
        %1735 = vdwg.mxu0
        %v1736 = vpack.c.bf16 %v1733, %v1730
        %v1737 = vld [vmem:[%s963] sm:$0xf]
        %s1738 = scalar_lea.vmem %s936, 16
        %v1739 = vld [vmem:[%s1738] sm:$0xf]
        %v1740 = vld [vmem:[%s1738 + $0x4] sm:$0xf]
        %v1741 = vld [vmem:[%s1738 + $0x8] sm:$0xf]
        %v1742 = vld [vmem:[%s1738 + $0xc] sm:$0xf]
        %s1743 = scalar_lea.vmem %s950, 1
        %v1744 = vld [vmem:[%s1743] sm:$0x1]
        %v1746 = vlaneseq
        %v1747 = vshrl.u32 %v1746, 7
        %v1748 = vsub.s32 0, %v1747
        %v1749 = vrot.slane %v1744, %v1748
        %v1755 = vunpack.c.l.b16 %v1739
        %v1756 = vunpack.c.l.b16 %v1740
        %v1757 = vunpack.c.l.b16 %v1741
        %v1758 = vunpack.c.l.b16 %v1742
        %v1759 = vpack.c.b16 %v1756, %v1755
        %v1760 = vpack.c.b16 %v1758, %v1757
        %1763 = vmatprep.subr.bf16.mxu0 0
        %1764 = vmatpush1.bf16.msra.mxu0 %v1759
        %1765 = vmatprep.subr.bf16.mxu0 0
        %1766 = vmatpush1.bf16.msra.mxu0 %v1760
        %1767 = vmatprep.subr.bf16.mxu0 0
        %1768 = vmatpush1.bf16.msra.mxu0 0
        %1769 = vmatprep.subr.bf16.mxu0 0
        %1770 = vmatpush1.bf16.msra.mxu0 0
        %1771 = vmatprep.subr.bf16.mxu0 0
        %1772 = vmatpush1.bf16.msra.mxu0 0
        %1773 = vmatprep.subr.bf16.mxu0 0
        %1774 = vmatpush1.bf16.msra.mxu0 0
        %1775 = vmatprep.subr.bf16.mxu0 0
        %1776 = vmatpush1.bf16.msra.mxu0 0
        %1777 = vmatprep.subr.bf16.mxu0 0
        %1778 = vmatpush1.bf16.msra.mxu0 0
        %1779 = vmatprep.subr.bf16.mxu0 0
        %1780 = vmatpush1.bf16.msra.mxu0 0
        %1781 = vmatprep.subr.bf16.mxu0 0
        %1782 = vmatpush1.bf16.msra.mxu0 0
        %1783 = vmatprep.subr.bf16.mxu0 0
        %1784 = vmatpush1.bf16.msra.mxu0 0
        %1785 = vmatprep.subr.bf16.mxu0 0
        %1786 = vmatpush1.bf16.msra.mxu0 0
        %1787 = vmatprep.subr.bf16.mxu0 0
        %1788 = vmatpush1.bf16.msra.mxu0 0
        %1789 = vmatprep.subr.bf16.mxu0 0
        %1790 = vmatpush1.bf16.msra.mxu0 0
        %1791 = vmatprep.subr.bf16.mxu0 0
        %1792 = vmatpush1.bf16.msra.mxu0 0
        %1793 = vmatprep.subr.bf16.mxu0 0
        %1794 = vmatpush1.bf16.msra.mxu0 0
        %1795 = vmatprep.mubr.bf16.mxu0 0
        %1796 = vmatmul.mubr.bf16.gmra.mrb[0].mxu0 %v1436
        %v1797 = vpop.f32.mrb[0].mxu0
        %v1798 = vadd.f32 %v1749, %v1797
        %v1799 = vpop.f32.mrb[0].mxu0
        %v1800 = vpop.f32.mrb[0].mxu0
        %v1801 = vadd.f32 %v1749, %v1800
        %v1802 = vpop.f32.mrb[0].mxu0
        %1803 = vdwg.mxu0
        %v1804 = vmul.f32 %v1798, 0.35355338
        %v1805 = vmul.f32 %v1801, 0.35355338
        %s1806 = scalar_lea.vmem %s941, 16
        %v1807 = vld [vmem:[%s1806] sm:$0xf]
        %v1808 = vld [vmem:[%s1806 + $0x4] sm:$0xf]
        %v1809 = vld [vmem:[%s1806 + $0x8] sm:$0xf]
        %v1810 = vld [vmem:[%s1806 + $0xc] sm:$0xf]
        %s1811 = scalar_lea.vmem %s954, 1
        %v1812 = vld [vmem:[%s1811] sm:$0x1]
        %v1814 = vlaneseq
        %v1815 = vshrl.u32 %v1814, 7
        %v1816 = vsub.s32 0, %v1815
        %v1817 = vrot.slane %v1812, %v1816
        %v1823 = vunpack.c.l.b16 %v1807
        %v1824 = vunpack.c.l.b16 %v1808
        %v1825 = vunpack.c.l.b16 %v1809
        %v1826 = vunpack.c.l.b16 %v1810
        %v1827 = vpack.c.b16 %v1824, %v1823
        %v1828 = vpack.c.b16 %v1826, %v1825
        %1831 = vmatprep.subr.bf16.mxu0 0
        %1832 = vmatpush1.bf16.msra.mxu0 %v1827
        %1833 = vmatprep.subr.bf16.mxu0 0
        %1834 = vmatpush1.bf16.msra.mxu0 %v1828
        %1835 = vmatprep.subr.bf16.mxu0 0
        %1836 = vmatpush1.bf16.msra.mxu0 0
        %1837 = vmatprep.subr.bf16.mxu0 0
        %1838 = vmatpush1.bf16.msra.mxu0 0
        %1839 = vmatprep.subr.bf16.mxu0 0
        %1840 = vmatpush1.bf16.msra.mxu0 0
        %1841 = vmatprep.subr.bf16.mxu0 0
        %1842 = vmatpush1.bf16.msra.mxu0 0
        %1843 = vmatprep.subr.bf16.mxu0 0
        %1844 = vmatpush1.bf16.msra.mxu0 0
        %1845 = vmatprep.subr.bf16.mxu0 0
        %1846 = vmatpush1.bf16.msra.mxu0 0
        %1847 = vmatprep.subr.bf16.mxu0 0
        %1848 = vmatpush1.bf16.msra.mxu0 0
        %1849 = vmatprep.subr.bf16.mxu0 0
        %1850 = vmatpush1.bf16.msra.mxu0 0
        %1851 = vmatprep.subr.bf16.mxu0 0
        %1852 = vmatpush1.bf16.msra.mxu0 0
        %1853 = vmatprep.subr.bf16.mxu0 0
        %1854 = vmatpush1.bf16.msra.mxu0 0
        %1855 = vmatprep.subr.bf16.mxu0 0
        %1856 = vmatpush1.bf16.msra.mxu0 0
        %1857 = vmatprep.subr.bf16.mxu0 0
        %1858 = vmatpush1.bf16.msra.mxu0 0
        %1859 = vmatprep.subr.bf16.mxu0 0
        %1860 = vmatpush1.bf16.msra.mxu0 0
        %1861 = vmatprep.subr.bf16.mxu0 0
        %1862 = vmatpush1.bf16.msra.mxu0 0
        %1863 = vmatprep.mubr.bf16.mxu0 0
        %1864 = vmatmul.mubr.bf16.gmra.mrb[0].mxu0 %v1436
        %v1865 = vpop.f32.mrb[0].mxu0
        %v1866 = vadd.f32 %v1817, %v1865
        %v1867 = vpop.f32.mrb[0].mxu0
        %v1868 = vpop.f32.mrb[0].mxu0
        %v1869 = vadd.f32 %v1817, %v1868
        %v1870 = vpop.f32.mrb[0].mxu0
        %1871 = vdwg.mxu0
        %s1872 = scalar_lea.vmem %s946, 16
        %v1873 = vld [vmem:[%s1872] sm:$0xf]
        %v1874 = vld [vmem:[%s1872 + $0x4] sm:$0xf]
        %v1875 = vld [vmem:[%s1872 + $0x8] sm:$0xf]
        %v1876 = vld [vmem:[%s1872 + $0xc] sm:$0xf]
        %s1877 = scalar_lea.vmem %s958, 1
        %v1878 = vld [vmem:[%s1877] sm:$0x1]
        %v1880 = vlaneseq
        %v1881 = vshrl.u32 %v1880, 7
        %v1882 = vsub.s32 0, %v1881
        %v1883 = vrot.slane %v1878, %v1882
        %v1889 = vunpack.c.l.b16 %v1873
        %v1890 = vunpack.c.l.b16 %v1874
        %v1891 = vunpack.c.l.b16 %v1875
        %v1892 = vunpack.c.l.b16 %v1876
        %v1893 = vpack.c.b16 %v1890, %v1889
        %v1894 = vpack.c.b16 %v1892, %v1891
        %1897 = vmatprep.subr.bf16.mxu0 0
        %1898 = vmatpush1.bf16.msra.mxu0 %v1893
        %1899 = vmatprep.subr.bf16.mxu0 0
        %1900 = vmatpush1.bf16.msra.mxu0 %v1894
        %1901 = vmatprep.subr.bf16.mxu0 0
        %1902 = vmatpush1.bf16.msra.mxu0 0
        %1903 = vmatprep.subr.bf16.mxu0 0
        %1904 = vmatpush1.bf16.msra.mxu0 0
        %1905 = vmatprep.subr.bf16.mxu0 0
        %1906 = vmatpush1.bf16.msra.mxu0 0
        %1907 = vmatprep.subr.bf16.mxu0 0
        %1908 = vmatpush1.bf16.msra.mxu0 0
        %1909 = vmatprep.subr.bf16.mxu0 0
        %1910 = vmatpush1.bf16.msra.mxu0 0
        %1911 = vmatprep.subr.bf16.mxu0 0
        %1912 = vmatpush1.bf16.msra.mxu0 0
        %1913 = vmatprep.subr.bf16.mxu0 0
        %1914 = vmatpush1.bf16.msra.mxu0 0
        %1915 = vmatprep.subr.bf16.mxu0 0
        %1916 = vmatpush1.bf16.msra.mxu0 0
        %1917 = vmatprep.subr.bf16.mxu0 0
        %1918 = vmatpush1.bf16.msra.mxu0 0
        %1919 = vmatprep.subr.bf16.mxu0 0
        %1920 = vmatpush1.bf16.msra.mxu0 0
        %1921 = vmatprep.subr.bf16.mxu0 0
        %1922 = vmatpush1.bf16.msra.mxu0 0
        %1923 = vmatprep.subr.bf16.mxu0 0
        %1924 = vmatpush1.bf16.msra.mxu0 0
        %1925 = vmatprep.subr.bf16.mxu0 0
        %1926 = vmatpush1.bf16.msra.mxu0 0
        %1927 = vmatprep.subr.bf16.mxu0 0
        %1928 = vmatpush1.bf16.msra.mxu0 0
        %1929 = vmatprep.mubr.bf16.mxu0 0
        %1930 = vmatmul.mubr.bf16.gmra.mrb[0].mxu0 %v1436
        %v1931 = vpop.f32.mrb[0].mxu0
        %v1932 = vadd.f32 %v1883, %v1931
        %v1933 = vpop.f32.mrb[0].mxu0
        %v1934 = vpop.f32.mrb[0].mxu0
        %v1935 = vadd.f32 %v1883, %v1934
        %v1936 = vpop.f32.mrb[0].mxu0
        %1937 = vdwg.mxu0
        %v1938 = vpack.c.bf16 %v1805, %v1804
        %v1939 = vpack.c.bf16 %v1869, %v1866
        %v1941 = vsel %vm1611, %v1938, 0
        %v1944 = vsel %vm1611, %v1939, 0
        %1946 = vmatprep.subr.bf16.mxu0 0
        %1947 = vmatpush1.bf16.xpose.msra.mxu0 %v1944
        %1948 = vmatprep.subr.bf16.mxu0 0
        %1949 = vmatpush1.bf16.xpose.msra.mxu0 0
        %1950 = vmatprep.subr.bf16.mxu0 0
        %1951 = vmatpush1.bf16.xpose.msra.mxu0 0
        %1952 = vmatprep.subr.bf16.mxu0 0
        %1953 = vmatpush1.bf16.xpose.msra.mxu0 0
        %1954 = vmatprep.subr.bf16.mxu0 0
        %1955 = vmatpush1.bf16.xpose.msra.mxu0 0
        %1956 = vmatprep.subr.bf16.mxu0 0
        %1957 = vmatpush1.bf16.xpose.msra.mxu0 0
        %1958 = vmatprep.subr.bf16.mxu0 0
        %1959 = vmatpush1.bf16.xpose.msra.mxu0 0
        %1960 = vmatprep.subr.bf16.mxu0 0
        %1961 = vmatpush1.bf16.xpose.msra.mxu0 0
        %1962 = vmatprep.subr.bf16.mxu0 0
        %1963 = vmatpush1.bf16.xpose.msra.mxu0 0
        %1964 = vmatprep.subr.bf16.mxu0 0
        %1965 = vmatpush1.bf16.xpose.msra.mxu0 0
        %1966 = vmatprep.subr.bf16.mxu0 0
        %1967 = vmatpush1.bf16.xpose.msra.mxu0 0
        %1968 = vmatprep.subr.bf16.mxu0 0
        %1969 = vmatpush1.bf16.xpose.msra.mxu0 0
        %1970 = vmatprep.subr.bf16.mxu0 0
        %1971 = vmatpush1.bf16.xpose.msra.mxu0 0
        %1972 = vmatprep.subr.bf16.mxu0 0
        %1973 = vmatpush1.bf16.xpose.msra.mxu0 0
        %1974 = vmatprep.subr.bf16.mxu0 0
        %1975 = vmatpush1.bf16.xpose.msra.mxu0 0
        %1976 = vmatprep.subr.bf16.mxu0 0
        %1977 = vmatpush1.bf16.xpose.msra.mxu0 0
        %1978 = vmatprep.mubr.bf16.mxu0 0
        %1979 = vmatmul.mubr.bf16.gmra.mrb[0].mxu0 %v1941
        %v1980 = vpop.f32.mrb[0].mxu0
        %v1981 = vadd.f32 0.0, %v1980
        %v1982 = vpop.f32.mrb[0].mxu0
        %v1983 = vpop.f32.mrb[0].mxu0
        %v1984 = vadd.f32 0.0, %v1983
        %v1985 = vpop.f32.mrb[0].mxu0
        %1986 = vdwg.mxu0
        %v1987 = vsel %vm1659, %v1981, -inf
        %1988 = vmax.xlane.f32.xlu0 %v1987
        %v1989 = vpop.xlane.xlu0 %1988
        %v1990 = vsel %vm1663, %v1984, -inf
        %1991 = vmax.xlane.f32.xlu0 %v1990
        %v1992 = vpop.xlane.xlu0 %1991
        %v1993 = vsub.f32 %v1981, %v1989
        %v1994 = vsub.f32 %v1984, %v1992
        %v1995 = vmul.f32 %v1993, 1.442695
        %v1996 = vpow.pop %v1995
        %v1997 = vmul.f32 %v1994, 1.442695
        %v1998 = vpow.pop %v1997
        %v1999 = vsel %vm1659, %v1996, 0.0
        %2000 = vadd.xlane.f32.xlu0 %v1999
        %v2001 = vpop.xlane.xlu0 %2000
        %v2002 = vsel %vm1663, %v1998, 0.0
        %2003 = vadd.xlane.f32.xlu0 %v2002
        %v2004 = vpop.xlane.xlu0 %2003
        %v2005 = vrcp.pop %v2001
        %v2006 = vrcp.pop %v2004
        %v2007 = vmul.f32 %v1996, %v2005
        %v2008 = vmul.f32 %v1998, %v2006
        %v2009 = vpack.c.bf16 %v2008, %v2007
        %v2010 = vpack.c.bf16 %v1935, %v1932
        %v2012 = vsel %vm1659, %v2009, 0
        %v2015 = vand.u32 %v2010, %v1691
        %2017 = vmatprep.subr.bf16.mxu0 0
        %2018 = vmatpush1.bf16.msra.mxu0 %v2015
        %2019 = vmatprep.subr.bf16.mxu0 0
        %2020 = vmatpush1.bf16.msra.mxu0 0
        %2021 = vmatprep.subr.bf16.mxu0 0
        %2022 = vmatpush1.bf16.msra.mxu0 0
        %2023 = vmatprep.subr.bf16.mxu0 0
        %2024 = vmatpush1.bf16.msra.mxu0 0
        %2025 = vmatprep.subr.bf16.mxu0 0
        %2026 = vmatpush1.bf16.msra.mxu0 0
        %2027 = vmatprep.subr.bf16.mxu0 0
        %2028 = vmatpush1.bf16.msra.mxu0 0
        %2029 = vmatprep.subr.bf16.mxu0 0
        %2030 = vmatpush1.bf16.msra.mxu0 0
        %2031 = vmatprep.subr.bf16.mxu0 0
        %2032 = vmatpush1.bf16.msra.mxu0 0
        %2033 = vmatprep.subr.bf16.mxu0 0
        %2034 = vmatpush1.bf16.msra.mxu0 0
        %2035 = vmatprep.subr.bf16.mxu0 0
        %2036 = vmatpush1.bf16.msra.mxu0 0
        %2037 = vmatprep.subr.bf16.mxu0 0
        %2038 = vmatpush1.bf16.msra.mxu0 0
        %2039 = vmatprep.subr.bf16.mxu0 0
        %2040 = vmatpush1.bf16.msra.mxu0 0
        %2041 = vmatprep.subr.bf16.mxu0 0
        %2042 = vmatpush1.bf16.msra.mxu0 0
        %2043 = vmatprep.subr.bf16.mxu0 0
        %2044 = vmatpush1.bf16.msra.mxu0 0
        %2045 = vmatprep.subr.bf16.mxu0 0
        %2046 = vmatpush1.bf16.msra.mxu0 0
        %2047 = vmatprep.subr.bf16.mxu0 0
        %2048 = vmatpush1.bf16.msra.mxu0 0
        %2049 = vmatprep.mubr.bf16.mxu0 0
        %2050 = vmatmul.mubr.bf16.gmra.mrb[0].mxu0 %v2012
        %v2051 = vpop.f32.mrb[0].mxu0
        %v2052 = vadd.f32 0.0, %v2051
        %v2053 = vpop.f32.mrb[0].mxu0
        %v2054 = vpop.f32.mrb[0].mxu0
        %v2055 = vadd.f32 0.0, %v2054
        %v2056 = vpop.f32.mrb[0].mxu0
        %2057 = vdwg.mxu0
        %v2058 = vpack.c.bf16 %v2055, %v2052
        %s2059 = scalar_lea.vmem %s963, 4
        %v2060 = vld [vmem:[%s2059] sm:$0xf]
        %v2062 = vsel %vm1611, %v2058, 0
        %v2065 = vsel %vm1688, %v2060, 0
        %2067 = vmatprep.subr.bf16.mxu0 0
        %2068 = vmatpush1.bf16.msra.mxu0 %v2065
        %2069 = vmatprep.subr.bf16.mxu0 0
        %2070 = vmatpush1.bf16.msra.mxu0 0
        %2071 = vmatprep.subr.bf16.mxu0 0
        %2072 = vmatpush1.bf16.msra.mxu0 0
        %2073 = vmatprep.subr.bf16.mxu0 0
        %2074 = vmatpush1.bf16.msra.mxu0 0
        %2075 = vmatprep.subr.bf16.mxu0 0
        %2076 = vmatpush1.bf16.msra.mxu0 0
        %2077 = vmatprep.subr.bf16.mxu0 0
        %2078 = vmatpush1.bf16.msra.mxu0 0
        %2079 = vmatprep.subr.bf16.mxu0 0
        %2080 = vmatpush1.bf16.msra.mxu0 0
        %2081 = vmatprep.subr.bf16.mxu0 0
        %2082 = vmatpush1.bf16.msra.mxu0 0
        %2083 = vmatprep.subr.bf16.mxu0 0
        %2084 = vmatpush1.bf16.msra.mxu0 0
        %2085 = vmatprep.subr.bf16.mxu0 0
        %2086 = vmatpush1.bf16.msra.mxu0 0
        %2087 = vmatprep.subr.bf16.mxu0 0
        %2088 = vmatpush1.bf16.msra.mxu0 0
        %2089 = vmatprep.subr.bf16.mxu0 0
        %2090 = vmatpush1.bf16.msra.mxu0 0
        %2091 = vmatprep.subr.bf16.mxu0 0
        %2092 = vmatpush1.bf16.msra.mxu0 0
        %2093 = vmatprep.subr.bf16.mxu0 0
        %2094 = vmatpush1.bf16.msra.mxu0 0
        %2095 = vmatprep.subr.bf16.mxu0 0
        %2096 = vmatpush1.bf16.msra.mxu0 0
        %2097 = vmatprep.subr.bf16.mxu0 0
        %2098 = vmatpush1.bf16.msra.mxu0 0
        %2099 = vmatprep.mubr.bf16.mxu0 0
        %2100 = vmatmul.mubr.bf16.gmra.mrb[0].mxu0 %v2062
        %v2101 = vpop.f32.mrb[0].mxu0
        %v2102 = vadd.f32 0.0, %v2101
        %v2103 = vpop.f32.mrb[0].mxu0
        %v2104 = vpop.f32.mrb[0].mxu0
        %v2105 = vadd.f32 0.0, %v2104
        %v2106 = vpop.f32.mrb[0].mxu0
        %2107 = vdwg.mxu0
        %v2109 = vsel %vm1611, %v1736, 0
        %v2112 = vsel %vm1688, %v1737, 0
        %2114 = vmatprep.subr.bf16.mxu0 0
        %2115 = vmatpush1.bf16.msra.mxu0 %v2112
        %2116 = vmatprep.subr.bf16.mxu0 0
        %2117 = vmatpush1.bf16.msra.mxu0 0
        %2118 = vmatprep.subr.bf16.mxu0 0
        %2119 = vmatpush1.bf16.msra.mxu0 0
        %2120 = vmatprep.subr.bf16.mxu0 0
        %2121 = vmatpush1.bf16.msra.mxu0 0
        %2122 = vmatprep.subr.bf16.mxu0 0
        %2123 = vmatpush1.bf16.msra.mxu0 0
        %2124 = vmatprep.subr.bf16.mxu0 0
        %2125 = vmatpush1.bf16.msra.mxu0 0
        %2126 = vmatprep.subr.bf16.mxu0 0
        %2127 = vmatpush1.bf16.msra.mxu0 0
        %2128 = vmatprep.subr.bf16.mxu0 0
        %2129 = vmatpush1.bf16.msra.mxu0 0
        %2130 = vmatprep.subr.bf16.mxu0 0
        %2131 = vmatpush1.bf16.msra.mxu0 0
        %2132 = vmatprep.subr.bf16.mxu0 0
        %2133 = vmatpush1.bf16.msra.mxu0 0
        %2134 = vmatprep.subr.bf16.mxu0 0
        %2135 = vmatpush1.bf16.msra.mxu0 0
        %2136 = vmatprep.subr.bf16.mxu0 0
        %2137 = vmatpush1.bf16.msra.mxu0 0
        %2138 = vmatprep.subr.bf16.mxu0 0
        %2139 = vmatpush1.bf16.msra.mxu0 0
        %2140 = vmatprep.subr.bf16.mxu0 0
        %2141 = vmatpush1.bf16.msra.mxu0 0
        %2142 = vmatprep.subr.bf16.mxu0 0
        %2143 = vmatpush1.bf16.msra.mxu0 0
        %2144 = vmatprep.subr.bf16.mxu0 0
        %2145 = vmatpush1.bf16.msra.mxu0 0
        %2146 = vmatprep.mubr.bf16.mxu0 0
        %2147 = vmatmul.mubr.bf16.gmra.mrb[0].mxu0 %v2109
        %v2148 = vpop.f32.mrb[0].mxu0
        %v2149 = vadd.f32 %v2102, %v2148
        %v2150 = vpop.f32.mrb[0].mxu0
        %v2151 = vpop.f32.mrb[0].mxu0
        %v2152 = vadd.f32 %v2105, %v2151
        %v2153 = vpop.f32.mrb[0].mxu0
        %2154 = vdwg.mxu0
        %s2155 = scalar_lea.vmem %s936, 32
        %v2156 = vld [vmem:[%s2155] sm:$0xf]
        %v2157 = vld [vmem:[%s2155 + $0x4] sm:$0xf]
        %v2158 = vld [vmem:[%s2155 + $0x8] sm:$0xf]
        %v2159 = vld [vmem:[%s2155 + $0xc] sm:$0xf]
        %s2160 = scalar_lea.vmem %s950, 2
        %v2161 = vld [vmem:[%s2160] sm:$0x1]
        %v2163 = vlaneseq
        %v2164 = vshrl.u32 %v2163, 7
        %v2165 = vsub.s32 0, %v2164
        %v2166 = vrot.slane %v2161, %v2165
        %v2172 = vunpack.c.l.b16 %v2156
        %v2173 = vunpack.c.l.b16 %v2157
        %v2174 = vunpack.c.l.b16 %v2158
        %v2175 = vunpack.c.l.b16 %v2159
        %v2176 = vpack.c.b16 %v2173, %v2172
        %v2177 = vpack.c.b16 %v2175, %v2174
        %2180 = vmatprep.subr.bf16.mxu0 0
        %2181 = vmatpush1.bf16.msra.mxu0 %v2176
        %2182 = vmatprep.subr.bf16.mxu0 0
        %2183 = vmatpush1.bf16.msra.mxu0 %v2177
        %2184 = vmatprep.subr.bf16.mxu0 0
        %2185 = vmatpush1.bf16.msra.mxu0 0
        %2186 = vmatprep.subr.bf16.mxu0 0
        %2187 = vmatpush1.bf16.msra.mxu0 0
        %2188 = vmatprep.subr.bf16.mxu0 0
        %2189 = vmatpush1.bf16.msra.mxu0 0
        %2190 = vmatprep.subr.bf16.mxu0 0
        %2191 = vmatpush1.bf16.msra.mxu0 0
        %2192 = vmatprep.subr.bf16.mxu0 0
        %2193 = vmatpush1.bf16.msra.mxu0 0
        %2194 = vmatprep.subr.bf16.mxu0 0
        %2195 = vmatpush1.bf16.msra.mxu0 0
        %2196 = vmatprep.subr.bf16.mxu0 0
        %2197 = vmatpush1.bf16.msra.mxu0 0
        %2198 = vmatprep.subr.bf16.mxu0 0
        %2199 = vmatpush1.bf16.msra.mxu0 0
        %2200 = vmatprep.subr.bf16.mxu0 0
        %2201 = vmatpush1.bf16.msra.mxu0 0
        %2202 = vmatprep.subr.bf16.mxu0 0
        %2203 = vmatpush1.bf16.msra.mxu0 0
        %2204 = vmatprep.subr.bf16.mxu0 0
        %2205 = vmatpush1.bf16.msra.mxu0 0
        %2206 = vmatprep.subr.bf16.mxu0 0
        %2207 = vmatpush1.bf16.msra.mxu0 0
        %2208 = vmatprep.subr.bf16.mxu0 0
        %2209 = vmatpush1.bf16.msra.mxu0 0
        %2210 = vmatprep.subr.bf16.mxu0 0
        %2211 = vmatpush1.bf16.msra.mxu0 0
        %2212 = vmatprep.mubr.bf16.mxu0 0
        %2213 = vmatmul.mubr.bf16.gmra.mrb[0].mxu0 %v1436
        %v2214 = vpop.f32.mrb[0].mxu0
        %v2215 = vadd.f32 %v2166, %v2214
        %v2216 = vpop.f32.mrb[0].mxu0
        %v2217 = vpop.f32.mrb[0].mxu0
        %v2218 = vadd.f32 %v2166, %v2217
        %v2219 = vpop.f32.mrb[0].mxu0
        %2220 = vdwg.mxu0
        %v2221 = vmul.f32 %v2215, 0.35355338
        %v2222 = vmul.f32 %v2218, 0.35355338
        %s2223 = scalar_lea.vmem %s941, 32
        %v2224 = vld [vmem:[%s2223] sm:$0xf]
        %v2225 = vld [vmem:[%s2223 + $0x4] sm:$0xf]
        %v2226 = vld [vmem:[%s2223 + $0x8] sm:$0xf]
        %v2227 = vld [vmem:[%s2223 + $0xc] sm:$0xf]
        %s2228 = scalar_lea.vmem %s954, 2
        %v2229 = vld [vmem:[%s2228] sm:$0x1]
        %v2231 = vlaneseq
        %v2232 = vshrl.u32 %v2231, 7
        %v2233 = vsub.s32 0, %v2232
        %v2234 = vrot.slane %v2229, %v2233
        %v2240 = vunpack.c.l.b16 %v2224
        %v2241 = vunpack.c.l.b16 %v2225
        %v2242 = vunpack.c.l.b16 %v2226
        %v2243 = vunpack.c.l.b16 %v2227
        %v2244 = vpack.c.b16 %v2241, %v2240
        %v2245 = vpack.c.b16 %v2243, %v2242
        %2248 = vmatprep.subr.bf16.mxu0 0
        %2249 = vmatpush1.bf16.msra.mxu0 %v2244
        %2250 = vmatprep.subr.bf16.mxu0 0
        %2251 = vmatpush1.bf16.msra.mxu0 %v2245
        %2252 = vmatprep.subr.bf16.mxu0 0
        %2253 = vmatpush1.bf16.msra.mxu0 0
        %2254 = vmatprep.subr.bf16.mxu0 0
        %2255 = vmatpush1.bf16.msra.mxu0 0
        %2256 = vmatprep.subr.bf16.mxu0 0
        %2257 = vmatpush1.bf16.msra.mxu0 0
        %2258 = vmatprep.subr.bf16.mxu0 0
        %2259 = vmatpush1.bf16.msra.mxu0 0
        %2260 = vmatprep.subr.bf16.mxu0 0
        %2261 = vmatpush1.bf16.msra.mxu0 0
        %2262 = vmatprep.subr.bf16.mxu0 0
        %2263 = vmatpush1.bf16.msra.mxu0 0
        %2264 = vmatprep.subr.bf16.mxu0 0
        %2265 = vmatpush1.bf16.msra.mxu0 0
        %2266 = vmatprep.subr.bf16.mxu0 0
        %2267 = vmatpush1.bf16.msra.mxu0 0
        %2268 = vmatprep.subr.bf16.mxu0 0
        %2269 = vmatpush1.bf16.msra.mxu0 0
        %2270 = vmatprep.subr.bf16.mxu0 0
        %2271 = vmatpush1.bf16.msra.mxu0 0
        %2272 = vmatprep.subr.bf16.mxu0 0
        %2273 = vmatpush1.bf16.msra.mxu0 0
        %2274 = vmatprep.subr.bf16.mxu0 0
        %2275 = vmatpush1.bf16.msra.mxu0 0
        %2276 = vmatprep.subr.bf16.mxu0 0
        %2277 = vmatpush1.bf16.msra.mxu0 0
        %2278 = vmatprep.subr.bf16.mxu0 0
        %2279 = vmatpush1.bf16.msra.mxu0 0
        %2280 = vmatprep.mubr.bf16.mxu0 0
        %2281 = vmatmul.mubr.bf16.gmra.mrb[0].mxu0 %v1436
        %v2282 = vpop.f32.mrb[0].mxu0
        %v2283 = vadd.f32 %v2234, %v2282
        %v2284 = vpop.f32.mrb[0].mxu0
        %v2285 = vpop.f32.mrb[0].mxu0
        %v2286 = vadd.f32 %v2234, %v2285
        %v2287 = vpop.f32.mrb[0].mxu0
        %2288 = vdwg.mxu0
        %s2289 = scalar_lea.vmem %s946, 32
        %v2290 = vld [vmem:[%s2289] sm:$0xf]
        %v2291 = vld [vmem:[%s2289 + $0x4] sm:$0xf]
        %v2292 = vld [vmem:[%s2289 + $0x8] sm:$0xf]
        %v2293 = vld [vmem:[%s2289 + $0xc] sm:$0xf]
        %s2294 = scalar_lea.vmem %s958, 2
        %v2295 = vld [vmem:[%s2294] sm:$0x1]
        %v2297 = vlaneseq
        %v2298 = vshrl.u32 %v2297, 7
        %v2299 = vsub.s32 0, %v2298
        %v2300 = vrot.slane %v2295, %v2299
        %v2306 = vunpack.c.l.b16 %v2290
        %v2307 = vunpack.c.l.b16 %v2291
        %v2308 = vunpack.c.l.b16 %v2292
        %v2309 = vunpack.c.l.b16 %v2293
        %v2310 = vpack.c.b16 %v2307, %v2306
        %v2311 = vpack.c.b16 %v2309, %v2308
        %2314 = vmatprep.subr.bf16.mxu0 0
        %2315 = vmatpush1.bf16.msra.mxu0 %v2310
        %2316 = vmatprep.subr.bf16.mxu0 0
        %2317 = vmatpush1.bf16.msra.mxu0 %v2311
        %2318 = vmatprep.subr.bf16.mxu0 0
        %2319 = vmatpush1.bf16.msra.mxu0 0
        %2320 = vmatprep.subr.bf16.mxu0 0
        %2321 = vmatpush1.bf16.msra.mxu0 0
        %2322 = vmatprep.subr.bf16.mxu0 0
        %2323 = vmatpush1.bf16.msra.mxu0 0
        %2324 = vmatprep.subr.bf16.mxu0 0
        %2325 = vmatpush1.bf16.msra.mxu0 0
        %2326 = vmatprep.subr.bf16.mxu0 0
        %2327 = vmatpush1.bf16.msra.mxu0 0
        %2328 = vmatprep.subr.bf16.mxu0 0
        %2329 = vmatpush1.bf16.msra.mxu0 0
        %2330 = vmatprep.subr.bf16.mxu0 0
        %2331 = vmatpush1.bf16.msra.mxu0 0
        %2332 = vmatprep.subr.bf16.mxu0 0
        %2333 = vmatpush1.bf16.msra.mxu0 0
        %2334 = vmatprep.subr.bf16.mxu0 0
        %2335 = vmatpush1.bf16.msra.mxu0 0
        %2336 = vmatprep.subr.bf16.mxu0 0
        %2337 = vmatpush1.bf16.msra.mxu0 0
        %2338 = vmatprep.subr.bf16.mxu0 0
        %2339 = vmatpush1.bf16.msra.mxu0 0
        %2340 = vmatprep.subr.bf16.mxu0 0
        %2341 = vmatpush1.bf16.msra.mxu0 0
        %2342 = vmatprep.subr.bf16.mxu0 0
        %2343 = vmatpush1.bf16.msra.mxu0 0
        %2344 = vmatprep.subr.bf16.mxu0 0
        %2345 = vmatpush1.bf16.msra.mxu0 0
        %2346 = vmatprep.mubr.bf16.mxu0 0
        %2347 = vmatmul.mubr.bf16.gmra.mrb[0].mxu0 %v1436
        %v2348 = vpop.f32.mrb[0].mxu0
        %v2349 = vadd.f32 %v2300, %v2348
        %v2350 = vpop.f32.mrb[0].mxu0
        %v2351 = vpop.f32.mrb[0].mxu0
        %v2352 = vadd.f32 %v2300, %v2351
        %v2353 = vpop.f32.mrb[0].mxu0
        %2354 = vdwg.mxu0
        %v2355 = vpack.c.bf16 %v2222, %v2221
        %v2356 = vpack.c.bf16 %v2286, %v2283
        %v2358 = vsel %vm1611, %v2355, 0
        %v2361 = vsel %vm1611, %v2356, 0
        %2363 = vmatprep.subr.bf16.mxu0 0
        %2364 = vmatpush1.bf16.xpose.msra.mxu0 %v2361
        %2365 = vmatprep.subr.bf16.mxu0 0
        %2366 = vmatpush1.bf16.xpose.msra.mxu0 0
        %2367 = vmatprep.subr.bf16.mxu0 0
        %2368 = vmatpush1.bf16.xpose.msra.mxu0 0
        %2369 = vmatprep.subr.bf16.mxu0 0
        %2370 = vmatpush1.bf16.xpose.msra.mxu0 0
        %2371 = vmatprep.subr.bf16.mxu0 0
        %2372 = vmatpush1.bf16.xpose.msra.mxu0 0
        %2373 = vmatprep.subr.bf16.mxu0 0
        %2374 = vmatpush1.bf16.xpose.msra.mxu0 0
        %2375 = vmatprep.subr.bf16.mxu0 0
        %2376 = vmatpush1.bf16.xpose.msra.mxu0 0
        %2377 = vmatprep.subr.bf16.mxu0 0
        %2378 = vmatpush1.bf16.xpose.msra.mxu0 0
        %2379 = vmatprep.subr.bf16.mxu0 0
        %2380 = vmatpush1.bf16.xpose.msra.mxu0 0
        %2381 = vmatprep.subr.bf16.mxu0 0
        %2382 = vmatpush1.bf16.xpose.msra.mxu0 0
        %2383 = vmatprep.subr.bf16.mxu0 0
        %2384 = vmatpush1.bf16.xpose.msra.mxu0 0
        %2385 = vmatprep.subr.bf16.mxu0 0
        %2386 = vmatpush1.bf16.xpose.msra.mxu0 0
        %2387 = vmatprep.subr.bf16.mxu0 0
        %2388 = vmatpush1.bf16.xpose.msra.mxu0 0
        %2389 = vmatprep.subr.bf16.mxu0 0
        %2390 = vmatpush1.bf16.xpose.msra.mxu0 0
        %2391 = vmatprep.subr.bf16.mxu0 0
        %2392 = vmatpush1.bf16.xpose.msra.mxu0 0
        %2393 = vmatprep.subr.bf16.mxu0 0
        %2394 = vmatpush1.bf16.xpose.msra.mxu0 0
        %2395 = vmatprep.mubr.bf16.mxu0 0
        %2396 = vmatmul.mubr.bf16.gmra.mrb[0].mxu0 %v2358
        %v2397 = vpop.f32.mrb[0].mxu0
        %v2398 = vadd.f32 0.0, %v2397
        %v2399 = vpop.f32.mrb[0].mxu0
        %v2400 = vpop.f32.mrb[0].mxu0
        %v2401 = vadd.f32 0.0, %v2400
        %v2402 = vpop.f32.mrb[0].mxu0
        %2403 = vdwg.mxu0
        %v2404 = vsel %vm1659, %v2398, -inf
        %2405 = vmax.xlane.f32.xlu0 %v2404
        %v2406 = vpop.xlane.xlu0 %2405
        %v2407 = vsel %vm1663, %v2401, -inf
        %2408 = vmax.xlane.f32.xlu0 %v2407
        %v2409 = vpop.xlane.xlu0 %2408
        %v2410 = vsub.f32 %v2398, %v2406
        %v2411 = vsub.f32 %v2401, %v2409
        %v2412 = vmul.f32 %v2410, 1.442695
        %v2413 = vpow.pop %v2412
        %v2414 = vmul.f32 %v2411, 1.442695
        %v2415 = vpow.pop %v2414
        %v2416 = vsel %vm1659, %v2413, 0.0
        %2417 = vadd.xlane.f32.xlu0 %v2416
        %v2418 = vpop.xlane.xlu0 %2417
        %v2419 = vsel %vm1663, %v2415, 0.0
        %2420 = vadd.xlane.f32.xlu0 %v2419
        %v2421 = vpop.xlane.xlu0 %2420
        %v2422 = vrcp.pop %v2418
        %v2423 = vrcp.pop %v2421
        %v2424 = vmul.f32 %v2413, %v2422
        %v2425 = vmul.f32 %v2415, %v2423
        %v2426 = vpack.c.bf16 %v2425, %v2424
        %v2427 = vpack.c.bf16 %v2352, %v2349
        %v2429 = vsel %vm1659, %v2426, 0
        %v2432 = vand.u32 %v2427, %v1691
        %2434 = vmatprep.subr.bf16.mxu0 0
        %2435 = vmatpush1.bf16.msra.mxu0 %v2432
        %2436 = vmatprep.subr.bf16.mxu0 0
        %2437 = vmatpush1.bf16.msra.mxu0 0
        %2438 = vmatprep.subr.bf16.mxu0 0
        %2439 = vmatpush1.bf16.msra.mxu0 0
        %2440 = vmatprep.subr.bf16.mxu0 0
        %2441 = vmatpush1.bf16.msra.mxu0 0
        %2442 = vmatprep.subr.bf16.mxu0 0
        %2443 = vmatpush1.bf16.msra.mxu0 0
        %2444 = vmatprep.subr.bf16.mxu0 0
        %2445 = vmatpush1.bf16.msra.mxu0 0
        %2446 = vmatprep.subr.bf16.mxu0 0
        %2447 = vmatpush1.bf16.msra.mxu0 0
        %2448 = vmatprep.subr.bf16.mxu0 0
        %2449 = vmatpush1.bf16.msra.mxu0 0
        %2450 = vmatprep.subr.bf16.mxu0 0
        %2451 = vmatpush1.bf16.msra.mxu0 0
        %2452 = vmatprep.subr.bf16.mxu0 0
        %2453 = vmatpush1.bf16.msra.mxu0 0
        %2454 = vmatprep.subr.bf16.mxu0 0
        %2455 = vmatpush1.bf16.msra.mxu0 0
        %2456 = vmatprep.subr.bf16.mxu0 0
        %2457 = vmatpush1.bf16.msra.mxu0 0
        %2458 = vmatprep.subr.bf16.mxu0 0
        %2459 = vmatpush1.bf16.msra.mxu0 0
        %2460 = vmatprep.subr.bf16.mxu0 0
        %2461 = vmatpush1.bf16.msra.mxu0 0
        %2462 = vmatprep.subr.bf16.mxu0 0
        %2463 = vmatpush1.bf16.msra.mxu0 0
        %2464 = vmatprep.subr.bf16.mxu0 0
        %2465 = vmatpush1.bf16.msra.mxu0 0
        %2466 = vmatprep.mubr.bf16.mxu0 0
        %2467 = vmatmul.mubr.bf16.gmra.mrb[0].mxu0 %v2429
        %v2468 = vpop.f32.mrb[0].mxu0
        %v2469 = vadd.f32 0.0, %v2468
        %v2470 = vpop.f32.mrb[0].mxu0
        %v2471 = vpop.f32.mrb[0].mxu0
        %v2472 = vadd.f32 0.0, %v2471
        %v2473 = vpop.f32.mrb[0].mxu0
        %2474 = vdwg.mxu0
        %v2475 = vpack.c.bf16 %v2472, %v2469
        %s2476 = scalar_lea.vmem %s963, 8
        %v2477 = vld [vmem:[%s2476] sm:$0xf]
        %v2479 = vsel %vm1611, %v2475, 0
        %v2482 = vsel %vm1688, %v2477, 0
        %2484 = vmatprep.subr.bf16.mxu0 0
        %2485 = vmatpush1.bf16.msra.mxu0 %v2482
        %2486 = vmatprep.subr.bf16.mxu0 0
        %2487 = vmatpush1.bf16.msra.mxu0 0
        %2488 = vmatprep.subr.bf16.mxu0 0
        %2489 = vmatpush1.bf16.msra.mxu0 0
        %2490 = vmatprep.subr.bf16.mxu0 0
        %2491 = vmatpush1.bf16.msra.mxu0 0
        %2492 = vmatprep.subr.bf16.mxu0 0
        %2493 = vmatpush1.bf16.msra.mxu0 0
        %2494 = vmatprep.subr.bf16.mxu0 0
        %2495 = vmatpush1.bf16.msra.mxu0 0
        %2496 = vmatprep.subr.bf16.mxu0 0
        %2497 = vmatpush1.bf16.msra.mxu0 0
        %2498 = vmatprep.subr.bf16.mxu0 0
        %2499 = vmatpush1.bf16.msra.mxu0 0
        %2500 = vmatprep.subr.bf16.mxu0 0
        %2501 = vmatpush1.bf16.msra.mxu0 0
        %2502 = vmatprep.subr.bf16.mxu0 0
        %2503 = vmatpush1.bf16.msra.mxu0 0
        %2504 = vmatprep.subr.bf16.mxu0 0
        %2505 = vmatpush1.bf16.msra.mxu0 0
        %2506 = vmatprep.subr.bf16.mxu0 0
        %2507 = vmatpush1.bf16.msra.mxu0 0
        %2508 = vmatprep.subr.bf16.mxu0 0
        %2509 = vmatpush1.bf16.msra.mxu0 0
        %2510 = vmatprep.subr.bf16.mxu0 0
        %2511 = vmatpush1.bf16.msra.mxu0 0
        %2512 = vmatprep.subr.bf16.mxu0 0
        %2513 = vmatpush1.bf16.msra.mxu0 0
        %2514 = vmatprep.subr.bf16.mxu0 0
        %2515 = vmatpush1.bf16.msra.mxu0 0
        %2516 = vmatprep.mubr.bf16.mxu0 0
        %2517 = vmatmul.mubr.bf16.gmra.mrb[0].mxu0 %v2479
        %v2518 = vpop.f32.mrb[0].mxu0
        %v2519 = vadd.f32 0.0, %v2518
        %v2520 = vpop.f32.mrb[0].mxu0
        %v2521 = vpop.f32.mrb[0].mxu0
        %v2522 = vadd.f32 0.0, %v2521
        %v2523 = vpop.f32.mrb[0].mxu0
        %2524 = vdwg.mxu0
        %v2525 = vadd.f32 %v2149, %v2519
        %v2526 = vadd.f32 %v2152, %v2522
        %s2527 = scalar_lea.vmem %s936, 48
        %v2528 = vld [vmem:[%s2527] sm:$0xf]
        %v2529 = vld [vmem:[%s2527 + $0x4] sm:$0xf]
        %v2530 = vld [vmem:[%s2527 + $0x8] sm:$0xf]
        %v2531 = vld [vmem:[%s2527 + $0xc] sm:$0xf]
        %s2532 = scalar_lea.vmem %s950, 3
        %v2533 = vld [vmem:[%s2532] sm:$0x1]
        %v2535 = vlaneseq
        %v2536 = vshrl.u32 %v2535, 7
        %v2537 = vsub.s32 0, %v2536
        %v2538 = vrot.slane %v2533, %v2537
        %v2544 = vunpack.c.l.b16 %v2528
        %v2545 = vunpack.c.l.b16 %v2529
        %v2546 = vunpack.c.l.b16 %v2530
        %v2547 = vunpack.c.l.b16 %v2531
        %v2548 = vpack.c.b16 %v2545, %v2544
        %v2549 = vpack.c.b16 %v2547, %v2546
        %2552 = vmatprep.subr.bf16.mxu0 0
        %2553 = vmatpush1.bf16.msra.mxu0 %v2548
        %2554 = vmatprep.subr.bf16.mxu0 0
        %2555 = vmatpush1.bf16.msra.mxu0 %v2549
        %2556 = vmatprep.subr.bf16.mxu0 0
        %2557 = vmatpush1.bf16.msra.mxu0 0
        %2558 = vmatprep.subr.bf16.mxu0 0
        %2559 = vmatpush1.bf16.msra.mxu0 0
        %2560 = vmatprep.subr.bf16.mxu0 0
        %2561 = vmatpush1.bf16.msra.mxu0 0
        %2562 = vmatprep.subr.bf16.mxu0 0
        %2563 = vmatpush1.bf16.msra.mxu0 0
        %2564 = vmatprep.subr.bf16.mxu0 0
        %2565 = vmatpush1.bf16.msra.mxu0 0
        %2566 = vmatprep.subr.bf16.mxu0 0
        %2567 = vmatpush1.bf16.msra.mxu0 0
        %2568 = vmatprep.subr.bf16.mxu0 0
        %2569 = vmatpush1.bf16.msra.mxu0 0
        %2570 = vmatprep.subr.bf16.mxu0 0
        %2571 = vmatpush1.bf16.msra.mxu0 0
        %2572 = vmatprep.subr.bf16.mxu0 0
        %2573 = vmatpush1.bf16.msra.mxu0 0
        %2574 = vmatprep.subr.bf16.mxu0 0
        %2575 = vmatpush1.bf16.msra.mxu0 0
        %2576 = vmatprep.subr.bf16.mxu0 0
        %2577 = vmatpush1.bf16.msra.mxu0 0
        %2578 = vmatprep.subr.bf16.mxu0 0
        %2579 = vmatpush1.bf16.msra.mxu0 0
        %2580 = vmatprep.subr.bf16.mxu0 0
        %2581 = vmatpush1.bf16.msra.mxu0 0
        %2582 = vmatprep.subr.bf16.mxu0 0
        %2583 = vmatpush1.bf16.msra.mxu0 0
        %2584 = vmatprep.mubr.bf16.mxu0 0
        %2585 = vmatmul.mubr.bf16.gmra.mrb[0].mxu0 %v1436
        %v2586 = vpop.f32.mrb[0].mxu0
        %v2587 = vadd.f32 %v2538, %v2586
        %v2588 = vpop.f32.mrb[0].mxu0
        %v2589 = vpop.f32.mrb[0].mxu0
        %v2590 = vadd.f32 %v2538, %v2589
        %v2591 = vpop.f32.mrb[0].mxu0
        %2592 = vdwg.mxu0
        %v2593 = vmul.f32 %v2587, 0.35355338
        %v2594 = vmul.f32 %v2590, 0.35355338
        %s2595 = scalar_lea.vmem %s941, 48
        %v2596 = vld [vmem:[%s2595] sm:$0xf]
        %v2597 = vld [vmem:[%s2595 + $0x4] sm:$0xf]
        %v2598 = vld [vmem:[%s2595 + $0x8] sm:$0xf]
        %v2599 = vld [vmem:[%s2595 + $0xc] sm:$0xf]
        %s2600 = scalar_lea.vmem %s954, 3
        %v2601 = vld [vmem:[%s2600] sm:$0x1]
        %v2603 = vlaneseq
        %v2604 = vshrl.u32 %v2603, 7
        %v2605 = vsub.s32 0, %v2604
        %v2606 = vrot.slane %v2601, %v2605
        %v2612 = vunpack.c.l.b16 %v2596
        %v2613 = vunpack.c.l.b16 %v2597
        %v2614 = vunpack.c.l.b16 %v2598
        %v2615 = vunpack.c.l.b16 %v2599
        %v2616 = vpack.c.b16 %v2613, %v2612
        %v2617 = vpack.c.b16 %v2615, %v2614
        %2620 = vmatprep.subr.bf16.mxu0 0
        %2621 = vmatpush1.bf16.msra.mxu0 %v2616
        %2622 = vmatprep.subr.bf16.mxu0 0
        %2623 = vmatpush1.bf16.msra.mxu0 %v2617
        %2624 = vmatprep.subr.bf16.mxu0 0
        %2625 = vmatpush1.bf16.msra.mxu0 0
        %2626 = vmatprep.subr.bf16.mxu0 0
        %2627 = vmatpush1.bf16.msra.mxu0 0
        %2628 = vmatprep.subr.bf16.mxu0 0
        %2629 = vmatpush1.bf16.msra.mxu0 0
        %2630 = vmatprep.subr.bf16.mxu0 0
        %2631 = vmatpush1.bf16.msra.mxu0 0
        %2632 = vmatprep.subr.bf16.mxu0 0
        %2633 = vmatpush1.bf16.msra.mxu0 0
        %2634 = vmatprep.subr.bf16.mxu0 0
        %2635 = vmatpush1.bf16.msra.mxu0 0
        %2636 = vmatprep.subr.bf16.mxu0 0
        %2637 = vmatpush1.bf16.msra.mxu0 0
        %2638 = vmatprep.subr.bf16.mxu0 0
        %2639 = vmatpush1.bf16.msra.mxu0 0
        %2640 = vmatprep.subr.bf16.mxu0 0
        %2641 = vmatpush1.bf16.msra.mxu0 0
        %2642 = vmatprep.subr.bf16.mxu0 0
        %2643 = vmatpush1.bf16.msra.mxu0 0
        %2644 = vmatprep.subr.bf16.mxu0 0
        %2645 = vmatpush1.bf16.msra.mxu0 0
        %2646 = vmatprep.subr.bf16.mxu0 0
        %2647 = vmatpush1.bf16.msra.mxu0 0
        %2648 = vmatprep.subr.bf16.mxu0 0
        %2649 = vmatpush1.bf16.msra.mxu0 0
        %2650 = vmatprep.subr.bf16.mxu0 0
        %2651 = vmatpush1.bf16.msra.mxu0 0
        %2652 = vmatprep.mubr.bf16.mxu0 0
        %2653 = vmatmul.mubr.bf16.gmra.mrb[0].mxu0 %v1436
        %v2654 = vpop.f32.mrb[0].mxu0
        %v2655 = vadd.f32 %v2606, %v2654
        %v2656 = vpop.f32.mrb[0].mxu0
        %v2657 = vpop.f32.mrb[0].mxu0
        %v2658 = vadd.f32 %v2606, %v2657
        %v2659 = vpop.f32.mrb[0].mxu0
        %2660 = vdwg.mxu0
        %s2661 = scalar_lea.vmem %s946, 48
        %v2662 = vld [vmem:[%s2661] sm:$0xf]
        %v2663 = vld [vmem:[%s2661 + $0x4] sm:$0xf]
        %v2664 = vld [vmem:[%s2661 + $0x8] sm:$0xf]
        %v2665 = vld [vmem:[%s2661 + $0xc] sm:$0xf]
        %s2666 = scalar_lea.vmem %s958, 3
        %v2667 = vld [vmem:[%s2666] sm:$0x1]
        %v2669 = vlaneseq
        %v2670 = vshrl.u32 %v2669, 7
        %v2671 = vsub.s32 0, %v2670
        %v2672 = vrot.slane %v2667, %v2671
        %v2678 = vunpack.c.l.b16 %v2662
        %v2679 = vunpack.c.l.b16 %v2663
        %v2680 = vunpack.c.l.b16 %v2664
        %v2681 = vunpack.c.l.b16 %v2665
        %v2682 = vpack.c.b16 %v2679, %v2678
        %v2683 = vpack.c.b16 %v2681, %v2680
        %2686 = vmatprep.subr.bf16.mxu0 0
        %2687 = vmatpush1.bf16.msra.mxu0 %v2682
        %2688 = vmatprep.subr.bf16.mxu0 0
        %2689 = vmatpush1.bf16.msra.mxu0 %v2683
        %2690 = vmatprep.subr.bf16.mxu0 0
        %2691 = vmatpush1.bf16.msra.mxu0 0
        %2692 = vmatprep.subr.bf16.mxu0 0
        %2693 = vmatpush1.bf16.msra.mxu0 0
        %2694 = vmatprep.subr.bf16.mxu0 0
        %2695 = vmatpush1.bf16.msra.mxu0 0
        %2696 = vmatprep.subr.bf16.mxu0 0
        %2697 = vmatpush1.bf16.msra.mxu0 0
        %2698 = vmatprep.subr.bf16.mxu0 0
        %2699 = vmatpush1.bf16.msra.mxu0 0
        %2700 = vmatprep.subr.bf16.mxu0 0
        %2701 = vmatpush1.bf16.msra.mxu0 0
        %2702 = vmatprep.subr.bf16.mxu0 0
        %2703 = vmatpush1.bf16.msra.mxu0 0
        %2704 = vmatprep.subr.bf16.mxu0 0
        %2705 = vmatpush1.bf16.msra.mxu0 0
        %2706 = vmatprep.subr.bf16.mxu0 0
        %2707 = vmatpush1.bf16.msra.mxu0 0
        %2708 = vmatprep.subr.bf16.mxu0 0
        %2709 = vmatpush1.bf16.msra.mxu0 0
        %2710 = vmatprep.subr.bf16.mxu0 0
        %2711 = vmatpush1.bf16.msra.mxu0 0
        %2712 = vmatprep.subr.bf16.mxu0 0
        %2713 = vmatpush1.bf16.msra.mxu0 0
        %2714 = vmatprep.subr.bf16.mxu0 0
        %2715 = vmatpush1.bf16.msra.mxu0 0
        %2716 = vmatprep.subr.bf16.mxu0 0
        %2717 = vmatpush1.bf16.msra.mxu0 0
        %2718 = vmatprep.mubr.bf16.mxu0 0
        %2719 = vmatmul.mubr.bf16.gmra.mrb[0].mxu0 %v1436
        %v2720 = vpop.f32.mrb[0].mxu0
        %v2721 = vadd.f32 %v2672, %v2720
        %v2722 = vpop.f32.mrb[0].mxu0
        %v2723 = vpop.f32.mrb[0].mxu0
        %v2724 = vadd.f32 %v2672, %v2723
        %v2725 = vpop.f32.mrb[0].mxu0
        %2726 = vdwg.mxu0
        %v2727 = vpack.c.bf16 %v2594, %v2593
        %v2728 = vpack.c.bf16 %v2658, %v2655
        %v2730 = vsel %vm1611, %v2727, 0
        %v2733 = vsel %vm1611, %v2728, 0
        %2735 = vmatprep.subr.bf16.mxu0 0
        %2736 = vmatpush1.bf16.xpose.msra.mxu0 %v2733
        %2737 = vmatprep.subr.bf16.mxu0 0
        %2738 = vmatpush1.bf16.xpose.msra.mxu0 0
        %2739 = vmatprep.subr.bf16.mxu0 0
        %2740 = vmatpush1.bf16.xpose.msra.mxu0 0
        %2741 = vmatprep.subr.bf16.mxu0 0
        %2742 = vmatpush1.bf16.xpose.msra.mxu0 0
        %2743 = vmatprep.subr.bf16.mxu0 0
        %2744 = vmatpush1.bf16.xpose.msra.mxu0 0
        %2745 = vmatprep.subr.bf16.mxu0 0
        %2746 = vmatpush1.bf16.xpose.msra.mxu0 0
        %2747 = vmatprep.subr.bf16.mxu0 0
        %2748 = vmatpush1.bf16.xpose.msra.mxu0 0
        %2749 = vmatprep.subr.bf16.mxu0 0
        %2750 = vmatpush1.bf16.xpose.msra.mxu0 0
        %2751 = vmatprep.subr.bf16.mxu0 0
        %2752 = vmatpush1.bf16.xpose.msra.mxu0 0
        %2753 = vmatprep.subr.bf16.mxu0 0
        %2754 = vmatpush1.bf16.xpose.msra.mxu0 0
        %2755 = vmatprep.subr.bf16.mxu0 0
        %2756 = vmatpush1.bf16.xpose.msra.mxu0 0
        %2757 = vmatprep.subr.bf16.mxu0 0
        %2758 = vmatpush1.bf16.xpose.msra.mxu0 0
        %2759 = vmatprep.subr.bf16.mxu0 0
        %2760 = vmatpush1.bf16.xpose.msra.mxu0 0
        %2761 = vmatprep.subr.bf16.mxu0 0
        %2762 = vmatpush1.bf16.xpose.msra.mxu0 0
        %2763 = vmatprep.subr.bf16.mxu0 0
        %2764 = vmatpush1.bf16.xpose.msra.mxu0 0
        %2765 = vmatprep.subr.bf16.mxu0 0
        %2766 = vmatpush1.bf16.xpose.msra.mxu0 0
        %2767 = vmatprep.mubr.bf16.mxu0 0
        %2768 = vmatmul.mubr.bf16.gmra.mrb[0].mxu0 %v2730
        %v2769 = vpop.f32.mrb[0].mxu0
        %v2770 = vadd.f32 0.0, %v2769
        %v2771 = vpop.f32.mrb[0].mxu0
        %v2772 = vpop.f32.mrb[0].mxu0
        %v2773 = vadd.f32 0.0, %v2772
        %v2774 = vpop.f32.mrb[0].mxu0
        %2775 = vdwg.mxu0
        %v2776 = vsel %vm1659, %v2770, -inf
        %2777 = vmax.xlane.f32.xlu0 %v2776
        %v2778 = vpop.xlane.xlu0 %2777
        %v2779 = vsel %vm1663, %v2773, -inf
        %2780 = vmax.xlane.f32.xlu0 %v2779
        %v2781 = vpop.xlane.xlu0 %2780
        %v2782 = vsub.f32 %v2770, %v2778
        %v2783 = vsub.f32 %v2773, %v2781
        %v2784 = vmul.f32 %v2782, 1.442695
        %v2785 = vpow.pop %v2784
        %v2786 = vmul.f32 %v2783, 1.442695
        %v2787 = vpow.pop %v2786
        %v2788 = vsel %vm1659, %v2785, 0.0
        %2789 = vadd.xlane.f32.xlu0 %v2788
        %v2790 = vpop.xlane.xlu0 %2789
        %v2791 = vsel %vm1663, %v2787, 0.0
        %2792 = vadd.xlane.f32.xlu0 %v2791
        %v2793 = vpop.xlane.xlu0 %2792
        %v2794 = vrcp.pop %v2790
        %v2795 = vrcp.pop %v2793
        %v2796 = vmul.f32 %v2785, %v2794
        %v2797 = vmul.f32 %v2787, %v2795
        %v2798 = vpack.c.bf16 %v2797, %v2796
        %v2799 = vpack.c.bf16 %v2724, %v2721
        %v2801 = vsel %vm1659, %v2798, 0
        %v2804 = vand.u32 %v2799, %v1691
        %2806 = vmatprep.subr.bf16.mxu0 0
        %2807 = vmatpush1.bf16.msra.mxu0 %v2804
        %2808 = vmatprep.subr.bf16.mxu0 0
        %2809 = vmatpush1.bf16.msra.mxu0 0
        %2810 = vmatprep.subr.bf16.mxu0 0
        %2811 = vmatpush1.bf16.msra.mxu0 0
        %2812 = vmatprep.subr.bf16.mxu0 0
        %2813 = vmatpush1.bf16.msra.mxu0 0
        %2814 = vmatprep.subr.bf16.mxu0 0
        %2815 = vmatpush1.bf16.msra.mxu0 0
        %2816 = vmatprep.subr.bf16.mxu0 0
        %2817 = vmatpush1.bf16.msra.mxu0 0
        %2818 = vmatprep.subr.bf16.mxu0 0
        %2819 = vmatpush1.bf16.msra.mxu0 0
        %2820 = vmatprep.subr.bf16.mxu0 0
        %2821 = vmatpush1.bf16.msra.mxu0 0
        %2822 = vmatprep.subr.bf16.mxu0 0
        %2823 = vmatpush1.bf16.msra.mxu0 0
        %2824 = vmatprep.subr.bf16.mxu0 0
        %2825 = vmatpush1.bf16.msra.mxu0 0
        %2826 = vmatprep.subr.bf16.mxu0 0
        %2827 = vmatpush1.bf16.msra.mxu0 0
        %2828 = vmatprep.subr.bf16.mxu0 0
        %2829 = vmatpush1.bf16.msra.mxu0 0
        %2830 = vmatprep.subr.bf16.mxu0 0
        %2831 = vmatpush1.bf16.msra.mxu0 0
        %2832 = vmatprep.subr.bf16.mxu0 0
        %2833 = vmatpush1.bf16.msra.mxu0 0
        %2834 = vmatprep.subr.bf16.mxu0 0
        %2835 = vmatpush1.bf16.msra.mxu0 0
        %2836 = vmatprep.subr.bf16.mxu0 0
        %2837 = vmatpush1.bf16.msra.mxu0 0
        %2838 = vmatprep.mubr.bf16.mxu0 0
        %2839 = vmatmul.mubr.bf16.gmra.mrb[0].mxu0 %v2801
        %v2840 = vpop.f32.mrb[0].mxu0
        %v2841 = vadd.f32 0.0, %v2840
        %v2842 = vpop.f32.mrb[0].mxu0
        %v2843 = vpop.f32.mrb[0].mxu0
        %v2844 = vadd.f32 0.0, %v2843
        %v2845 = vpop.f32.mrb[0].mxu0
        %2846 = vdwg.mxu0
        %v2847 = vpack.c.bf16 %v2844, %v2841
        %s2848 = scalar_lea.vmem %s963, 12
        %v2849 = vld [vmem:[%s2848] sm:$0xf]
        %v2851 = vsel %vm1611, %v2847, 0
        %v2854 = vsel %vm1688, %v2849, 0
        %2856 = vmatprep.subr.bf16.mxu0 0
        %2857 = vmatpush1.bf16.msra.mxu0 %v2854
        %2858 = vmatprep.subr.bf16.mxu0 0
        %2859 = vmatpush1.bf16.msra.mxu0 0
        %2860 = vmatprep.subr.bf16.mxu0 0
        %2861 = vmatpush1.bf16.msra.mxu0 0
        %2862 = vmatprep.subr.bf16.mxu0 0
        %2863 = vmatpush1.bf16.msra.mxu0 0
        %2864 = vmatprep.subr.bf16.mxu0 0
        %2865 = vmatpush1.bf16.msra.mxu0 0
        %2866 = vmatprep.subr.bf16.mxu0 0
        %2867 = vmatpush1.bf16.msra.mxu0 0
        %2868 = vmatprep.subr.bf16.mxu0 0
        %2869 = vmatpush1.bf16.msra.mxu0 0
        %2870 = vmatprep.subr.bf16.mxu0 0
        %2871 = vmatpush1.bf16.msra.mxu0 0
        %2872 = vmatprep.subr.bf16.mxu0 0
        %2873 = vmatpush1.bf16.msra.mxu0 0
        %2874 = vmatprep.subr.bf16.mxu0 0
        %2875 = vmatpush1.bf16.msra.mxu0 0
        %2876 = vmatprep.subr.bf16.mxu0 0
        %2877 = vmatpush1.bf16.msra.mxu0 0
        %2878 = vmatprep.subr.bf16.mxu0 0
        %2879 = vmatpush1.bf16.msra.mxu0 0
        %2880 = vmatprep.subr.bf16.mxu0 0
        %2881 = vmatpush1.bf16.msra.mxu0 0
        %2882 = vmatprep.subr.bf16.mxu0 0
        %2883 = vmatpush1.bf16.msra.mxu0 0
        %2884 = vmatprep.subr.bf16.mxu0 0
        %2885 = vmatpush1.bf16.msra.mxu0 0
        %2886 = vmatprep.subr.bf16.mxu0 0
        %2887 = vmatpush1.bf16.msra.mxu0 0
        %2888 = vmatprep.mubr.bf16.mxu0 0
        %2889 = vmatmul.mubr.bf16.gmra.mrb[0].mxu0 %v2851
        %v2890 = vpop.f32.mrb[0].mxu0
        %v2891 = vadd.f32 0.0, %v2890
        %v2892 = vpop.f32.mrb[0].mxu0
        %v2893 = vpop.f32.mrb[0].mxu0
        %v2894 = vadd.f32 0.0, %v2893
        %v2895 = vpop.f32.mrb[0].mxu0
        %2896 = vdwg.mxu0
        %v2897 = vadd.f32 %v2525, %v2891
        %v2898 = vadd.f32 %v2526, %v2894
        %v2899 = vadd.f32 %v1362, %v2897
        %v2900 = vadd.f32 %v1363, %v2898
        %v2901 = vld [vmem:[%s966] sm:$0x1]
        %v2903 = vlaneseq
        %v2904 = vshrl.u32 %v2903, 7
        %v2905 = vsub.s32 0, %v2904
        %v2906 = vrot.slane %v2901, %v2905
        %v2908 = vadd.f32 %v2899, %v2906
        %v2909 = vadd.f32 %v2900, %v2906
        %v2910 = vld [vmem:[%s969] sm:$0x1]
        %v2911 = vld [vmem:[%s972] sm:$0x1]
        %v2912 = vsel %vm1366, %v2908, 0.0
        %2913 = vadd.xlane.f32.xlu0 %v2912
        %v2914 = vpop.xlane.xlu0 %2913
        %v2915 = vsel %vm1370, %v2909, 0.0
        %2916 = vadd.xlane.f32.xlu0 %v2915
        %v2917 = vpop.xlane.xlu0 %2916
        %v2918 = vmul.f32 %v2914, %v1374
        %v2919 = vmul.f32 %v2917, %v1374
        %v2920 = vsub.f32 %v2908, %v2918
        %v2921 = vsub.f32 %v2909, %v2919
        %v2922 = vmul.f32 %v2920, %v2920
        %v2923 = vmul.f32 %v2921, %v2921
        %v2924 = vsel %vm1366, %v2922, 0.0
        %2925 = vadd.xlane.f32.xlu0 %v2924
        %v2926 = vpop.xlane.xlu0 %2925
        %v2927 = vsel %vm1370, %v2923, 0.0
        %2928 = vadd.xlane.f32.xlu0 %v2927
        %v2929 = vpop.xlane.xlu0 %2928
        %v2930 = vmul.f32 %v2926, %v1374
        %v2931 = vmul.f32 %v2929, %v1374
        %v2932 = vadd.f32 %v2930, 1e-06
        %v2933 = vadd.f32 %v2931, 1e-06
        %v2934 = vrsqrt.pop %v2932
        %v2935 = vrsqrt.pop %v2933
        %v2936 = vmul.f32 %v2920, %v2934
        %v2937 = vmul.f32 %v2921, %v2935
        %v2939 = vlaneseq
        %v2940 = vshrl.u32 %v2939, 7
        %v2941 = vsub.s32 0, %v2940
        %v2942 = vrot.slane %v2910, %v2941
        %v2944 = vmul.f32 %v2936, %v2942
        %v2945 = vmul.f32 %v2937, %v2942
        %v2947 = vlaneseq
        %v2948 = vshrl.u32 %v2947, 7
        %v2949 = vsub.s32 0, %v2948
        %v2950 = vrot.slane %v2911, %v2949
        %v2952 = vadd.f32 %v2944, %v2950
        %v2953 = vadd.f32 %v2945, %v2950
        %v2954 = vpack.c.bf16 %v2953, %v2952
        %v2955 = vld [vmem:[%s977] sm:$0xf]
        %v2956 = vld [vmem:[%s977 + $0x4] sm:$0xf]
        %v2957 = vld [vmem:[%s977 + $0x8] sm:$0xf]
        %v2958 = vld [vmem:[%s977 + $0xc] sm:$0xf]
        %v2959 = vld [vmem:[%s980] sm:$0x1]
        %v2961 = vlaneseq
        %v2962 = vshrl.u32 %v2961, 7
        %v2963 = vsub.s32 0, %v2962
        %v2964 = vrot.slane %v2959, %v2963
        %v2970 = vunpack.c.l.b16 %v2955
        %v2971 = vunpack.c.l.b16 %v2956
        %v2972 = vunpack.c.l.b16 %v2957
        %v2973 = vunpack.c.l.b16 %v2958
        %v2974 = vpack.c.b16 %v2971, %v2970
        %v2975 = vpack.c.b16 %v2973, %v2972
        %v2979 = vsel %vm1366, %v2954, 0
        %2981 = vmatprep.subr.bf16.mxu0 0
        %2982 = vmatpush1.bf16.msra.mxu0 %v2974
        %2983 = vmatprep.subr.bf16.mxu0 0
        %2984 = vmatpush1.bf16.msra.mxu0 %v2975
        %2985 = vmatprep.subr.bf16.mxu0 0
        %2986 = vmatpush1.bf16.msra.mxu0 0
        %2987 = vmatprep.subr.bf16.mxu0 0
        %2988 = vmatpush1.bf16.msra.mxu0 0
        %2989 = vmatprep.subr.bf16.mxu0 0
        %2990 = vmatpush1.bf16.msra.mxu0 0
        %2991 = vmatprep.subr.bf16.mxu0 0
        %2992 = vmatpush1.bf16.msra.mxu0 0
        %2993 = vmatprep.subr.bf16.mxu0 0
        %2994 = vmatpush1.bf16.msra.mxu0 0
        %2995 = vmatprep.subr.bf16.mxu0 0
        %2996 = vmatpush1.bf16.msra.mxu0 0
        %2997 = vmatprep.subr.bf16.mxu0 0
        %2998 = vmatpush1.bf16.msra.mxu0 0
        %2999 = vmatprep.subr.bf16.mxu0 0
        %3000 = vmatpush1.bf16.msra.mxu0 0
        %3001 = vmatprep.subr.bf16.mxu0 0
        %3002 = vmatpush1.bf16.msra.mxu0 0
        %3003 = vmatprep.subr.bf16.mxu0 0
        %3004 = vmatpush1.bf16.msra.mxu0 0
        %3005 = vmatprep.subr.bf16.mxu0 0
        %3006 = vmatpush1.bf16.msra.mxu0 0
        %3007 = vmatprep.subr.bf16.mxu0 0
        %3008 = vmatpush1.bf16.msra.mxu0 0
        %3009 = vmatprep.subr.bf16.mxu0 0
        %3010 = vmatpush1.bf16.msra.mxu0 0
        %3011 = vmatprep.subr.bf16.mxu0 0
        %3012 = vmatpush1.bf16.msra.mxu0 0
        %3013 = vmatprep.mubr.bf16.mxu0 0
        %3014 = vmatmul.mubr.bf16.gmra.mrb[0].mxu0 %v2979
        %v3015 = vpop.f32.mrb[0].mxu0
        %v3016 = vadd.f32 %v2964, %v3015
        %v3017 = vpop.f32.mrb[0].mxu0
        %v3018 = vpop.f32.mrb[0].mxu0
        %v3019 = vadd.f32 %v2964, %v3018
        %v3020 = vpop.f32.mrb[0].mxu0
        %3021 = vdwg.mxu0
        %v3022 = vmul.f32 %v3016, 0.5
        %v3023 = vmul.f32 %v3019, 0.5
        %v3024 = vmul.f32 %v3016, 0.70710677
        %v3025 = vmul.f32 %v3019, 0.70710677
        %v3026 = verf.f32.pop %v3024
        %v3027 = verf.f32.pop %v3025
        %v3028 = vadd.f32 %v3026, 1.0
        %v3029 = vadd.f32 %v3027, 1.0
        %v3030 = vmul.f32 %v3022, %v3028
        %v3031 = vmul.f32 %v3023, %v3029
        %v3032 = vpack.c.bf16 %v3031, %v3030
        %v3033 = vld [vmem:[%s985] sm:$0xf]
        %v3034 = vld [vmem:[%s985 + $0x4] sm:$0xf]
        %v3035 = vld [vmem:[%s985 + $0x8] sm:$0xf]
        %v3036 = vld [vmem:[%s985 + $0xc] sm:$0xf]
        %v3037 = vld [vmem:[%s985 + $0x10] sm:$0xf]
        %v3038 = vld [vmem:[%s985 + $0x14] sm:$0xf]
        %v3039 = vld [vmem:[%s985 + $0x18] sm:$0xf]
        %v3040 = vld [vmem:[%s985 + $0x1c] sm:$0xf]
        %v3041 = vld [vmem:[%s985 + $0x20] sm:$0xf]
        %v3042 = vld [vmem:[%s985 + $0x24] sm:$0xf]
        %v3043 = vld [vmem:[%s985 + $0x28] sm:$0xf]
        %v3044 = vld [vmem:[%s985 + $0x2c] sm:$0xf]
        %v3045 = vld [vmem:[%s985 + $0x30] sm:$0xf]
        %v3046 = vld [vmem:[%s985 + $0x34] sm:$0xf]
        %v3047 = vld [vmem:[%s985 + $0x38] sm:$0xf]
        %v3048 = vld [vmem:[%s985 + $0x3c] sm:$0xf]
        %v3049 = vld [vmem:[%s988] sm:$0x1]
        %v3051 = vlaneseq
        %v3052 = vshrl.u32 %v3051, 7
        %v3053 = vsub.s32 0, %v3052
        %v3054 = vrot.slane %v3049, %v3053
        %v3072 = vunpack.c.l.b16 %v3033
        %v3073 = vunpack.c.l.b16 %v3034
        %v3074 = vunpack.c.l.b16 %v3035
        %v3075 = vunpack.c.l.b16 %v3036
        %v3076 = vunpack.c.l.b16 %v3037
        %v3077 = vunpack.c.l.b16 %v3038
        %v3078 = vunpack.c.l.b16 %v3039
        %v3079 = vunpack.c.l.b16 %v3040
        %v3080 = vunpack.c.l.b16 %v3041
        %v3081 = vunpack.c.l.b16 %v3042
        %v3082 = vunpack.c.l.b16 %v3043
        %v3083 = vunpack.c.l.b16 %v3044
        %v3084 = vunpack.c.l.b16 %v3045
        %v3085 = vunpack.c.l.b16 %v3046
        %v3086 = vunpack.c.l.b16 %v3047
        %v3087 = vunpack.c.l.b16 %v3048
        %v3088 = vpack.c.b16 %v3073, %v3072
        %v3089 = vpack.c.b16 %v3075, %v3074
        %v3090 = vpack.c.b16 %v3077, %v3076
        %v3091 = vpack.c.b16 %v3079, %v3078
        %v3092 = vpack.c.b16 %v3081, %v3080
        %v3093 = vpack.c.b16 %v3083, %v3082
        %v3094 = vpack.c.b16 %v3085, %v3084
        %v3095 = vpack.c.b16 %v3087, %v3086
        %3104 = vmatprep.subr.bf16.mxu0 0
        %3105 = vmatpush1.bf16.msra.mxu0 %v3088
        %3106 = vmatprep.subr.bf16.mxu0 0
        %3107 = vmatpush1.bf16.msra.mxu0 %v3089
        %3108 = vmatprep.subr.bf16.mxu0 0
        %3109 = vmatpush1.bf16.msra.mxu0 %v3090
        %3110 = vmatprep.subr.bf16.mxu0 0
        %3111 = vmatpush1.bf16.msra.mxu0 %v3091
        %3112 = vmatprep.subr.bf16.mxu0 0
        %3113 = vmatpush1.bf16.msra.mxu0 %v3092
        %3114 = vmatprep.subr.bf16.mxu0 0
        %3115 = vmatpush1.bf16.msra.mxu0 %v3093
        %3116 = vmatprep.subr.bf16.mxu0 0
        %3117 = vmatpush1.bf16.msra.mxu0 %v3094
        %3118 = vmatprep.subr.bf16.mxu0 0
        %3119 = vmatpush1.bf16.msra.mxu0 %v3095
        %3120 = vmatprep.subr.bf16.mxu0 0
        %3121 = vmatpush1.bf16.msra.mxu0 0
        %3122 = vmatprep.subr.bf16.mxu0 0
        %3123 = vmatpush1.bf16.msra.mxu0 0
        %3124 = vmatprep.subr.bf16.mxu0 0
        %3125 = vmatpush1.bf16.msra.mxu0 0
        %3126 = vmatprep.subr.bf16.mxu0 0
        %3127 = vmatpush1.bf16.msra.mxu0 0
        %3128 = vmatprep.subr.bf16.mxu0 0
        %3129 = vmatpush1.bf16.msra.mxu0 0
        %3130 = vmatprep.subr.bf16.mxu0 0
        %3131 = vmatpush1.bf16.msra.mxu0 0
        %3132 = vmatprep.subr.bf16.mxu0 0
        %3133 = vmatpush1.bf16.msra.mxu0 0
        %3134 = vmatprep.subr.bf16.mxu0 0
        %3135 = vmatpush1.bf16.msra.mxu0 0
        %3136 = vmatprep.mubr.bf16.mxu0 0
        %3137 = vmatmul.mubr.bf16.gmra.mrb[0].mxu0 %v3032
        %v3138 = vpop.f32.mrb[0].mxu0
        %v3139 = vadd.f32 %v3054, %v3138
        %v3140 = vpop.f32.mrb[0].mxu0
        %v3141 = vpop.f32.mrb[0].mxu0
        %v3142 = vadd.f32 %v3054, %v3141
        %v3143 = vpop.f32.mrb[0].mxu0
        %3144 = vdwg.mxu0
        %v3145 = vadd.f32 %v2908, %v3139
        %v3146 = vadd.f32 %v2909, %v3142
        %3147 = vst.msk [vmem:[#allocation2] sm:$0xff] %vm1366, %v3145
        %3148 = vst.msk [vmem:[#allocation2 + $0x8] sm:$0x1] %vm1370, %v3146
        %p3149 = scmp.eq.s32.totalorder %s42, 1
        // Predicated region
        $region117: #{tpu_custom_call.1} parent=111 // pred_check
          %p3150 = pneg %p3149
        $region118: #{tpu_custom_call.1} parent=111 // pred_check_branch
          %3152 = sbr.rel (%p3150) target = $region120
        $region119: #{tpu_custom_call.1} parent=111 // pred_region
          %v3153 = vld [vmem:[%s19] sm:$0x1]
          %v3154 = vld [vmem:[%s20] sm:$0x1]
          %v3155 = vsel %vm1370, %v3145, 0.0
          %3156 = vadd.xlane.f32.xlu0 %v3155
          %v3157 = vpop.xlane.xlu0 %3156
          %v3158 = vmul.f32 %v3157, %v1374
          %v3159 = vsub.f32 %v3145, %v3158
          %v3160 = vmul.f32 %v3159, %v3159
          %v3161 = vsel %vm1370, %v3160, 0.0
          %3162 = vadd.xlane.f32.xlu0 %v3161
          %v3163 = vpop.xlane.xlu0 %3162
          %v3164 = vmul.f32 %v3163, %v1374
          %v3165 = vadd.f32 %v3164, 1e-06
          %v3166 = vrsqrt.pop %v3165
          %v3167 = vmul.f32 %v3159, %v3166
          %v3168 = vmul.f32 %v3167, %v3153
          %v3169 = vadd.f32 %v3168, %v3154
          %v3170 = vpack.c.bf16 %v3169, %v3169
          %v3171 = vld [vmem:[%s21] sm:$0xf]
          %v3172 = vld [vmem:[%s21 + $0x4] sm:$0xf]
          %v3173 = vld [vmem:[%s21 + $0x8] sm:$0xf]
          %v3174 = vld [vmem:[%s21 + $0xc] sm:$0xf]
          %v3175 = vld [vmem:[%s22] sm:$0x1]
          %v3180 = vunpack.c.l.b16 %v3171
          %v3181 = vunpack.c.l.b16 %v3172
          %v3182 = vunpack.c.l.b16 %v3173
          %v3183 = vunpack.c.l.b16 %v3174
          %v3184 = vpack.c.b16 %v3181, %v3180
          %v3185 = vpack.c.b16 %v3183, %v3182
          %v3189 = vsel %vm1366, %v3170, 0
          %3191 = vmatprep.subr.bf16.mxu0 0
          %3192 = vmatpush1.bf16.msra.mxu0 %v3184
          %3193 = vmatprep.subr.bf16.mxu0 0
          %3194 = vmatpush1.bf16.msra.mxu0 %v3185
          %3195 = vmatprep.subr.bf16.mxu0 0
          %3196 = vmatpush1.bf16.msra.mxu0 0
          %3197 = vmatprep.subr.bf16.mxu0 0
          %3198 = vmatpush1.bf16.msra.mxu0 0
          %3199 = vmatprep.subr.bf16.mxu0 0
          %3200 = vmatpush1.bf16.msra.mxu0 0
          %3201 = vmatprep.subr.bf16.mxu0 0
          %3202 = vmatpush1.bf16.msra.mxu0 0
          %3203 = vmatprep.subr.bf16.mxu0 0
          %3204 = vmatpush1.bf16.msra.mxu0 0
          %3205 = vmatprep.subr.bf16.mxu0 0
          %3206 = vmatpush1.bf16.msra.mxu0 0
          %3207 = vmatprep.subr.bf16.mxu0 0
          %3208 = vmatpush1.bf16.msra.mxu0 0
          %3209 = vmatprep.subr.bf16.mxu0 0
          %3210 = vmatpush1.bf16.msra.mxu0 0
          %3211 = vmatprep.subr.bf16.mxu0 0
          %3212 = vmatpush1.bf16.msra.mxu0 0
          %3213 = vmatprep.subr.bf16.mxu0 0
          %3214 = vmatpush1.bf16.msra.mxu0 0
          %3215 = vmatprep.subr.bf16.mxu0 0
          %3216 = vmatpush1.bf16.msra.mxu0 0
          %3217 = vmatprep.subr.bf16.mxu0 0
          %3218 = vmatpush1.bf16.msra.mxu0 0
          %3219 = vmatprep.subr.bf16.mxu0 0
          %3220 = vmatpush1.bf16.msra.mxu0 0
          %3221 = vmatprep.subr.bf16.mxu0 0
          %3222 = vmatpush1.bf16.msra.mxu0 0
          %3223 = vmatprep.mubr.bf16.mxu0 0
          %3224 = vmatmul.mubr.bf16.gmra.mrb[0].mxu0 %v3189
          %v3225 = vpop.f32.mrb[0].mxu0
          %v3226 = vadd.f32 %v3175, %v3225
          %v3227 = vpop.f32.mrb[0].mxu0
          %v3228 = vpop.f32.mrb[0].mxu0
          %v3229 = vpop.f32.mrb[0].mxu0
          %3230 = vdwg.mxu0
          %vm3231 = vcmask 73728
          %3232 = vst.msk [vmem:[%s920] sm:$0x1] %vm3231, %v3226
        $region120: #{tpu_custom_call.1} parent=111 // pred_fallthru
          _
        %s3233 = sand.u32 %s625, 1
        %s3234 = scalar_lea.sflag [#allocation4], %s3233
        %s3235 = sand.u32 %s625, 1
        %s3236 = scalar_lea.vmem [#allocation3], %s3235
        // Predicated region
        $region121: #{tpu_custom_call.1} parent=111 // pred_check
          %p3237 = pneg %p635
        $region122: #{tpu_custom_call.1} parent=111 // pred_check_branch
          %3239 = sbr.rel (%p3237) target = $region124
        $region123: #{tpu_custom_call.1} parent=111 // pred_region
          %s3241 = ssub.s32 16, 16
          %3242 = vsyncadd %s3234, %s3241
          %s3243 = smul.addr %s41, 16
          %s3244 = scalar_lea.hbm %s23, %s3243
          %s3246 = sshll.u32 %s3236, 4
          %s3247 = int_to_ptr.vmem [resolvable:$true] %s3246
          %3249 = dma.vmem_to_hbm [thread:$0]  %s3247, 16, %s3244, %s3234
        $region124: #{tpu_custom_call.1} parent=111 // pred_fallthru
          _
      $region112: #{tpu_custom_call.1} parent=5 // pred_fallthru
        _
      %p3250 = scmp.le.s32.totalorder 2, %s32
      // Predicated region
      $region125: #{tpu_custom_call.1} parent=5 // pred_check
        %p3251 = pneg %p3250
      $region126: #{tpu_custom_call.1} parent=5 // pred_check_branch
        %3253 = sbr.rel (%p3251) target = $region128
      $region127: #{tpu_custom_call.1} parent=5 // pred_region
        %s3254 = ssub.s32 %s32, 2
        // Predicated region
        $region129: #{tpu_custom_call.1} parent=127 // pred_check
          %p3255 = pneg %p641
        $region130: #{tpu_custom_call.1} parent=127 // pred_check_branch
          %3257 = sbr.rel (%p3255) target = $region132
        $region131: #{tpu_custom_call.1} parent=127 // pred_region
          %s3258 = sand.u32 %s626, 1
          %s3259 = scalar_lea.sflag [#allocation4], %s3258
          %s3260 = sand.u32 %s626, 1
          %s3261 = scalar_lea.vmem [#allocation3], %s3260
          %3262 = dma.done %s3259, 16
        $region132: #{tpu_custom_call.1} parent=127 // pred_fallthru
          _
      $region128: #{tpu_custom_call.1} parent=5 // pred_fallthru
        _
    $region6: #{tpu_custom_call.1} parent=1 // loop_footer
      %s36 = sadd.s32 1, %s32
    $region7: #{tpu_custom_call.1} parent=1 // loop_footer_branch
      %31 = sbr.rel target = $region3
    $region8: #{tpu_custom_call.1} parent=1 // loop_exit
      _
    %3263 = vsyncpa [#allocation4], 1
    %s3264 = scalar_lea.sflag [#allocation4], 1
    %3265 = vsyncpa %s3264, 1

</llo_original>
